<compile_context>
chip_gen: v7x
topology: tpu7x:2x2x1
jax: 0.10.0
libtpu: 0.0.40
codegen_flags: <defaults>
</compile_context>

<pallas_src>
import jax
import jax.numpy as jnp
from jax.experimental import pallas as pl
from jax.experimental.pallas import tpu as pltpu


# ------------------------------ helpers ------------------------------------

def _round_up(x, m):
    return (x + m - 1) // m * m


def _pad_dim(k):
    # small contraction dims -> 8-aligned, large ones -> full 128-lane aligned
    return _round_up(k, 128) if k >= 64 else _round_up(k, 8)


_COMPILER_PARAMS = pltpu.CompilerParams(
    dimension_semantics=("parallel",),
    vmem_limit_bytes=32 * 1024 * 1024,
)


# ----------------------------- Pallas kernels ------------------------------

def _conv_relu_pool_kernel(x_ref, w_ref, b_ref, o_ref):
    # x_ref: (4, TM, Kpad) -- the 4 conv-output pixels of each 2x2 pool window
    # w_ref: (Kpad, Npad), b_ref: (1, Npad), o_ref: (TM, Npad) pooled output
    w = w_ref[...]
    b = b_ref[...]
    y0 = jnp.maximum(jnp.dot(x_ref[0], w, preferred_element_type=jnp.float32) + b, 0.0)
    y1 = jnp.maximum(jnp.dot(x_ref[1], w, preferred_element_type=jnp.float32) + b, 0.0)
    y2 = jnp.maximum(jnp.dot(x_ref[2], w, preferred_element_type=jnp.float32) + b, 0.0)
    y3 = jnp.maximum(jnp.dot(x_ref[3], w, preferred_element_type=jnp.float32) + b, 0.0)
    o_ref[...] = jnp.maximum(jnp.maximum(y0, y1), jnp.maximum(y2, y3))


def _matmul_bias_kernel(x_ref, w_ref, b_ref, o_ref):
    # x: (TM, Kpad), w: (Kpad, Npad), b: (1, Npad) -> o: (TM, Npad)
    o_ref[...] = (jnp.dot(x_ref[...], w_ref[...],
                          preferred_element_type=jnp.float32) + b_ref[...])


# ------------------------------- layers ------------------------------------

def _im2col_quadrants(x):
    """x: (B, H, W, C) NHWC, even H/W -> (4, B*Ho*Wo, C*9).

    Quadrant q = 2*hs + ws holds, for each pooled pixel (b, ho, wo), the 3x3
    patch of conv-output pixel (2*ho+hs, 2*wo+ws).  Column order is
    (c, dy, dx), matching torch's weight.reshape(Cout, Cin*9)."""
    B, H, W, C = x.shape
    Ho, Wo = H // 2, W // 2
    xp = jnp.pad(x, ((0, 0), (1, 1), (1, 1), (0, 0)))
    patches = jnp.stack(
        [xp[:, dy:dy + H, dx:dx + W, :] for dy in range(3) for dx in range(3)],
        axis=-1)                                   # (B, H, W, C, 9)
    patches = patches.reshape(B, H, W, C * 9)      # col = c*9 + dy*3 + dx
    quads = [patches[:, hs::2, ws::2, :].reshape(B * Ho * Wo, C * 9)
             for hs in range(2) for ws in range(2)]
    return jnp.stack(quads, axis=0)                # (4, M, C*9)


def conv3x3_relu_pool(x, w, b, *, tm=512):
    """Fused conv(3x3, pad=1) + bias + ReLU + maxpool(2x2).

    x: (B, H, W, Cin) NHWC; w: (Cout, Cin, 3, 3) torch layout; b: (Cout,)
    returns pooled NHWC (B, H//2, W//2, Cout)."""
    B, H, W, Cin = x.shape
    Cout = w.shape[0]
    Ho, Wo = H // 2, W // 2
    K = Cin * 9
    Kpad = _pad_dim(K)
    Npad = _round_up(Cout, 128)

    M = B * Ho * Wo
    TM = min(tm, _round_up(M, 8))
    Mpad = _round_up(M, TM)

    cols = _im2col_quadrants(x)                                   # (4, M, K)
    cols = jnp.pad(cols, ((0, 0), (0, Mpad - M), (0, Kpad - K)))  # (4, Mpad, Kpad)
    w2d = jnp.pad(w.reshape(Cout, K).T, ((0, Kpad - K), (0, Npad - Cout)))
    b2d = jnp.pad(b, (0, Npad - Cout)).reshape(1, Npad)

    out = pl.pallas_call(
        _conv_relu_pool_kernel,
        out_shape=jax.ShapeDtypeStruct((Mpad, Npad), jnp.float32),
        grid_spec=pltpu.PrefetchScalarGridSpec(
            num_scalar_prefetch=0,
            grid=(Mpad // TM,),
            in_specs=[
                pl.BlockSpec((4, TM, Kpad), lambda i: (0, i, 0)),
                pl.BlockSpec((Kpad, Npad), lambda i: (0, 0)),
                pl.BlockSpec((1, Npad), lambda i: (0, 0)),
            ],
            out_specs=pl.BlockSpec((TM, Npad), lambda i: (i, 0)),
        ),
        compiler_params=_COMPILER_PARAMS,
    )(cols, w2d, b2d)

    return out[:M, :Cout].reshape(B, Ho, Wo, Cout)


def linear(x, w, b, *, tm=512):
    """x: (M, K); w: (N, K) (torch layout, columns already in x's order);
    b: (N,).  Returns (M, N)."""
    M, K = x.shape
    N = w.shape[0]
    Kpad = _pad_dim(K)
    Npad = _round_up(N, 128)
    TM = min(tm, _round_up(M, 8))
    Mpad = _round_up(M, TM)

    xp = jnp.pad(x, ((0, Mpad - M), (0, Kpad - K)))
    wp = jnp.pad(w.T, ((0, Kpad - K), (0, Npad - N)))
    bp = jnp.pad(b, (0, Npad - N)).reshape(1, Npad)

    out = pl.pallas_call(
        _matmul_bias_kernel,
        out_shape=jax.ShapeDtypeStruct((Mpad, Npad), jnp.float32),
        grid_spec=pltpu.PrefetchScalarGridSpec(
            num_scalar_prefetch=0,
            grid=(Mpad // TM,),
            in_specs=[
                pl.BlockSpec((TM, Kpad), lambda i: (i, 0)),
                pl.BlockSpec((Kpad, Npad), lambda i: (0, 0)),
                pl.BlockSpec((1, Npad), lambda i: (0, 0)),
            ],
            out_specs=pl.BlockSpec((TM, Npad), lambda i: (i, 0)),
        ),
        compiler_params=_COMPILER_PARAMS,
    )(xp, wp, bp)

    return out[:M, :N]


# ------------------------------- forward -----------------------------------

def cnn_forward(x_nchw, params):
    """x_nchw: (B, Cin, 28, 28) float32 -> logits (B, num_classes)."""
    x = jnp.transpose(x_nchw, (0, 2, 3, 1))                  # NCHW -> NHWC
    x = conv3x3_relu_pool(x, params["w1"], params["b1"])     # (B, 14, 14, 8)
    x = conv3x3_relu_pool(x, params["w2"], params["b2"])     # (B, 7, 7, 16)

    B, Ho, Wo, C = x.shape
    x = x.reshape(B, Ho * Wo * C)                            # NHWC flatten (no transpose)

    # Fold torch's NCHW-order flatten into the fc weight instead of
    # transposing the activations at runtime (one-time weight permutation).
    wfc = params["wfc"]                                      # (N, C*Ho*Wo), (c,h,w) order
    N = wfc.shape[0]
    wfc_nhwc = wfc.reshape(N, C, Ho, Wo).transpose(0, 2, 3, 1).reshape(N, Ho * Wo * C)

    return linear(x, wfc_nhwc, params["bfc"])                # (B, N)


def init_params(key, in_channels=1, num_classes=10):
    k1, k2, k3, k4, k5, k6 = jax.random.split(key, 6)
    # deterministic synthetic init (not a checkpoint load)
    w1 = jax.random.normal(k1, (8, in_channels, 3, 3), jnp.float32) * 0.1
    b1 = jax.random.normal(k2, (8,), jnp.float32) * 0.1
    w2 = jax.random.normal(k3, (16, 8, 3, 3), jnp.float32) * 0.1
    b2 = jax.random.normal(k4, (16,), jnp.float32) * 0.1
    wfc = jax.random.normal(k5, (num_classes, 16 * 7 * 7), jnp.float32) * 0.05
    bfc = jax.random.normal(k6, (num_classes,), jnp.float32) * 0.05
    return dict(w1=w1, b1=b1, w2=w2, b2=b2, wfc=wfc, bfc=bfc)


if __name__ == "__main__":
    key = jax.random.PRNGKey(0)
    kp, kx = jax.random.split(key)
    params = init_params(kp, in_channels=1, num_classes=10)
    # fc1 expects 16*7*7 features -> spatial input must be 28x28 (MNIST-like)
    x = jax.random.normal(kx, (2, 1, 28, 28), jnp.float32)

    logits = jax.jit(cnn_forward)(x, params)
    logits = jax.block_until_ready(logits)

    assert logits.shape == (2, 10), logits.shape
    assert bool(jnp.all(jnp.isfinite(logits)))
    print("KERNEL_OK")
</pallas_src>

<mosaic_0001>
module attributes {stable_mosaic.version = 11 : i64} {
  func.func @_conv_relu_pool_kernel(%arg0: i32, %arg1: memref<4x392x16xf32, #tpu.memory_space<vmem>>, %arg2: memref<16x128xf32, #tpu.memory_space<vmem>>, %arg3: memref<1x128xf32, #tpu.memory_space<vmem>>, %arg4: memref<392x128xf32, #tpu.memory_space<vmem>>) attributes {dimension_semantics = [#tpu.dimension_semantics<parallel>], iteration_bounds = array<i64: 1>, scalar_prefetch = 0 : i64, scratch_operands = 0 : i64, tpu.core_type = #tpu.core_type<tc>, window_params = [{transform_indices = @transform_0, window_bounds = array<i64: 4, 392, 16>}, {pipeline_mode = #tpu.pipeline_mode<synchronous>, transform_indices = @transform_1, window_bounds = array<i64: 16, 128>}, {pipeline_mode = #tpu.pipeline_mode<synchronous>, transform_indices = @transform_2, window_bounds = array<i64: 1, 128>}, {transform_indices = @transform_3, window_bounds = array<i64: 392, 128>}]} {
    %c0 = arith.constant 0 : index
    %c0_0 = arith.constant 0 : index
    %0 = vector.load %arg2[%c0, %c0_0] : memref<16x128xf32, #tpu.memory_space<vmem>>, vector<16x128xf32>
    %c0_1 = arith.constant 0 : index
    %c0_2 = arith.constant 0 : index
    %1 = vector.load %arg3[%c0_1, %c0_2] : memref<1x128xf32, #tpu.memory_space<vmem>>, vector<1x128xf32>
    %c0_3 = arith.constant 0 : index
    %c0_4 = arith.constant 0 : index
    %c0_5 = arith.constant 0 : index
    %2 = vector.load %arg1[%c0_3, %c0_4, %c0_5] : memref<4x392x16xf32, #tpu.memory_space<vmem>>, vector<1x392x16xf32>
    %3 = vector.shape_cast %2 : vector<1x392x16xf32> to vector<392x16xf32>
    %cst = arith.constant dense<0.000000e+00> : vector<392x128xf32>
    %4 = tpu.matmul %3, %0, %cst {dimension_numbers = #tpu.dot_dimension_numbers<[1], [0], [0], [1], [0, 0, 1, 1], [], []>} : vector<392x16xf32>, vector<16x128xf32>, vector<392x128xf32> -> vector<392x128xf32>
    %5 = vector.broadcast %1 : vector<1x128xf32> to vector<392x128xf32>
    %6 = arith.addf %4, %5 : vector<392x128xf32>
    %cst_6 = arith.constant 0.000000e+00 : f32
    %7 = vector.broadcast %cst_6 : f32 to vector<392x128xf32>
    %8 = arith.maximumf %6, %7 : vector<392x128xf32>
    %c1 = arith.constant 1 : index
    %c0_7 = arith.constant 0 : index
    %c0_8 = arith.constant 0 : index
    %9 = vector.load %arg1[%c1, %c0_7, %c0_8] : memref<4x392x16xf32, #tpu.memory_space<vmem>>, vector<1x392x16xf32>
    %10 = vector.shape_cast %9 : vector<1x392x16xf32> to vector<392x16xf32>
    %cst_9 = arith.constant dense<0.000000e+00> : vector<392x128xf32>
    %11 = tpu.matmul %10, %0, %cst_9 {dimension_numbers = #tpu.dot_dimension_numbers<[1], [0], [0], [1], [0, 0, 1, 1], [], []>} : vector<392x16xf32>, vector<16x128xf32>, vector<392x128xf32> -> vector<392x128xf32>
    %12 = vector.broadcast %1 : vector<1x128xf32> to vector<392x128xf32>
    %13 = arith.addf %11, %12 : vector<392x128xf32>
    %cst_10 = arith.constant 0.000000e+00 : f32
    %14 = vector.broadcast %cst_10 : f32 to vector<392x128xf32>
    %15 = arith.maximumf %13, %14 : vector<392x128xf32>
    %c2 = arith.constant 2 : index
    %c0_11 = arith.constant 0 : index
    %c0_12 = arith.constant 0 : index
    %16 = vector.load %arg1[%c2, %c0_11, %c0_12] : memref<4x392x16xf32, #tpu.memory_space<vmem>>, vector<1x392x16xf32>
    %17 = vector.shape_cast %16 : vector<1x392x16xf32> to vector<392x16xf32>
    %cst_13 = arith.constant dense<0.000000e+00> : vector<392x128xf32>
    %18 = tpu.matmul %17, %0, %cst_13 {dimension_numbers = #tpu.dot_dimension_numbers<[1], [0], [0], [1], [0, 0, 1, 1], [], []>} : vector<392x16xf32>, vector<16x128xf32>, vector<392x128xf32> -> vector<392x128xf32>
    %19 = vector.broadcast %1 : vector<1x128xf32> to vector<392x128xf32>
    %20 = arith.addf %18, %19 : vector<392x128xf32>
    %cst_14 = arith.constant 0.000000e+00 : f32
    %21 = vector.broadcast %cst_14 : f32 to vector<392x128xf32>
    %22 = arith.maximumf %20, %21 : vector<392x128xf32>
    %c3 = arith.constant 3 : index
    %c0_15 = arith.constant 0 : index
    %c0_16 = arith.constant 0 : index
    %23 = vector.load %arg1[%c3, %c0_15, %c0_16] : memref<4x392x16xf32, #tpu.memory_space<vmem>>, vector<1x392x16xf32>
    %24 = vector.shape_cast %23 : vector<1x392x16xf32> to vector<392x16xf32>
    %cst_17 = arith.constant dense<0.000000e+00> : vector<392x128xf32>
    %25 = tpu.matmul %24, %0, %cst_17 {dimension_numbers = #tpu.dot_dimension_numbers<[1], [0], [0], [1], [0, 0, 1, 1], [], []>} : vector<392x16xf32>, vector<16x128xf32>, vector<392x128xf32> -> vector<392x128xf32>
    %26 = vector.broadcast %1 : vector<1x128xf32> to vector<392x128xf32>
    %27 = arith.addf %25, %26 : vector<392x128xf32>
    %cst_18 = arith.constant 0.000000e+00 : f32
    %28 = vector.broadcast %cst_18 : f32 to vector<392x128xf32>
    %29 = arith.maximumf %27, %28 : vector<392x128xf32>
    %30 = arith.maximumf %8, %15 : vector<392x128xf32>
    %31 = arith.maximumf %22, %29 : vector<392x128xf32>
    %32 = arith.maximumf %30, %31 : vector<392x128xf32>
    %c0_19 = arith.constant 0 : index
    %c0_20 = arith.constant 0 : index
    %33 = vector.load %arg4[%c0_19, %c0_20] : memref<392x128xf32, #tpu.memory_space<vmem>>, vector<392x128xf32>
    tpu.vector_store %arg4[%c0_19, %c0_20], %32 {strides = array<i32>} : memref<392x128xf32, #tpu.memory_space<vmem>>, vector<392x128xf32>,
    return
  }
  func.func @transform_0(%arg0: i32) -> (i32, i32, i32) {
    %c0_i32 = arith.constant 0 : i32
    %c0_i32_0 = arith.constant 0 : i32
    %c0_i32_1 = arith.constant 0 : i32
    return %c0_i32, %arg0, %c0_i32_0 : i32, i32, i32
  }
  func.func @transform_1(%arg0: i32) -> (i32, i32) {
    %c0_i32 = arith.constant 0 : i32
    %c0_i32_0 = arith.constant 0 : i32
    %c0_i32_1 = arith.constant 0 : i32
    return %c0_i32, %c0_i32_0 : i32, i32
  }
  func.func @transform_2(%arg0: i32) -> (i32, i32) {
    %c0_i32 = arith.constant 0 : i32
    %c0_i32_0 = arith.constant 0 : i32
    %c0_i32_1 = arith.constant 0 : i32
    return %c0_i32, %c0_i32_0 : i32, i32
  }
  func.func @transform_3(%arg0: i32) -> (i32, i32) {
    %c0_i32 = arith.constant 0 : i32
    %c0_i32_0 = arith.constant 0 : i32
    return %arg0, %c0_i32 : i32, i32
  }
}

module attributes {stable_mosaic.version = 11 : i64} {
  func.func @_conv_relu_pool_kernel(%arg0: i32, %arg1: memref<4x104x128xf32, #tpu.memory_space<vmem>>, %arg2: memref<128x128xf32, #tpu.memory_space<vmem>>, %arg3: memref<1x128xf32, #tpu.memory_space<vmem>>, %arg4: memref<104x128xf32, #tpu.memory_space<vmem>>) attributes {dimension_semantics = [#tpu.dimension_semantics<parallel>], iteration_bounds = array<i64: 1>, scalar_prefetch = 0 : i64, scratch_operands = 0 : i64, tpu.core_type = #tpu.core_type<tc>, window_params = [{transform_indices = @transform_0, window_bounds = array<i64: 4, 104, 128>}, {pipeline_mode = #tpu.pipeline_mode<synchronous>, transform_indices = @transform_1, window_bounds = array<i64: 128, 128>}, {pipeline_mode = #tpu.pipeline_mode<synchronous>, transform_indices = @transform_2, window_bounds = array<i64: 1, 128>}, {transform_indices = @transform_3, window_bounds = array<i64: 104, 128>}]} {
    %c0 = arith.constant 0 : index
    %c0_0 = arith.constant 0 : index
    %0 = vector.load %arg2[%c0, %c0_0] : memref<128x128xf32, #tpu.memory_space<vmem>>, vector<128x128xf32>
    %c0_1 = arith.constant 0 : index
    %c0_2 = arith.constant 0 : index
    %1 = vector.load %arg3[%c0_1, %c0_2] : memref<1x128xf32, #tpu.memory_space<vmem>>, vector<1x128xf32>
    %c0_3 = arith.constant 0 : index
    %c0_4 = arith.constant 0 : index
    %c0_5 = arith.constant 0 : index
    %2 = vector.load %arg1[%c0_3, %c0_4, %c0_5] : memref<4x104x128xf32, #tpu.memory_space<vmem>>, vector<1x104x128xf32>
    %3 = vector.shape_cast %2 : vector<1x104x128xf32> to vector<104x128xf32>
    %cst = arith.constant dense<0.000000e+00> : vector<104x128xf32>
    %4 = tpu.matmul %3, %0, %cst {dimension_numbers = #tpu.dot_dimension_numbers<[1], [0], [0], [1], [0, 0, 1, 1], [], []>} : vector<104x128xf32>, vector<128x128xf32>, vector<104x128xf32> -> vector<104x128xf32>
    %5 = vector.broadcast %1 : vector<1x128xf32> to vector<104x128xf32>
    %6 = arith.addf %4, %5 : vector<104x128xf32>
    %cst_6 = arith.constant 0.000000e+00 : f32
    %7 = vector.broadcast %cst_6 : f32 to vector<104x128xf32>
    %8 = arith.maximumf %6, %7 : vector<104x128xf32>
    %c1 = arith.constant 1 : index
    %c0_7 = arith.constant 0 : index
    %c0_8 = arith.constant 0 : index
    %9 = vector.load %arg1[%c1, %c0_7, %c0_8] : memref<4x104x128xf32, #tpu.memory_space<vmem>>, vector<1x104x128xf32>
    %10 = vector.shape_cast %9 : vector<1x104x128xf32> to vector<104x128xf32>
    %cst_9 = arith.constant dense<0.000000e+00> : vector<104x128xf32>
    %11 = tpu.matmul %10, %0, %cst_9 {dimension_numbers = #tpu.dot_dimension_numbers<[1], [0], [0], [1], [0, 0, 1, 1], [], []>} : vector<104x128xf32>, vector<128x128xf32>, vector<104x128xf32> -> vector<104x128xf32>
    %12 = vector.broadcast %1 : vector<1x128xf32> to vector<104x128xf32>
    %13 = arith.addf %11, %12 : vector<104x128xf32>
    %cst_10 = arith.constant 0.000000e+00 : f32
    %14 = vector.broadcast %cst_10 : f32 to vector<104x128xf32>
    %15 = arith.maximumf %13, %14 : vector<104x128xf32>
    %c2 = arith.constant 2 : index
    %c0_11 = arith.constant 0 : index
    %c0_12 = arith.constant 0 : index
    %16 = vector.load %arg1[%c2, %c0_11, %c0_12] : memref<4x104x128xf32, #tpu.memory_space<vmem>>, vector<1x104x128xf32>
    %17 = vector.shape_cast %16 : vector<1x104x128xf32> to vector<104x128xf32>
    %cst_13 = arith.constant dense<0.000000e+00> : vector<104x128xf32>
    %18 = tpu.matmul %17, %0, %cst_13 {dimension_numbers = #tpu.dot_dimension_numbers<[1], [0], [0], [1], [0, 0, 1, 1], [], []>} : vector<104x128xf32>, vector<128x128xf32>, vector<104x128xf32> -> vector<104x128xf32>
    %19 = vector.broadcast %1 : vector<1x128xf32> to vector<104x128xf32>
    %20 = arith.addf %18, %19 : vector<104x128xf32>
    %cst_14 = arith.constant 0.000000e+00 : f32
    %21 = vector.broadcast %cst_14 : f32 to vector<104x128xf32>
    %22 = arith.maximumf %20, %21 : vector<104x128xf32>
    %c3 = arith.constant 3 : index
    %c0_15 = arith.constant 0 : index
    %c0_16 = arith.constant 0 : index
    %23 = vector.load %arg1[%c3, %c0_15, %c0_16] : memref<4x104x128xf32, #tpu.memory_space<vmem>>, vector<1x104x128xf32>
    %24 = vector.shape_cast %23 : vector<1x104x128xf32> to vector<104x128xf32>
    %cst_17 = arith.constant dense<0.000000e+00> : vector<104x128xf32>
    %25 = tpu.matmul %24, %0, %cst_17 {dimension_numbers = #tpu.dot_dimension_numbers<[1], [0], [0], [1], [0, 0, 1, 1], [], []>} : vector<104x128xf32>, vector<128x128xf32>, vector<104x128xf32> -> vector<104x128xf32>
    %26 = vector.broadcast %1 : vector<1x128xf32> to vector<104x128xf32>
    %27 = arith.addf %25, %26 : vector<104x128xf32>
    %cst_18 = arith.constant 0.000000e+00 : f32
    %28 = vector.broadcast %cst_18 : f32 to vector<104x128xf32>
    %29 = arith.maximumf %27, %28 : vector<104x128xf32>
    %30 = arith.maximumf %8, %15 : vector<104x128xf32>
    %31 = arith.maximumf %22, %29 : vector<104x128xf32>
    %32 = arith.maximumf %30, %31 : vector<104x128xf32>
    %c0_19 = arith.constant 0 : index
    %c0_20 = arith.constant 0 : index
    %33 = vector.load %arg4[%c0_19, %c0_20] : memref<104x128xf32, #tpu.memory_space<vmem>>, vector<104x128xf32>
    tpu.vector_store %arg4[%c0_19, %c0_20], %32 {strides = array<i32>} : memref<104x128xf32, #tpu.memory_space<vmem>>, vector<104x128xf32>,
    return
  }
  func.func @transform_0(%arg0: i32) -> (i32, i32, i32) {
    %c0_i32 = arith.constant 0 : i32
    %c0_i32_0 = arith.constant 0 : i32
    %c0_i32_1 = arith.constant 0 : i32
    return %c0_i32, %arg0, %c0_i32_0 : i32, i32, i32
  }
  func.func @transform_1(%arg0: i32) -> (i32, i32) {
    %c0_i32 = arith.constant 0 : i32
    %c0_i32_0 = arith.constant 0 : i32
    %c0_i32_1 = arith.constant 0 : i32
    return %c0_i32, %c0_i32_0 : i32, i32
  }
  func.func @transform_2(%arg0: i32) -> (i32, i32) {
    %c0_i32 = arith.constant 0 : i32
    %c0_i32_0 = arith.constant 0 : i32
    %c0_i32_1 = arith.constant 0 : i32
    return %c0_i32, %c0_i32_0 : i32, i32
  }
  func.func @transform_3(%arg0: i32) -> (i32, i32) {
    %c0_i32 = arith.constant 0 : i32
    %c0_i32_0 = arith.constant 0 : i32
    return %arg0, %c0_i32 : i32, i32
  }
}

module attributes {stable_mosaic.version = 11 : i64} {
  func.func @_matmul_bias_kernel(%arg0: i32, %arg1: memref<8x896xf32, #tpu.memory_space<vmem>>, %arg2: memref<896x128xf32, #tpu.memory_space<vmem>>, %arg3: memref<1x128xf32, #tpu.memory_space<vmem>>, %arg4: memref<8x128xf32, #tpu.memory_space<vmem>>) attributes {dimension_semantics = [#tpu.dimension_semantics<parallel>], iteration_bounds = array<i64: 1>, scalar_prefetch = 0 : i64, scratch_operands = 0 : i64, tpu.core_type = #tpu.core_type<tc>, window_params = [{transform_indices = @transform_0, window_bounds = array<i64: 8, 896>}, {pipeline_mode = #tpu.pipeline_mode<synchronous>, transform_indices = @transform_1, window_bounds = array<i64: 896, 128>}, {pipeline_mode = #tpu.pipeline_mode<synchronous>, transform_indices = @transform_2, window_bounds = array<i64: 1, 128>}, {transform_indices = @transform_3, window_bounds = array<i64: 8, 128>}]} {
    %c0 = arith.constant 0 : index
    %c0_0 = arith.constant 0 : index
    %0 = vector.load %arg1[%c0, %c0_0] : memref<8x896xf32, #tpu.memory_space<vmem>>, vector<8x896xf32>
    %c0_1 = arith.constant 0 : index
    %c0_2 = arith.constant 0 : index
    %1 = vector.load %arg2[%c0_1, %c0_2] : memref<896x128xf32, #tpu.memory_space<vmem>>, vector<896x128xf32>
    %cst = arith.constant dense<0.000000e+00> : vector<8x128xf32>
    %2 = tpu.matmul %0, %1, %cst {dimension_numbers = #tpu.dot_dimension_numbers<[1], [0], [0], [1], [0, 0, 1, 1], [], []>} : vector<8x896xf32>, vector<896x128xf32>, vector<8x128xf32> -> vector<8x128xf32>
    %c0_3 = arith.constant 0 : index
    %c0_4 = arith.constant 0 : index
    %3 = vector.load %arg3[%c0_3, %c0_4] : memref<1x128xf32, #tpu.memory_space<vmem>>, vector<1x128xf32>
    %4 = vector.broadcast %3 : vector<1x128xf32> to vector<8x128xf32>
    %5 = arith.addf %2, %4 : vector<8x128xf32>
    %c0_5 = arith.constant 0 : index
    %c0_6 = arith.constant 0 : index
    %6 = vector.load %arg4[%c0_5, %c0_6] : memref<8x128xf32, #tpu.memory_space<vmem>>, vector<8x128xf32>
    tpu.vector_store %arg4[%c0_5, %c0_6], %5 {strides = array<i32>} : memref<8x128xf32, #tpu.memory_space<vmem>>, vector<8x128xf32>,
    return
  }
  func.func @transform_0(%arg0: i32) -> (i32, i32) {
    %c0_i32 = arith.constant 0 : i32
    %c0_i32_0 = arith.constant 0 : i32
    return %arg0, %c0_i32 : i32, i32
  }
  func.func @transform_1(%arg0: i32) -> (i32, i32) {
    %c0_i32 = arith.constant 0 : i32
    %c0_i32_0 = arith.constant 0 : i32
    %c0_i32_1 = arith.constant 0 : i32
    return %c0_i32, %c0_i32_0 : i32, i32
  }
  func.func @transform_2(%arg0: i32) -> (i32, i32) {
    %c0_i32 = arith.constant 0 : i32
    %c0_i32_0 = arith.constant 0 : i32
    %c0_i32_1 = arith.constant 0 : i32
    return %c0_i32, %c0_i32_0 : i32, i32
  }
  func.func @transform_3(%arg0: i32) -> (i32, i32) {
    %c0_i32 = arith.constant 0 : i32
    %c0_i32_0 = arith.constant 0 : i32
    return %arg0, %c0_i32 : i32, i32
  }
}

</mosaic_0001>

<llo_original>
// kernel: cnn_forward.3
$region0: #{cnn_forward.3}
  #allocation0 [shape = 'u32[]', space=smem, size = 0x4, offset = 0x4, fixed_abs, tag = 'smem constant byte address 0x4 - core index']
  #allocation1 [shape = 'u32[144,128]{1,0:T(1,128)}', space=vmem, size = 0x12000, scoped, tag = 'internal scratch']
  %s0 = inlined_call_operand.vmem [shape: f32[4,392,16], index: 0, kind: input, shape index: {}]
  %s1 = inlined_call_operand.vmem [shape: f32[16,128], index: 1, kind: input, shape index: {}]
  %s2 = inlined_call_operand.vmem [shape: f32[1,128], index: 2, kind: input, shape index: {}]
  %s3 = inlined_call_operand.vmem [shape: f32[392,128], index: 3, kind: output, shape index: {}]
  %s4 = sld [smem:[#allocation0]]
  $region22: #{cnn_forward.3} parent=0
    _
  %s6 = ssub.s32 1, %s4
  %s7 = scalar_select 0, %s6, %s4
  // Predicated region
  $region2: #{cnn_forward.3} parent=0 // pred_check
    _
  $region3: #{cnn_forward.3} parent=0 // pred_check_branch
    %9 = sbr.rel (0) target = $region5
  $region4: #{cnn_forward.3} parent=0 // pred_region
    _
  $region5: #{cnn_forward.3} parent=0 // pred_fallthru
    _
  // Predicated region
  $region6: #{cnn_forward.3} parent=0 // pred_check
    _
  $region7: #{cnn_forward.3} parent=0 // pred_check_branch
    %11 = sbr.rel (0) target = $region9
  $region8: #{cnn_forward.3} parent=0 // pred_region
    _
  $region9: #{cnn_forward.3} parent=0 // pred_fallthru
    _
  // Predicated region
  $region10: #{cnn_forward.3} parent=0 // pred_check
    _
  $region11: #{cnn_forward.3} parent=0 // pred_check_branch
    %13 = sbr.rel (0) target = $region13
  $region12: #{cnn_forward.3} parent=0 // pred_region
    _
  $region13: #{cnn_forward.3} parent=0 // pred_fallthru
    _
  %v14 = vld [vmem:[%s1] sm:$0xff]
  %v15 = vld [vmem:[%s1 + $0x8] sm:$0xff]
  %v16 = vld [vmem:[%s2] sm:$0x1]
  %v17 = vld [vmem:[%s0] sm:$0xff]
  %v18 = vld [vmem:[%s0 + $0x8] sm:$0xff]
  %v19 = vld [vmem:[%s0 + $0x10] sm:$0xff]
  %v20 = vld [vmem:[%s0 + $0x18] sm:$0xff]
  %v21 = vld [vmem:[%s0 + $0x20] sm:$0xff]
  %v22 = vld [vmem:[%s0 + $0x28] sm:$0xff]
  %v23 = vld [vmem:[%s0 + $0x30] sm:$0xff]
  %v24 = vld [vmem:[%s0 + $0x38] sm:$0xff]
  %v25 = vld [vmem:[%s0 + $0x40] sm:$0xff]
  %v26 = vld [vmem:[%s0 + $0x48] sm:$0xff]
  %v27 = vld [vmem:[%s0 + $0x50] sm:$0xff]
  %v28 = vld [vmem:[%s0 + $0x58] sm:$0xff]
  %v29 = vld [vmem:[%s0 + $0x60] sm:$0xff]
  %v30 = vld [vmem:[%s0 + $0x68] sm:$0xff]
  %v31 = vld [vmem:[%s0 + $0x70] sm:$0xff]
  %v32 = vld [vmem:[%s0 + $0x78] sm:$0xff]
  %v33 = vld [vmem:[%s0 + $0x80] sm:$0xff]
  %v34 = vld [vmem:[%s0 + $0x88] sm:$0xff]
  %v35 = vld [vmem:[%s0 + $0x90] sm:$0xff]
  %v36 = vld [vmem:[%s0 + $0x98] sm:$0xff]
  %v37 = vld [vmem:[%s0 + $0xa0] sm:$0xff]
  %v38 = vld [vmem:[%s0 + $0xa8] sm:$0xff]
  %v39 = vld [vmem:[%s0 + $0xb0] sm:$0xff]
  %v40 = vld [vmem:[%s0 + $0xb8] sm:$0xff]
  %v41 = vld [vmem:[%s0 + $0xc0] sm:$0xff]
  %v42 = vld [vmem:[%s0 + $0xc8] sm:$0xff]
  %v43 = vld [vmem:[%s0 + $0xd0] sm:$0xff]
  %v44 = vld [vmem:[%s0 + $0xd8] sm:$0xff]
  %v45 = vld [vmem:[%s0 + $0xe0] sm:$0xff]
  %v46 = vld [vmem:[%s0 + $0xe8] sm:$0xff]
  %v47 = vld [vmem:[%s0 + $0xf0] sm:$0xff]
  %v48 = vld [vmem:[%s0 + $0xf8] sm:$0xff]
  %v49 = vld [vmem:[%s0 + $0x100] sm:$0xff]
  %v50 = vld [vmem:[%s0 + $0x108] sm:$0xff]
  %v51 = vld [vmem:[%s0 + $0x110] sm:$0xff]
  %v52 = vld [vmem:[%s0 + $0x118] sm:$0xff]
  %v53 = vld [vmem:[%s0 + $0x120] sm:$0xff]
  %v54 = vld [vmem:[%s0 + $0x128] sm:$0xff]
  %v55 = vld [vmem:[%s0 + $0x130] sm:$0xff]
  %v56 = vld [vmem:[%s0 + $0x138] sm:$0xff]
  %v57 = vld [vmem:[%s0 + $0x140] sm:$0xff]
  %v58 = vld [vmem:[%s0 + $0x148] sm:$0xff]
  %v59 = vld [vmem:[%s0 + $0x150] sm:$0xff]
  %v60 = vld [vmem:[%s0 + $0x158] sm:$0xff]
  %v61 = vld [vmem:[%s0 + $0x160] sm:$0xff]
  %v62 = vld [vmem:[%s0 + $0x168] sm:$0xff]
  %v63 = vld [vmem:[%s0 + $0x170] sm:$0xff]
  %v64 = vld [vmem:[%s0 + $0x178] sm:$0xff]
  %v65 = vld [vmem:[%s0 + $0x180] sm:$0xff]
  %v67 = vlaneseq
  %v68 = vshrl.u32 %v67, 7
  %v69 = vsub.s32 0, %v68
  %v70 = vrot.slane %v16, %v69
  %vm72 = vcmask 130048
  %v74 = vsel %vm72, %v17, 0
  %v77 = vsel %vm72, %v18, 0
  %v80 = vsel %vm72, %v19, 0
  %v83 = vsel %vm72, %v20, 0
  %v86 = vsel %vm72, %v21, 0
  %v89 = vsel %vm72, %v22, 0
  %v92 = vsel %vm72, %v23, 0
  %v95 = vsel %vm72, %v24, 0
  %v98 = vsel %vm72, %v25, 0
  %v101 = vsel %vm72, %v26, 0
  %v104 = vsel %vm72, %v27, 0
  %v107 = vsel %vm72, %v28, 0
  %v110 = vsel %vm72, %v29, 0
  %v113 = vsel %vm72, %v30, 0
  %v116 = vsel %vm72, %v31, 0
  %v119 = vsel %vm72, %v32, 0
  %v122 = vsel %vm72, %v33, 0
  %v125 = vsel %vm72, %v34, 0
  %v128 = vsel %vm72, %v35, 0
  %v131 = vsel %vm72, %v36, 0
  %v134 = vsel %vm72, %v37, 0
  %v137 = vsel %vm72, %v38, 0
  %v140 = vsel %vm72, %v39, 0
  %v143 = vsel %vm72, %v40, 0
  %v146 = vsel %vm72, %v41, 0
  %v149 = vsel %vm72, %v42, 0
  %v152 = vsel %vm72, %v43, 0
  %v155 = vsel %vm72, %v44, 0
  %v158 = vsel %vm72, %v45, 0
  %v161 = vsel %vm72, %v46, 0
  %v164 = vsel %vm72, %v47, 0
  %v167 = vsel %vm72, %v48, 0
  %v170 = vsel %vm72, %v49, 0
  %v173 = vsel %vm72, %v50, 0
  %v176 = vsel %vm72, %v51, 0
  %v179 = vsel %vm72, %v52, 0
  %v182 = vsel %vm72, %v53, 0
  %v185 = vsel %vm72, %v54, 0
  %v188 = vsel %vm72, %v55, 0
  %v191 = vsel %vm72, %v56, 0
  %v194 = vsel %vm72, %v57, 0
  %v197 = vsel %vm72, %v58, 0
  %v200 = vsel %vm72, %v59, 0
  %v203 = vsel %vm72, %v60, 0
  %v206 = vsel %vm72, %v61, 0
  %v209 = vsel %vm72, %v62, 0
  %v212 = vsel %vm72, %v63, 0
  %v215 = vsel %vm72, %v64, 0
  %v218 = vsel %vm72, %v65, 0
  %220 = vmatprep.subr.mxu0 0.0
  %221 = vmatpush1.msra.mxu0 %v14
  %222 = vmatprep.subr.mxu0 0.0
  %223 = vmatpush1.msra.mxu0 %v15
  %224 = vmatprep.subr.mxu0 0.0
  %225 = vmatpush1.msra.mxu0 0.0
  %226 = vmatprep.subr.mxu0 0.0
  %227 = vmatpush1.msra.mxu0 0.0
  %228 = vmatprep.subr.mxu0 0.0
  %229 = vmatpush1.msra.mxu0 0.0
  %230 = vmatprep.subr.mxu0 0.0
  %231 = vmatpush1.msra.mxu0 0.0
  %232 = vmatprep.subr.mxu0 0.0
  %233 = vmatpush1.msra.mxu0 0.0
  %234 = vmatprep.subr.mxu0 0.0
  %235 = vmatpush1.msra.mxu0 0.0
  %236 = vmatprep.subr.mxu0 0.0
  %237 = vmatpush1.msra.mxu0 0.0
  %238 = vmatprep.subr.mxu0 0.0
  %239 = vmatpush1.msra.mxu0 0.0
  %240 = vmatprep.subr.mxu0 0.0
  %241 = vmatpush1.msra.mxu0 0.0
  %242 = vmatprep.subr.mxu0 0.0
  %243 = vmatpush1.msra.mxu0 0.0
  %244 = vmatprep.subr.mxu0 0.0
  %245 = vmatpush1.msra.mxu0 0.0
  %246 = vmatprep.subr.mxu0 0.0
  %247 = vmatpush1.msra.mxu0 0.0
  %248 = vmatprep.subr.mxu0 0.0
  %249 = vmatpush1.msra.mxu0 0.0
  %250 = vmatprep.subr.mxu0 0.0
  %251 = vmatpush1.msra.mxu0 0.0
  %252 = vmatprep.subr.mxu0 0.0
  %253 = vmatpush1.msra.mxu0 0.0
  %254 = vmatprep.subr.mxu0 0.0
  %255 = vmatpush1.msra.mxu0 0.0
  %256 = vmatprep.subr.mxu0 0.0
  %257 = vmatpush1.msra.mxu0 0.0
  %258 = vmatprep.subr.mxu0 0.0
  %259 = vmatpush1.msra.mxu0 0.0
  %260 = vmatprep.subr.mxu0 0.0
  %261 = vmatpush1.msra.mxu0 0.0
  %262 = vmatprep.subr.mxu0 0.0
  %263 = vmatpush1.msra.mxu0 0.0
  %264 = vmatprep.subr.mxu0 0.0
  %265 = vmatpush1.msra.mxu0 0.0
  %266 = vmatprep.subr.mxu0 0.0
  %267 = vmatpush1.msra.mxu0 0.0
  %268 = vmatprep.subr.mxu0 0.0
  %269 = vmatpush1.msra.mxu0 0.0
  %270 = vmatprep.subr.mxu0 0.0
  %271 = vmatpush1.msra.mxu0 0.0
  %272 = vmatprep.subr.mxu0 0.0
  %273 = vmatpush1.msra.mxu0 0.0
  %274 = vmatprep.subr.mxu0 0.0
  %275 = vmatpush1.msra.mxu0 0.0
  %276 = vmatprep.subr.mxu0 0.0
  %277 = vmatpush1.msra.mxu0 0.0
  %278 = vmatprep.subr.mxu0 0.0
  %279 = vmatpush1.msra.mxu0 0.0
  %280 = vmatprep.subr.mxu0 0.0
  %281 = vmatpush1.msra.mxu0 0.0
  %282 = vmatprep.subr.mxu0 0.0
  %283 = vmatpush1.msra.mxu0 0.0
  %284 = vmatprep.mubr.f32.mxu0 0.0
  %285 = vmatmul.mubr.f32.gmra.mrb[0].mxu0 %v74
  %v286 = vpop.f32.mrb[0].mxu0
  %v287 = vadd.f32 %v70, %v286
  %v288 = vpop.f32.mrb[0].mxu0
  %289 = vmatprep.mubr.f32.mxu0 0.0
  %290 = vmatmul.mubr.f32.gmra.mrb[0].mxu0 %v77
  %v291 = vpop.f32.mrb[0].mxu0
  %v292 = vadd.f32 %v70, %v291
  %v293 = vpop.f32.mrb[0].mxu0
  %294 = vmatprep.mubr.f32.mxu0 0.0
  %295 = vmatmul.mubr.f32.gmra.mrb[0].mxu0 %v80
  %v296 = vpop.f32.mrb[0].mxu0
  %v297 = vadd.f32 %v70, %v296
  %v298 = vpop.f32.mrb[0].mxu0
  %299 = vmatprep.mubr.f32.mxu0 0.0
  %300 = vmatmul.mubr.f32.gmra.mrb[0].mxu0 %v83
  %v301 = vpop.f32.mrb[0].mxu0
  %v302 = vadd.f32 %v70, %v301
  %v303 = vpop.f32.mrb[0].mxu0
  %304 = vmatprep.mubr.f32.mxu0 0.0
  %305 = vmatmul.mubr.f32.gmra.mrb[0].mxu0 %v86
  %v306 = vpop.f32.mrb[0].mxu0
  %v307 = vadd.f32 %v70, %v306
  %v308 = vpop.f32.mrb[0].mxu0
  %309 = vmatprep.mubr.f32.mxu0 0.0
  %310 = vmatmul.mubr.f32.gmra.mrb[0].mxu0 %v89
  %v311 = vpop.f32.mrb[0].mxu0
  %v312 = vadd.f32 %v70, %v311
  %v313 = vpop.f32.mrb[0].mxu0
  %314 = vmatprep.mubr.f32.mxu0 0.0
  %315 = vmatmul.mubr.f32.gmra.mrb[0].mxu0 %v92
  %v316 = vpop.f32.mrb[0].mxu0
  %v317 = vadd.f32 %v70, %v316
  %v318 = vpop.f32.mrb[0].mxu0
  %319 = vmatprep.mubr.f32.mxu0 0.0
  %320 = vmatmul.mubr.f32.gmra.mrb[0].mxu0 %v95
  %v321 = vpop.f32.mrb[0].mxu0
  %v322 = vadd.f32 %v70, %v321
  %v323 = vpop.f32.mrb[0].mxu0
  %324 = vmatprep.mubr.f32.mxu0 0.0
  %325 = vmatmul.mubr.f32.gmra.mrb[0].mxu0 %v98
  %v326 = vpop.f32.mrb[0].mxu0
  %v327 = vadd.f32 %v70, %v326
  %v328 = vpop.f32.mrb[0].mxu0
  %329 = vmatprep.mubr.f32.mxu0 0.0
  %330 = vmatmul.mubr.f32.gmra.mrb[0].mxu0 %v101
  %v331 = vpop.f32.mrb[0].mxu0
  %v332 = vadd.f32 %v70, %v331
  %v333 = vpop.f32.mrb[0].mxu0
  %334 = vmatprep.mubr.f32.mxu0 0.0
  %335 = vmatmul.mubr.f32.gmra.mrb[0].mxu0 %v104
  %v336 = vpop.f32.mrb[0].mxu0
  %v337 = vadd.f32 %v70, %v336
  %v338 = vpop.f32.mrb[0].mxu0
  %339 = vmatprep.mubr.f32.mxu0 0.0
  %340 = vmatmul.mubr.f32.gmra.mrb[0].mxu0 %v107
  %v341 = vpop.f32.mrb[0].mxu0
  %v342 = vadd.f32 %v70, %v341
  %v343 = vpop.f32.mrb[0].mxu0
  %344 = vmatprep.mubr.f32.mxu0 0.0
  %345 = vmatmul.mubr.f32.gmra.mrb[0].mxu0 %v110
  %v346 = vpop.f32.mrb[0].mxu0
  %v347 = vadd.f32 %v70, %v346
  %v348 = vpop.f32.mrb[0].mxu0
  %349 = vmatprep.mubr.f32.mxu0 0.0
  %350 = vmatmul.mubr.f32.gmra.mrb[0].mxu0 %v113
  %v351 = vpop.f32.mrb[0].mxu0
  %v352 = vadd.f32 %v70, %v351
  %v353 = vpop.f32.mrb[0].mxu0
  %354 = vmatprep.mubr.f32.mxu0 0.0
  %355 = vmatmul.mubr.f32.gmra.mrb[0].mxu0 %v116
  %v356 = vpop.f32.mrb[0].mxu0
  %v357 = vadd.f32 %v70, %v356
  %v358 = vpop.f32.mrb[0].mxu0
  %359 = vmatprep.mubr.f32.mxu0 0.0
  %360 = vmatmul.mubr.f32.gmra.mrb[0].mxu0 %v119
  %v361 = vpop.f32.mrb[0].mxu0
  %v362 = vadd.f32 %v70, %v361
  %v363 = vpop.f32.mrb[0].mxu0
  %364 = vmatprep.mubr.f32.mxu0 0.0
  %365 = vmatmul.mubr.f32.gmra.mrb[0].mxu0 %v122
  %v366 = vpop.f32.mrb[0].mxu0
  %v367 = vadd.f32 %v70, %v366
  %v368 = vpop.f32.mrb[0].mxu0
  %369 = vmatprep.mubr.f32.mxu0 0.0
  %370 = vmatmul.mubr.f32.gmra.mrb[0].mxu0 %v125
  %v371 = vpop.f32.mrb[0].mxu0
  %v372 = vadd.f32 %v70, %v371
  %v373 = vpop.f32.mrb[0].mxu0
  %374 = vmatprep.mubr.f32.mxu0 0.0
  %375 = vmatmul.mubr.f32.gmra.mrb[0].mxu0 %v128
  %v376 = vpop.f32.mrb[0].mxu0
  %v377 = vadd.f32 %v70, %v376
  %v378 = vpop.f32.mrb[0].mxu0
  %379 = vmatprep.mubr.f32.mxu0 0.0
  %380 = vmatmul.mubr.f32.gmra.mrb[0].mxu0 %v131
  %v381 = vpop.f32.mrb[0].mxu0
  %v382 = vadd.f32 %v70, %v381
  %v383 = vpop.f32.mrb[0].mxu0
  %384 = vmatprep.mubr.f32.mxu0 0.0
  %385 = vmatmul.mubr.f32.gmra.mrb[0].mxu0 %v134
  %v386 = vpop.f32.mrb[0].mxu0
  %v387 = vadd.f32 %v70, %v386
  %v388 = vpop.f32.mrb[0].mxu0
  %389 = vmatprep.mubr.f32.mxu0 0.0
  %390 = vmatmul.mubr.f32.gmra.mrb[0].mxu0 %v137
  %v391 = vpop.f32.mrb[0].mxu0
  %v392 = vadd.f32 %v70, %v391
  %v393 = vpop.f32.mrb[0].mxu0
  %394 = vmatprep.mubr.f32.mxu0 0.0
  %395 = vmatmul.mubr.f32.gmra.mrb[0].mxu0 %v140
  %v396 = vpop.f32.mrb[0].mxu0
  %v397 = vadd.f32 %v70, %v396
  %v398 = vpop.f32.mrb[0].mxu0
  %399 = vmatprep.mubr.f32.mxu0 0.0
  %400 = vmatmul.mubr.f32.gmra.mrb[0].mxu0 %v143
  %v401 = vpop.f32.mrb[0].mxu0
  %v402 = vadd.f32 %v70, %v401
  %v403 = vpop.f32.mrb[0].mxu0
  %404 = vmatprep.mubr.f32.mxu0 0.0
  %405 = vmatmul.mubr.f32.gmra.mrb[0].mxu0 %v146
  %v406 = vpop.f32.mrb[0].mxu0
  %v407 = vadd.f32 %v70, %v406
  %v408 = vpop.f32.mrb[0].mxu0
  %409 = vmatprep.mubr.f32.mxu0 0.0
  %410 = vmatmul.mubr.f32.gmra.mrb[0].mxu0 %v149
  %v411 = vpop.f32.mrb[0].mxu0
  %v412 = vadd.f32 %v70, %v411
  %v413 = vpop.f32.mrb[0].mxu0
  %414 = vmatprep.mubr.f32.mxu0 0.0
  %415 = vmatmul.mubr.f32.gmra.mrb[0].mxu0 %v152
  %v416 = vpop.f32.mrb[0].mxu0
  %v417 = vadd.f32 %v70, %v416
  %v418 = vpop.f32.mrb[0].mxu0
  %419 = vmatprep.mubr.f32.mxu0 0.0
  %420 = vmatmul.mubr.f32.gmra.mrb[0].mxu0 %v155
  %v421 = vpop.f32.mrb[0].mxu0
  %v422 = vadd.f32 %v70, %v421
  %v423 = vpop.f32.mrb[0].mxu0
  %424 = vmatprep.mubr.f32.mxu0 0.0
  %425 = vmatmul.mubr.f32.gmra.mrb[0].mxu0 %v158
  %v426 = vpop.f32.mrb[0].mxu0
  %v427 = vadd.f32 %v70, %v426
  %v428 = vpop.f32.mrb[0].mxu0
  %429 = vmatprep.mubr.f32.mxu0 0.0
  %430 = vmatmul.mubr.f32.gmra.mrb[0].mxu0 %v161
  %v431 = vpop.f32.mrb[0].mxu0
  %v432 = vadd.f32 %v70, %v431
  %v433 = vpop.f32.mrb[0].mxu0
  %434 = vmatprep.mubr.f32.mxu0 0.0
  %435 = vmatmul.mubr.f32.gmra.mrb[0].mxu0 %v164
  %v436 = vpop.f32.mrb[0].mxu0
  %v437 = vadd.f32 %v70, %v436
  %v438 = vpop.f32.mrb[0].mxu0
  %439 = vmatprep.mubr.f32.mxu0 0.0
  %440 = vmatmul.mubr.f32.gmra.mrb[0].mxu0 %v167
  %v441 = vpop.f32.mrb[0].mxu0
  %v442 = vadd.f32 %v70, %v441
  %v443 = vpop.f32.mrb[0].mxu0
  %444 = vmatprep.mubr.f32.mxu0 0.0
  %445 = vmatmul.mubr.f32.gmra.mrb[0].mxu0 %v170
  %v446 = vpop.f32.mrb[0].mxu0
  %v447 = vadd.f32 %v70, %v446
  %v448 = vpop.f32.mrb[0].mxu0
  %449 = vmatprep.mubr.f32.mxu0 0.0
  %450 = vmatmul.mubr.f32.gmra.mrb[0].mxu0 %v173
  %v451 = vpop.f32.mrb[0].mxu0
  %v452 = vadd.f32 %v70, %v451
  %v453 = vpop.f32.mrb[0].mxu0
  %454 = vmatprep.mubr.f32.mxu0 0.0
  %455 = vmatmul.mubr.f32.gmra.mrb[0].mxu0 %v176
  %v456 = vpop.f32.mrb[0].mxu0
  %v457 = vadd.f32 %v70, %v456
  %v458 = vpop.f32.mrb[0].mxu0
  %459 = vmatprep.mubr.f32.mxu0 0.0
  %460 = vmatmul.mubr.f32.gmra.mrb[0].mxu0 %v179
  %v461 = vpop.f32.mrb[0].mxu0
  %v462 = vadd.f32 %v70, %v461
  %v463 = vpop.f32.mrb[0].mxu0
  %464 = vmatprep.mubr.f32.mxu0 0.0
  %465 = vmatmul.mubr.f32.gmra.mrb[0].mxu0 %v182
  %v466 = vpop.f32.mrb[0].mxu0
  %v467 = vadd.f32 %v70, %v466
  %v468 = vpop.f32.mrb[0].mxu0
  %469 = vmatprep.mubr.f32.mxu0 0.0
  %470 = vmatmul.mubr.f32.gmra.mrb[0].mxu0 %v185
  %v471 = vpop.f32.mrb[0].mxu0
  %v472 = vadd.f32 %v70, %v471
  %v473 = vpop.f32.mrb[0].mxu0
  %474 = vmatprep.mubr.f32.mxu0 0.0
  %475 = vmatmul.mubr.f32.gmra.mrb[0].mxu0 %v188
  %v476 = vpop.f32.mrb[0].mxu0
  %v477 = vadd.f32 %v70, %v476
  %v478 = vpop.f32.mrb[0].mxu0
  %479 = vmatprep.mubr.f32.mxu0 0.0
  %480 = vmatmul.mubr.f32.gmra.mrb[0].mxu0 %v191
  %v481 = vpop.f32.mrb[0].mxu0
  %v482 = vadd.f32 %v70, %v481
  %v483 = vpop.f32.mrb[0].mxu0
  %484 = vmatprep.mubr.f32.mxu0 0.0
  %485 = vmatmul.mubr.f32.gmra.mrb[0].mxu0 %v194
  %v486 = vpop.f32.mrb[0].mxu0
  %v487 = vadd.f32 %v70, %v486
  %v488 = vpop.f32.mrb[0].mxu0
  %489 = vmatprep.mubr.f32.mxu0 0.0
  %490 = vmatmul.mubr.f32.gmra.mrb[0].mxu0 %v197
  %v491 = vpop.f32.mrb[0].mxu0
  %v492 = vadd.f32 %v70, %v491
  %v493 = vpop.f32.mrb[0].mxu0
  %494 = vmatprep.mubr.f32.mxu0 0.0
  %495 = vmatmul.mubr.f32.gmra.mrb[0].mxu0 %v200
  %v496 = vpop.f32.mrb[0].mxu0
  %v497 = vadd.f32 %v70, %v496
  %v498 = vpop.f32.mrb[0].mxu0
  %499 = vmatprep.mubr.f32.mxu0 0.0
  %500 = vmatmul.mubr.f32.gmra.mrb[0].mxu0 %v203
  %v501 = vpop.f32.mrb[0].mxu0
  %v502 = vadd.f32 %v70, %v501
  %v503 = vpop.f32.mrb[0].mxu0
  %504 = vmatprep.mubr.f32.mxu0 0.0
  %505 = vmatmul.mubr.f32.gmra.mrb[0].mxu0 %v206
  %v506 = vpop.f32.mrb[0].mxu0
  %v507 = vadd.f32 %v70, %v506
  %v508 = vpop.f32.mrb[0].mxu0
  %509 = vmatprep.mubr.f32.mxu0 0.0
  %510 = vmatmul.mubr.f32.gmra.mrb[0].mxu0 %v209
  %v511 = vpop.f32.mrb[0].mxu0
  %v512 = vadd.f32 %v70, %v511
  %v513 = vpop.f32.mrb[0].mxu0
  %514 = vmatprep.mubr.f32.mxu0 0.0
  %515 = vmatmul.mubr.f32.gmra.mrb[0].mxu0 %v212
  %v516 = vpop.f32.mrb[0].mxu0
  %v517 = vadd.f32 %v70, %v516
  %v518 = vpop.f32.mrb[0].mxu0
  %519 = vmatprep.mubr.f32.mxu0 0.0
  %520 = vmatmul.mubr.f32.gmra.mrb[0].mxu0 %v215
  %v521 = vpop.f32.mrb[0].mxu0
  %v522 = vadd.f32 %v70, %v521
  %v523 = vpop.f32.mrb[0].mxu0
  %524 = vmatprep.mubr.f32.mxu0 0.0
  %525 = vmatmul.mubr.f32.gmra.mrb[0].mxu0 %v218
  %v526 = vpop.f32.mrb[0].mxu0
  %v527 = vadd.f32 %v70, %v526
  %v528 = vpop.f32.mrb[0].mxu0
  %529 = vdwg.mxu0
  %v530 = vmax.f32 %v287, 0.0
  %v531 = vmax.f32 %v292, 0.0
  %v532 = vmax.f32 %v297, 0.0
  %v533 = vmax.f32 %v302, 0.0
  %v534 = vmax.f32 %v307, 0.0
  %v535 = vmax.f32 %v312, 0.0
  %v536 = vmax.f32 %v317, 0.0
  %v537 = vmax.f32 %v322, 0.0
  %v538 = vmax.f32 %v327, 0.0
  %v539 = vmax.f32 %v332, 0.0
  %v540 = vmax.f32 %v337, 0.0
  %v541 = vmax.f32 %v342, 0.0
  %v542 = vmax.f32 %v347, 0.0
  %v543 = vmax.f32 %v352, 0.0
  %v544 = vmax.f32 %v357, 0.0
  %v545 = vmax.f32 %v362, 0.0
  %v546 = vmax.f32 %v367, 0.0
  %v547 = vmax.f32 %v372, 0.0
  %v548 = vmax.f32 %v377, 0.0
  %v549 = vmax.f32 %v382, 0.0
  %v550 = vmax.f32 %v387, 0.0
  %v551 = vmax.f32 %v392, 0.0
  %v552 = vmax.f32 %v397, 0.0
  %v553 = vmax.f32 %v402, 0.0
  %v554 = vmax.f32 %v407, 0.0
  %v555 = vmax.f32 %v412, 0.0
  %v556 = vmax.f32 %v417, 0.0
  %v557 = vmax.f32 %v422, 0.0
  %v558 = vmax.f32 %v427, 0.0
  %v559 = vmax.f32 %v432, 0.0
  %v560 = vmax.f32 %v437, 0.0
  %v561 = vmax.f32 %v442, 0.0
  %v562 = vmax.f32 %v447, 0.0
  %v563 = vmax.f32 %v452, 0.0
  %v564 = vmax.f32 %v457, 0.0
  %v565 = vmax.f32 %v462, 0.0
  %v566 = vmax.f32 %v467, 0.0
  %v567 = vmax.f32 %v472, 0.0
  %v568 = vmax.f32 %v477, 0.0
  %v569 = vmax.f32 %v482, 0.0
  %v570 = vmax.f32 %v487, 0.0
  %v571 = vmax.f32 %v492, 0.0
  %v572 = vmax.f32 %v497, 0.0
  %v573 = vmax.f32 %v502, 0.0
  %v574 = vmax.f32 %v507, 0.0
  %v575 = vmax.f32 %v512, 0.0
  %v576 = vmax.f32 %v517, 0.0
  %v577 = vmax.f32 %v522, 0.0
  %v578 = vmax.f32 %v527, 0.0
  %s579 = scalar_lea.vmem %s0, 392
  %v580 = vld [vmem:[%s579] sm:$0xff]
  %v581 = vld [vmem:[%s579 + $0x8] sm:$0xff]
  %v582 = vld [vmem:[%s579 + $0x10] sm:$0xff]
  %v583 = vld [vmem:[%s579 + $0x18] sm:$0xff]
  %v584 = vld [vmem:[%s579 + $0x20] sm:$0xff]
  %v585 = vld [vmem:[%s579 + $0x28] sm:$0xff]
  %v586 = vld [vmem:[%s579 + $0x30] sm:$0xff]
  %v587 = vld [vmem:[%s579 + $0x38] sm:$0xff]
  %v588 = vld [vmem:[%s579 + $0x40] sm:$0xff]
  %v589 = vld [vmem:[%s579 + $0x48] sm:$0xff]
  %v590 = vld [vmem:[%s579 + $0x50] sm:$0xff]
  %v591 = vld [vmem:[%s579 + $0x58] sm:$0xff]
  %v592 = vld [vmem:[%s579 + $0x60] sm:$0xff]
  %v593 = vld [vmem:[%s579 + $0x68] sm:$0xff]
  %v594 = vld [vmem:[%s579 + $0x70] sm:$0xff]
  %v595 = vld [vmem:[%s579 + $0x78] sm:$0xff]
  %v596 = vld [vmem:[%s579 + $0x80] sm:$0xff]
  %v597 = vld [vmem:[%s579 + $0x88] sm:$0xff]
  %v598 = vld [vmem:[%s579 + $0x90] sm:$0xff]
  %v599 = vld [vmem:[%s579 + $0x98] sm:$0xff]
  %v600 = vld [vmem:[%s579 + $0xa0] sm:$0xff]
  %v601 = vld [vmem:[%s579 + $0xa8] sm:$0xff]
  %v602 = vld [vmem:[%s579 + $0xb0] sm:$0xff]
  %v603 = vld [vmem:[%s579 + $0xb8] sm:$0xff]
  %v604 = vld [vmem:[%s579 + $0xc0] sm:$0xff]
  %v605 = vld [vmem:[%s579 + $0xc8] sm:$0xff]
  %v606 = vld [vmem:[%s579 + $0xd0] sm:$0xff]
  %v607 = vld [vmem:[%s579 + $0xd8] sm:$0xff]
  %v608 = vld [vmem:[%s579 + $0xe0] sm:$0xff]
  %v609 = vld [vmem:[%s579 + $0xe8] sm:$0xff]
  %v610 = vld [vmem:[%s579 + $0xf0] sm:$0xff]
  %v611 = vld [vmem:[%s579 + $0xf8] sm:$0xff]
  %v612 = vld [vmem:[%s579 + $0x100] sm:$0xff]
  %v613 = vld [vmem:[%s579 + $0x108] sm:$0xff]
  %v614 = vld [vmem:[%s579 + $0x110] sm:$0xff]
  %v615 = vld [vmem:[%s579 + $0x118] sm:$0xff]
  %v616 = vld [vmem:[%s579 + $0x120] sm:$0xff]
  %v617 = vld [vmem:[%s579 + $0x128] sm:$0xff]
  %v618 = vld [vmem:[%s579 + $0x130] sm:$0xff]
  %v619 = vld [vmem:[%s579 + $0x138] sm:$0xff]
  %v620 = vld [vmem:[%s579 + $0x140] sm:$0xff]
  %v621 = vld [vmem:[%s579 + $0x148] sm:$0xff]
  %v622 = vld [vmem:[%s579 + $0x150] sm:$0xff]
  %v623 = vld [vmem:[%s579 + $0x158] sm:$0xff]
  %v624 = vld [vmem:[%s579 + $0x160] sm:$0xff]
  %v625 = vld [vmem:[%s579 + $0x168] sm:$0xff]
  %v626 = vld [vmem:[%s579 + $0x170] sm:$0xff]
  %v627 = vld [vmem:[%s579 + $0x178] sm:$0xff]
  %v628 = vld [vmem:[%s579 + $0x180] sm:$0xff]
  %v630 = vsel %vm72, %v580, 0
  %v633 = vsel %vm72, %v581, 0
  %v636 = vsel %vm72, %v582, 0
  %v639 = vsel %vm72, %v583, 0
  %v642 = vsel %vm72, %v584, 0
  %v645 = vsel %vm72, %v585, 0
  %v648 = vsel %vm72, %v586, 0
  %v651 = vsel %vm72, %v587, 0
  %v654 = vsel %vm72, %v588, 0
  %v657 = vsel %vm72, %v589, 0
  %v660 = vsel %vm72, %v590, 0
  %v663 = vsel %vm72, %v591, 0
  %v666 = vsel %vm72, %v592, 0
  %v669 = vsel %vm72, %v593, 0
  %v672 = vsel %vm72, %v594, 0
  %v675 = vsel %vm72, %v595, 0
  %v678 = vsel %vm72, %v596, 0
  %v681 = vsel %vm72, %v597, 0
  %v684 = vsel %vm72, %v598, 0
  %v687 = vsel %vm72, %v599, 0
  %v690 = vsel %vm72, %v600, 0
  %v693 = vsel %vm72, %v601, 0
  %v696 = vsel %vm72, %v602, 0
  %v699 = vsel %vm72, %v603, 0
  %v702 = vsel %vm72, %v604, 0
  %v705 = vsel %vm72, %v605, 0
  %v708 = vsel %vm72, %v606, 0
  %v711 = vsel %vm72, %v607, 0
  %v714 = vsel %vm72, %v608, 0
  %v717 = vsel %vm72, %v609, 0
  %v720 = vsel %vm72, %v610, 0
  %v723 = vsel %vm72, %v611, 0
  %v726 = vsel %vm72, %v612, 0
  %v729 = vsel %vm72, %v613, 0
  %v732 = vsel %vm72, %v614, 0
  %v735 = vsel %vm72, %v615, 0
  %v738 = vsel %vm72, %v616, 0
  %v741 = vsel %vm72, %v617, 0
  %v744 = vsel %vm72, %v618, 0
  %v747 = vsel %vm72, %v619, 0
  %v750 = vsel %vm72, %v620, 0
  %v753 = vsel %vm72, %v621, 0
  %v756 = vsel %vm72, %v622, 0
  %v759 = vsel %vm72, %v623, 0
  %v762 = vsel %vm72, %v624, 0
  %v765 = vsel %vm72, %v625, 0
  %v768 = vsel %vm72, %v626, 0
  %v771 = vsel %vm72, %v627, 0
  %v774 = vsel %vm72, %v628, 0
  %776 = vmatprep.subr.mxu0 0.0
  %777 = vmatpush1.msra.mxu0 %v14
  %778 = vmatprep.subr.mxu0 0.0
  %779 = vmatpush1.msra.mxu0 %v15
  %780 = vmatprep.subr.mxu0 0.0
  %781 = vmatpush1.msra.mxu0 0.0
  %782 = vmatprep.subr.mxu0 0.0
  %783 = vmatpush1.msra.mxu0 0.0
  %784 = vmatprep.subr.mxu0 0.0
  %785 = vmatpush1.msra.mxu0 0.0
  %786 = vmatprep.subr.mxu0 0.0
  %787 = vmatpush1.msra.mxu0 0.0
  %788 = vmatprep.subr.mxu0 0.0
  %789 = vmatpush1.msra.mxu0 0.0
  %790 = vmatprep.subr.mxu0 0.0
  %791 = vmatpush1.msra.mxu0 0.0
  %792 = vmatprep.subr.mxu0 0.0
  %793 = vmatpush1.msra.mxu0 0.0
  %794 = vmatprep.subr.mxu0 0.0
  %795 = vmatpush1.msra.mxu0 0.0
  %796 = vmatprep.subr.mxu0 0.0
  %797 = vmatpush1.msra.mxu0 0.0
  %798 = vmatprep.subr.mxu0 0.0
  %799 = vmatpush1.msra.mxu0 0.0
  %800 = vmatprep.subr.mxu0 0.0
  %801 = vmatpush1.msra.mxu0 0.0
  %802 = vmatprep.subr.mxu0 0.0
  %803 = vmatpush1.msra.mxu0 0.0
  %804 = vmatprep.subr.mxu0 0.0
  %805 = vmatpush1.msra.mxu0 0.0
  %806 = vmatprep.subr.mxu0 0.0
  %807 = vmatpush1.msra.mxu0 0.0
  %808 = vmatprep.subr.mxu0 0.0
  %809 = vmatpush1.msra.mxu0 0.0
  %810 = vmatprep.subr.mxu0 0.0
  %811 = vmatpush1.msra.mxu0 0.0
  %812 = vmatprep.subr.mxu0 0.0
  %813 = vmatpush1.msra.mxu0 0.0
  %814 = vmatprep.subr.mxu0 0.0
  %815 = vmatpush1.msra.mxu0 0.0
  %816 = vmatprep.subr.mxu0 0.0
  %817 = vmatpush1.msra.mxu0 0.0
  %818 = vmatprep.subr.mxu0 0.0
  %819 = vmatpush1.msra.mxu0 0.0
  %820 = vmatprep.subr.mxu0 0.0
  %821 = vmatpush1.msra.mxu0 0.0
  %822 = vmatprep.subr.mxu0 0.0
  %823 = vmatpush1.msra.mxu0 0.0
  %824 = vmatprep.subr.mxu0 0.0
  %825 = vmatpush1.msra.mxu0 0.0
  %826 = vmatprep.subr.mxu0 0.0
  %827 = vmatpush1.msra.mxu0 0.0
  %828 = vmatprep.subr.mxu0 0.0
  %829 = vmatpush1.msra.mxu0 0.0
  %830 = vmatprep.subr.mxu0 0.0
  %831 = vmatpush1.msra.mxu0 0.0
  %832 = vmatprep.subr.mxu0 0.0
  %833 = vmatpush1.msra.mxu0 0.0
  %834 = vmatprep.subr.mxu0 0.0
  %835 = vmatpush1.msra.mxu0 0.0
  %836 = vmatprep.subr.mxu0 0.0
  %837 = vmatpush1.msra.mxu0 0.0
  %838 = vmatprep.subr.mxu0 0.0
  %839 = vmatpush1.msra.mxu0 0.0
  %840 = vmatprep.mubr.f32.mxu0 0.0
  %841 = vmatmul.mubr.f32.gmra.mrb[0].mxu0 %v630
  %v842 = vpop.f32.mrb[0].mxu0
  %v843 = vadd.f32 %v70, %v842
  %v844 = vpop.f32.mrb[0].mxu0
  %845 = vmatprep.mubr.f32.mxu0 0.0
  %846 = vmatmul.mubr.f32.gmra.mrb[0].mxu0 %v633
  %v847 = vpop.f32.mrb[0].mxu0
  %v848 = vadd.f32 %v70, %v847
  %v849 = vpop.f32.mrb[0].mxu0
  %850 = vmatprep.mubr.f32.mxu0 0.0
  %851 = vmatmul.mubr.f32.gmra.mrb[0].mxu0 %v636
  %v852 = vpop.f32.mrb[0].mxu0
  %v853 = vadd.f32 %v70, %v852
  %v854 = vpop.f32.mrb[0].mxu0
  %855 = vmatprep.mubr.f32.mxu0 0.0
  %856 = vmatmul.mubr.f32.gmra.mrb[0].mxu0 %v639
  %v857 = vpop.f32.mrb[0].mxu0
  %v858 = vadd.f32 %v70, %v857
  %v859 = vpop.f32.mrb[0].mxu0
  %860 = vmatprep.mubr.f32.mxu0 0.0
  %861 = vmatmul.mubr.f32.gmra.mrb[0].mxu0 %v642
  %v862 = vpop.f32.mrb[0].mxu0
  %v863 = vadd.f32 %v70, %v862
  %v864 = vpop.f32.mrb[0].mxu0
  %865 = vmatprep.mubr.f32.mxu0 0.0
  %866 = vmatmul.mubr.f32.gmra.mrb[0].mxu0 %v645
  %v867 = vpop.f32.mrb[0].mxu0
  %v868 = vadd.f32 %v70, %v867
  %v869 = vpop.f32.mrb[0].mxu0
  %870 = vmatprep.mubr.f32.mxu0 0.0
  %871 = vmatmul.mubr.f32.gmra.mrb[0].mxu0 %v648
  %v872 = vpop.f32.mrb[0].mxu0
  %v873 = vadd.f32 %v70, %v872
  %v874 = vpop.f32.mrb[0].mxu0
  %875 = vmatprep.mubr.f32.mxu0 0.0
  %876 = vmatmul.mubr.f32.gmra.mrb[0].mxu0 %v651
  %v877 = vpop.f32.mrb[0].mxu0
  %v878 = vadd.f32 %v70, %v877
  %v879 = vpop.f32.mrb[0].mxu0
  %880 = vmatprep.mubr.f32.mxu0 0.0
  %881 = vmatmul.mubr.f32.gmra.mrb[0].mxu0 %v654
  %v882 = vpop.f32.mrb[0].mxu0
  %v883 = vadd.f32 %v70, %v882
  %v884 = vpop.f32.mrb[0].mxu0
  %885 = vmatprep.mubr.f32.mxu0 0.0
  %886 = vmatmul.mubr.f32.gmra.mrb[0].mxu0 %v657
  %v887 = vpop.f32.mrb[0].mxu0
  %v888 = vadd.f32 %v70, %v887
  %v889 = vpop.f32.mrb[0].mxu0
  %890 = vmatprep.mubr.f32.mxu0 0.0
  %891 = vmatmul.mubr.f32.gmra.mrb[0].mxu0 %v660
  %v892 = vpop.f32.mrb[0].mxu0
  %v893 = vadd.f32 %v70, %v892
  %v894 = vpop.f32.mrb[0].mxu0
  %895 = vmatprep.mubr.f32.mxu0 0.0
  %896 = vmatmul.mubr.f32.gmra.mrb[0].mxu0 %v663
  %v897 = vpop.f32.mrb[0].mxu0
  %v898 = vadd.f32 %v70, %v897
  %v899 = vpop.f32.mrb[0].mxu0
  %900 = vmatprep.mubr.f32.mxu0 0.0
  %901 = vmatmul.mubr.f32.gmra.mrb[0].mxu0 %v666
  %v902 = vpop.f32.mrb[0].mxu0
  %v903 = vadd.f32 %v70, %v902
  %v904 = vpop.f32.mrb[0].mxu0
  %905 = vmatprep.mubr.f32.mxu0 0.0
  %906 = vmatmul.mubr.f32.gmra.mrb[0].mxu0 %v669
  %v907 = vpop.f32.mrb[0].mxu0
  %v908 = vadd.f32 %v70, %v907
  %v909 = vpop.f32.mrb[0].mxu0
  %910 = vmatprep.mubr.f32.mxu0 0.0
  %911 = vmatmul.mubr.f32.gmra.mrb[0].mxu0 %v672
  %v912 = vpop.f32.mrb[0].mxu0
  %v913 = vadd.f32 %v70, %v912
  %v914 = vpop.f32.mrb[0].mxu0
  %915 = vmatprep.mubr.f32.mxu0 0.0
  %916 = vmatmul.mubr.f32.gmra.mrb[0].mxu0 %v675
  %v917 = vpop.f32.mrb[0].mxu0
  %v918 = vadd.f32 %v70, %v917
  %v919 = vpop.f32.mrb[0].mxu0
  %920 = vmatprep.mubr.f32.mxu0 0.0
  %921 = vmatmul.mubr.f32.gmra.mrb[0].mxu0 %v678
  %v922 = vpop.f32.mrb[0].mxu0
  %v923 = vadd.f32 %v70, %v922
  %v924 = vpop.f32.mrb[0].mxu0
  %925 = vmatprep.mubr.f32.mxu0 0.0
  %926 = vmatmul.mubr.f32.gmra.mrb[0].mxu0 %v681
  %v927 = vpop.f32.mrb[0].mxu0
  %v928 = vadd.f32 %v70, %v927
  %v929 = vpop.f32.mrb[0].mxu0
  %930 = vmatprep.mubr.f32.mxu0 0.0
  %931 = vmatmul.mubr.f32.gmra.mrb[0].mxu0 %v684
  %v932 = vpop.f32.mrb[0].mxu0
  %v933 = vadd.f32 %v70, %v932
  %v934 = vpop.f32.mrb[0].mxu0
  %935 = vmatprep.mubr.f32.mxu0 0.0
  %936 = vmatmul.mubr.f32.gmra.mrb[0].mxu0 %v687
  %v937 = vpop.f32.mrb[0].mxu0
  %v938 = vadd.f32 %v70, %v937
  %v939 = vpop.f32.mrb[0].mxu0
  %940 = vmatprep.mubr.f32.mxu0 0.0
  %941 = vmatmul.mubr.f32.gmra.mrb[0].mxu0 %v690
  %v942 = vpop.f32.mrb[0].mxu0
  %v943 = vadd.f32 %v70, %v942
  %v944 = vpop.f32.mrb[0].mxu0
  %945 = vmatprep.mubr.f32.mxu0 0.0
  %946 = vmatmul.mubr.f32.gmra.mrb[0].mxu0 %v693
  %v947 = vpop.f32.mrb[0].mxu0
  %v948 = vadd.f32 %v70, %v947
  %v949 = vpop.f32.mrb[0].mxu0
  %950 = vmatprep.mubr.f32.mxu0 0.0
  %951 = vmatmul.mubr.f32.gmra.mrb[0].mxu0 %v696
  %v952 = vpop.f32.mrb[0].mxu0
  %v953 = vadd.f32 %v70, %v952
  %v954 = vpop.f32.mrb[0].mxu0
  %955 = vmatprep.mubr.f32.mxu0 0.0
  %956 = vmatmul.mubr.f32.gmra.mrb[0].mxu0 %v699
  %v957 = vpop.f32.mrb[0].mxu0
  %v958 = vadd.f32 %v70, %v957
  %v959 = vpop.f32.mrb[0].mxu0
  %960 = vmatprep.mubr.f32.mxu0 0.0
  %961 = vmatmul.mubr.f32.gmra.mrb[0].mxu0 %v702
  %v962 = vpop.f32.mrb[0].mxu0
  %v963 = vadd.f32 %v70, %v962
  %v964 = vpop.f32.mrb[0].mxu0
  %965 = vmatprep.mubr.f32.mxu0 0.0
  %966 = vmatmul.mubr.f32.gmra.mrb[0].mxu0 %v705
  %v967 = vpop.f32.mrb[0].mxu0
  %v968 = vadd.f32 %v70, %v967
  %v969 = vpop.f32.mrb[0].mxu0
  %970 = vmatprep.mubr.f32.mxu0 0.0
  %971 = vmatmul.mubr.f32.gmra.mrb[0].mxu0 %v708
  %v972 = vpop.f32.mrb[0].mxu0
  %v973 = vadd.f32 %v70, %v972
  %v974 = vpop.f32.mrb[0].mxu0
  %975 = vmatprep.mubr.f32.mxu0 0.0
  %976 = vmatmul.mubr.f32.gmra.mrb[0].mxu0 %v711
  %v977 = vpop.f32.mrb[0].mxu0
  %v978 = vadd.f32 %v70, %v977
  %v979 = vpop.f32.mrb[0].mxu0
  %980 = vmatprep.mubr.f32.mxu0 0.0
  %981 = vmatmul.mubr.f32.gmra.mrb[0].mxu0 %v714
  %v982 = vpop.f32.mrb[0].mxu0
  %v983 = vadd.f32 %v70, %v982
  %v984 = vpop.f32.mrb[0].mxu0
  %985 = vmatprep.mubr.f32.mxu0 0.0
  %986 = vmatmul.mubr.f32.gmra.mrb[0].mxu0 %v717
  %v987 = vpop.f32.mrb[0].mxu0
  %v988 = vadd.f32 %v70, %v987
  %v989 = vpop.f32.mrb[0].mxu0
  %990 = vmatprep.mubr.f32.mxu0 0.0
  %991 = vmatmul.mubr.f32.gmra.mrb[0].mxu0 %v720
  %v992 = vpop.f32.mrb[0].mxu0
  %v993 = vadd.f32 %v70, %v992
  %v994 = vpop.f32.mrb[0].mxu0
  %995 = vmatprep.mubr.f32.mxu0 0.0
  %996 = vmatmul.mubr.f32.gmra.mrb[0].mxu0 %v723
  %v997 = vpop.f32.mrb[0].mxu0
  %v998 = vadd.f32 %v70, %v997
  %v999 = vpop.f32.mrb[0].mxu0
  %1000 = vmatprep.mubr.f32.mxu0 0.0
  %1001 = vmatmul.mubr.f32.gmra.mrb[0].mxu0 %v726
  %v1002 = vpop.f32.mrb[0].mxu0
  %v1003 = vadd.f32 %v70, %v1002
  %v1004 = vpop.f32.mrb[0].mxu0
  %1005 = vmatprep.mubr.f32.mxu0 0.0
  %1006 = vmatmul.mubr.f32.gmra.mrb[0].mxu0 %v729
  %v1007 = vpop.f32.mrb[0].mxu0
  %v1008 = vadd.f32 %v70, %v1007
  %v1009 = vpop.f32.mrb[0].mxu0
  %1010 = vmatprep.mubr.f32.mxu0 0.0
  %1011 = vmatmul.mubr.f32.gmra.mrb[0].mxu0 %v732
  %v1012 = vpop.f32.mrb[0].mxu0
  %v1013 = vadd.f32 %v70, %v1012
  %v1014 = vpop.f32.mrb[0].mxu0
  %1015 = vmatprep.mubr.f32.mxu0 0.0
  %1016 = vmatmul.mubr.f32.gmra.mrb[0].mxu0 %v735
  %v1017 = vpop.f32.mrb[0].mxu0
  %v1018 = vadd.f32 %v70, %v1017
  %v1019 = vpop.f32.mrb[0].mxu0
  %1020 = vmatprep.mubr.f32.mxu0 0.0
  %1021 = vmatmul.mubr.f32.gmra.mrb[0].mxu0 %v738
  %v1022 = vpop.f32.mrb[0].mxu0
  %v1023 = vadd.f32 %v70, %v1022
  %v1024 = vpop.f32.mrb[0].mxu0
  %1025 = vmatprep.mubr.f32.mxu0 0.0
  %1026 = vmatmul.mubr.f32.gmra.mrb[0].mxu0 %v741
  %v1027 = vpop.f32.mrb[0].mxu0
  %v1028 = vadd.f32 %v70, %v1027
  %v1029 = vpop.f32.mrb[0].mxu0
  %1030 = vmatprep.mubr.f32.mxu0 0.0
  %1031 = vmatmul.mubr.f32.gmra.mrb[0].mxu0 %v744
  %v1032 = vpop.f32.mrb[0].mxu0
  %v1033 = vadd.f32 %v70, %v1032
  %v1034 = vpop.f32.mrb[0].mxu0
  %1035 = vmatprep.mubr.f32.mxu0 0.0
  %1036 = vmatmul.mubr.f32.gmra.mrb[0].mxu0 %v747
  %v1037 = vpop.f32.mrb[0].mxu0
  %v1038 = vadd.f32 %v70, %v1037
  %v1039 = vpop.f32.mrb[0].mxu0
  %1040 = vmatprep.mubr.f32.mxu0 0.0
  %1041 = vmatmul.mubr.f32.gmra.mrb[0].mxu0 %v750
  %v1042 = vpop.f32.mrb[0].mxu0
  %v1043 = vadd.f32 %v70, %v1042
  %v1044 = vpop.f32.mrb[0].mxu0
  %1045 = vmatprep.mubr.f32.mxu0 0.0
  %1046 = vmatmul.mubr.f32.gmra.mrb[0].mxu0 %v753
  %v1047 = vpop.f32.mrb[0].mxu0
  %v1048 = vadd.f32 %v70, %v1047
  %v1049 = vpop.f32.mrb[0].mxu0
  %1050 = vmatprep.mubr.f32.mxu0 0.0
  %1051 = vmatmul.mubr.f32.gmra.mrb[0].mxu0 %v756
  %v1052 = vpop.f32.mrb[0].mxu0
  %v1053 = vadd.f32 %v70, %v1052
  %v1054 = vpop.f32.mrb[0].mxu0
  %1055 = vmatprep.mubr.f32.mxu0 0.0
  %1056 = vmatmul.mubr.f32.gmra.mrb[0].mxu0 %v759
  %v1057 = vpop.f32.mrb[0].mxu0
  %v1058 = vadd.f32 %v70, %v1057
  %v1059 = vpop.f32.mrb[0].mxu0
  %1060 = vmatprep.mubr.f32.mxu0 0.0
  %1061 = vmatmul.mubr.f32.gmra.mrb[0].mxu0 %v762
  %v1062 = vpop.f32.mrb[0].mxu0
  %v1063 = vadd.f32 %v70, %v1062
  %v1064 = vpop.f32.mrb[0].mxu0
  %1065 = vmatprep.mubr.f32.mxu0 0.0
  %1066 = vmatmul.mubr.f32.gmra.mrb[0].mxu0 %v765
  %v1067 = vpop.f32.mrb[0].mxu0
  %v1068 = vadd.f32 %v70, %v1067
  %v1069 = vpop.f32.mrb[0].mxu0
  %1070 = vmatprep.mubr.f32.mxu0 0.0
  %1071 = vmatmul.mubr.f32.gmra.mrb[0].mxu0 %v768
  %v1072 = vpop.f32.mrb[0].mxu0
  %v1073 = vadd.f32 %v70, %v1072
  %v1074 = vpop.f32.mrb[0].mxu0
  %1075 = vmatprep.mubr.f32.mxu0 0.0
  %1076 = vmatmul.mubr.f32.gmra.mrb[0].mxu0 %v771
  %v1077 = vpop.f32.mrb[0].mxu0
  %v1078 = vadd.f32 %v70, %v1077
  %v1079 = vpop.f32.mrb[0].mxu0
  %1080 = vmatprep.mubr.f32.mxu0 0.0
  %1081 = vmatmul.mubr.f32.gmra.mrb[0].mxu0 %v774
  %v1082 = vpop.f32.mrb[0].mxu0
  %v1083 = vadd.f32 %v70, %v1082
  %v1084 = vpop.f32.mrb[0].mxu0
  %1085 = vdwg.mxu0
  %v1086 = vmax.f32 %v843, 0.0
  %v1087 = vmax.f32 %v848, 0.0
  %v1088 = vmax.f32 %v853, 0.0
  %v1089 = vmax.f32 %v858, 0.0
  %v1090 = vmax.f32 %v863, 0.0
  %v1091 = vmax.f32 %v868, 0.0
  %v1092 = vmax.f32 %v873, 0.0
  %v1093 = vmax.f32 %v878, 0.0
  %v1094 = vmax.f32 %v883, 0.0
  %v1095 = vmax.f32 %v888, 0.0
  %v1096 = vmax.f32 %v893, 0.0
  %v1097 = vmax.f32 %v898, 0.0
  %v1098 = vmax.f32 %v903, 0.0
  %v1099 = vmax.f32 %v908, 0.0
  %v1100 = vmax.f32 %v913, 0.0
  %v1101 = vmax.f32 %v918, 0.0
  %v1102 = vmax.f32 %v923, 0.0
  %v1103 = vmax.f32 %v928, 0.0
  %v1104 = vmax.f32 %v933, 0.0
  %v1105 = vmax.f32 %v938, 0.0
  %v1106 = vmax.f32 %v943, 0.0
  %v1107 = vmax.f32 %v948, 0.0
  %v1108 = vmax.f32 %v953, 0.0
  %v1109 = vmax.f32 %v958, 0.0
  %v1110 = vmax.f32 %v963, 0.0
  %v1111 = vmax.f32 %v968, 0.0
  %v1112 = vmax.f32 %v973, 0.0
  %v1113 = vmax.f32 %v978, 0.0
  %v1114 = vmax.f32 %v983, 0.0
  %v1115 = vmax.f32 %v988, 0.0
  %v1116 = vmax.f32 %v993, 0.0
  %v1117 = vmax.f32 %v998, 0.0
  %v1118 = vmax.f32 %v1003, 0.0
  %v1119 = vmax.f32 %v1008, 0.0
  %v1120 = vmax.f32 %v1013, 0.0
  %v1121 = vmax.f32 %v1018, 0.0
  %v1122 = vmax.f32 %v1023, 0.0
  %v1123 = vmax.f32 %v1028, 0.0
  %v1124 = vmax.f32 %v1033, 0.0
  %v1125 = vmax.f32 %v1038, 0.0
  %v1126 = vmax.f32 %v1043, 0.0
  %v1127 = vmax.f32 %v1048, 0.0
  %v1128 = vmax.f32 %v1053, 0.0
  %v1129 = vmax.f32 %v1058, 0.0
  %v1130 = vmax.f32 %v1063, 0.0
  %v1131 = vmax.f32 %v1068, 0.0
  %v1132 = vmax.f32 %v1073, 0.0
  %v1133 = vmax.f32 %v1078, 0.0
  %v1134 = vmax.f32 %v1083, 0.0
  %s1135 = scalar_lea.vmem %s0, 784
  %v1136 = vld [vmem:[%s1135] sm:$0xff]
  %v1137 = vld [vmem:[%s1135 + $0x8] sm:$0xff]
  %v1138 = vld [vmem:[%s1135 + $0x10] sm:$0xff]
  %v1139 = vld [vmem:[%s1135 + $0x18] sm:$0xff]
  %v1140 = vld [vmem:[%s1135 + $0x20] sm:$0xff]
  %v1141 = vld [vmem:[%s1135 + $0x28] sm:$0xff]
  %v1142 = vld [vmem:[%s1135 + $0x30] sm:$0xff]
  %v1143 = vld [vmem:[%s1135 + $0x38] sm:$0xff]
  %v1144 = vld [vmem:[%s1135 + $0x40] sm:$0xff]
  %v1145 = vld [vmem:[%s1135 + $0x48] sm:$0xff]
  %v1146 = vld [vmem:[%s1135 + $0x50] sm:$0xff]
  %v1147 = vld [vmem:[%s1135 + $0x58] sm:$0xff]
  %v1148 = vld [vmem:[%s1135 + $0x60] sm:$0xff]
  %v1149 = vld [vmem:[%s1135 + $0x68] sm:$0xff]
  %v1150 = vld [vmem:[%s1135 + $0x70] sm:$0xff]
  %v1151 = vld [vmem:[%s1135 + $0x78] sm:$0xff]
  %v1152 = vld [vmem:[%s1135 + $0x80] sm:$0xff]
  %v1153 = vld [vmem:[%s1135 + $0x88] sm:$0xff]
  %v1154 = vld [vmem:[%s1135 + $0x90] sm:$0xff]
  %v1155 = vld [vmem:[%s1135 + $0x98] sm:$0xff]
  %v1156 = vld [vmem:[%s1135 + $0xa0] sm:$0xff]
  %v1157 = vld [vmem:[%s1135 + $0xa8] sm:$0xff]
  %v1158 = vld [vmem:[%s1135 + $0xb0] sm:$0xff]
  %v1159 = vld [vmem:[%s1135 + $0xb8] sm:$0xff]
  %v1160 = vld [vmem:[%s1135 + $0xc0] sm:$0xff]
  %v1161 = vld [vmem:[%s1135 + $0xc8] sm:$0xff]
  %v1162 = vld [vmem:[%s1135 + $0xd0] sm:$0xff]
  %v1163 = vld [vmem:[%s1135 + $0xd8] sm:$0xff]
  %v1164 = vld [vmem:[%s1135 + $0xe0] sm:$0xff]
  %v1165 = vld [vmem:[%s1135 + $0xe8] sm:$0xff]
  %v1166 = vld [vmem:[%s1135 + $0xf0] sm:$0xff]
  %v1167 = vld [vmem:[%s1135 + $0xf8] sm:$0xff]
  %v1168 = vld [vmem:[%s1135 + $0x100] sm:$0xff]
  %v1169 = vld [vmem:[%s1135 + $0x108] sm:$0xff]
  %v1170 = vld [vmem:[%s1135 + $0x110] sm:$0xff]
  %v1171 = vld [vmem:[%s1135 + $0x118] sm:$0xff]
  %v1172 = vld [vmem:[%s1135 + $0x120] sm:$0xff]
  %v1173 = vld [vmem:[%s1135 + $0x128] sm:$0xff]
  %v1174 = vld [vmem:[%s1135 + $0x130] sm:$0xff]
  %v1175 = vld [vmem:[%s1135 + $0x138] sm:$0xff]
  %v1176 = vld [vmem:[%s1135 + $0x140] sm:$0xff]
  %v1177 = vld [vmem:[%s1135 + $0x148] sm:$0xff]
  %v1178 = vld [vmem:[%s1135 + $0x150] sm:$0xff]
  %v1179 = vld [vmem:[%s1135 + $0x158] sm:$0xff]
  %v1180 = vld [vmem:[%s1135 + $0x160] sm:$0xff]
  %v1181 = vld [vmem:[%s1135 + $0x168] sm:$0xff]
  %v1182 = vld [vmem:[%s1135 + $0x170] sm:$0xff]
  %v1183 = vld [vmem:[%s1135 + $0x178] sm:$0xff]
  %v1184 = vld [vmem:[%s1135 + $0x180] sm:$0xff]
  %v1186 = vsel %vm72, %v1136, 0
  %v1189 = vsel %vm72, %v1137, 0
  %v1192 = vsel %vm72, %v1138, 0
  %v1195 = vsel %vm72, %v1139, 0
  %v1198 = vsel %vm72, %v1140, 0
  %v1201 = vsel %vm72, %v1141, 0
  %v1204 = vsel %vm72, %v1142, 0
  %v1207 = vsel %vm72, %v1143, 0
  %v1210 = vsel %vm72, %v1144, 0
  %v1213 = vsel %vm72, %v1145, 0
  %v1216 = vsel %vm72, %v1146, 0
  %v1219 = vsel %vm72, %v1147, 0
  %v1222 = vsel %vm72, %v1148, 0
  %v1225 = vsel %vm72, %v1149, 0
  %v1228 = vsel %vm72, %v1150, 0
  %v1231 = vsel %vm72, %v1151, 0
  %v1234 = vsel %vm72, %v1152, 0
  %v1237 = vsel %vm72, %v1153, 0
  %v1240 = vsel %vm72, %v1154, 0
  %v1243 = vsel %vm72, %v1155, 0
  %v1246 = vsel %vm72, %v1156, 0
  %v1249 = vsel %vm72, %v1157, 0
  %v1252 = vsel %vm72, %v1158, 0
  %v1255 = vsel %vm72, %v1159, 0
  %v1258 = vsel %vm72, %v1160, 0
  %v1261 = vsel %vm72, %v1161, 0
  %v1264 = vsel %vm72, %v1162, 0
  %v1267 = vsel %vm72, %v1163, 0
  %v1270 = vsel %vm72, %v1164, 0
  %v1273 = vsel %vm72, %v1165, 0
  %v1276 = vsel %vm72, %v1166, 0
  %v1279 = vsel %vm72, %v1167, 0
  %v1282 = vsel %vm72, %v1168, 0
  %v1285 = vsel %vm72, %v1169, 0
  %v1288 = vsel %vm72, %v1170, 0
  %v1291 = vsel %vm72, %v1171, 0
  %v1294 = vsel %vm72, %v1172, 0
  %v1297 = vsel %vm72, %v1173, 0
  %v1300 = vsel %vm72, %v1174, 0
  %v1303 = vsel %vm72, %v1175, 0
  %v1306 = vsel %vm72, %v1176, 0
  %v1309 = vsel %vm72, %v1177, 0
  %v1312 = vsel %vm72, %v1178, 0
  %v1315 = vsel %vm72, %v1179, 0
  %v1318 = vsel %vm72, %v1180, 0
  %v1321 = vsel %vm72, %v1181, 0
  %v1324 = vsel %vm72, %v1182, 0
  %v1327 = vsel %vm72, %v1183, 0
  %v1330 = vsel %vm72, %v1184, 0
  %1332 = vmatprep.subr.mxu0 0.0
  %1333 = vmatpush1.msra.mxu0 %v14
  %1334 = vmatprep.subr.mxu0 0.0
  %1335 = vmatpush1.msra.mxu0 %v15
  %1336 = vmatprep.subr.mxu0 0.0
  %1337 = vmatpush1.msra.mxu0 0.0
  %1338 = vmatprep.subr.mxu0 0.0
  %1339 = vmatpush1.msra.mxu0 0.0
  %1340 = vmatprep.subr.mxu0 0.0
  %1341 = vmatpush1.msra.mxu0 0.0
  %1342 = vmatprep.subr.mxu0 0.0
  %1343 = vmatpush1.msra.mxu0 0.0
  %1344 = vmatprep.subr.mxu0 0.0
  %1345 = vmatpush1.msra.mxu0 0.0
  %1346 = vmatprep.subr.mxu0 0.0
  %1347 = vmatpush1.msra.mxu0 0.0
  %1348 = vmatprep.subr.mxu0 0.0
  %1349 = vmatpush1.msra.mxu0 0.0
  %1350 = vmatprep.subr.mxu0 0.0
  %1351 = vmatpush1.msra.mxu0 0.0
  %1352 = vmatprep.subr.mxu0 0.0
  %1353 = vmatpush1.msra.mxu0 0.0
  %1354 = vmatprep.subr.mxu0 0.0
  %1355 = vmatpush1.msra.mxu0 0.0
  %1356 = vmatprep.subr.mxu0 0.0
  %1357 = vmatpush1.msra.mxu0 0.0
  %1358 = vmatprep.subr.mxu0 0.0
  %1359 = vmatpush1.msra.mxu0 0.0
  %1360 = vmatprep.subr.mxu0 0.0
  %1361 = vmatpush1.msra.mxu0 0.0
  %1362 = vmatprep.subr.mxu0 0.0
  %1363 = vmatpush1.msra.mxu0 0.0
  %1364 = vmatprep.subr.mxu0 0.0
  %1365 = vmatpush1.msra.mxu0 0.0
  %1366 = vmatprep.subr.mxu0 0.0
  %1367 = vmatpush1.msra.mxu0 0.0
  %1368 = vmatprep.subr.mxu0 0.0
  %1369 = vmatpush1.msra.mxu0 0.0
  %1370 = vmatprep.subr.mxu0 0.0
  %1371 = vmatpush1.msra.mxu0 0.0
  %1372 = vmatprep.subr.mxu0 0.0
  %1373 = vmatpush1.msra.mxu0 0.0
  %1374 = vmatprep.subr.mxu0 0.0
  %1375 = vmatpush1.msra.mxu0 0.0
  %1376 = vmatprep.subr.mxu0 0.0
  %1377 = vmatpush1.msra.mxu0 0.0
  %1378 = vmatprep.subr.mxu0 0.0
  %1379 = vmatpush1.msra.mxu0 0.0
  %1380 = vmatprep.subr.mxu0 0.0
  %1381 = vmatpush1.msra.mxu0 0.0
  %1382 = vmatprep.subr.mxu0 0.0
  %1383 = vmatpush1.msra.mxu0 0.0
  %1384 = vmatprep.subr.mxu0 0.0
  %1385 = vmatpush1.msra.mxu0 0.0
  %1386 = vmatprep.subr.mxu0 0.0
  %1387 = vmatpush1.msra.mxu0 0.0
  %1388 = vmatprep.subr.mxu0 0.0
  %1389 = vmatpush1.msra.mxu0 0.0
  %1390 = vmatprep.subr.mxu0 0.0
  %1391 = vmatpush1.msra.mxu0 0.0
  %1392 = vmatprep.subr.mxu0 0.0
  %1393 = vmatpush1.msra.mxu0 0.0
  %1394 = vmatprep.subr.mxu0 0.0
  %1395 = vmatpush1.msra.mxu0 0.0
  %1396 = vmatprep.mubr.f32.mxu0 0.0
  %1397 = vmatmul.mubr.f32.gmra.mrb[0].mxu0 %v1186
  %v1398 = vpop.f32.mrb[0].mxu0
  %v1399 = vadd.f32 %v70, %v1398
  %v1400 = vpop.f32.mrb[0].mxu0
  %1401 = vmatprep.mubr.f32.mxu0 0.0
  %1402 = vmatmul.mubr.f32.gmra.mrb[0].mxu0 %v1189
  %v1403 = vpop.f32.mrb[0].mxu0
  %v1404 = vadd.f32 %v70, %v1403
  %v1405 = vpop.f32.mrb[0].mxu0
  %1406 = vmatprep.mubr.f32.mxu0 0.0
  %1407 = vmatmul.mubr.f32.gmra.mrb[0].mxu0 %v1192
  %v1408 = vpop.f32.mrb[0].mxu0
  %v1409 = vadd.f32 %v70, %v1408
  %v1410 = vpop.f32.mrb[0].mxu0
  %1411 = vmatprep.mubr.f32.mxu0 0.0
  %1412 = vmatmul.mubr.f32.gmra.mrb[0].mxu0 %v1195
  %v1413 = vpop.f32.mrb[0].mxu0
  %v1414 = vadd.f32 %v70, %v1413
  %v1415 = vpop.f32.mrb[0].mxu0
  %1416 = vmatprep.mubr.f32.mxu0 0.0
  %1417 = vmatmul.mubr.f32.gmra.mrb[0].mxu0 %v1198
  %v1418 = vpop.f32.mrb[0].mxu0
  %v1419 = vadd.f32 %v70, %v1418
  %v1420 = vpop.f32.mrb[0].mxu0
  %1421 = vmatprep.mubr.f32.mxu0 0.0
  %1422 = vmatmul.mubr.f32.gmra.mrb[0].mxu0 %v1201
  %v1423 = vpop.f32.mrb[0].mxu0
  %v1424 = vadd.f32 %v70, %v1423
  %v1425 = vpop.f32.mrb[0].mxu0
  %1426 = vmatprep.mubr.f32.mxu0 0.0
  %1427 = vmatmul.mubr.f32.gmra.mrb[0].mxu0 %v1204
  %v1428 = vpop.f32.mrb[0].mxu0
  %v1429 = vadd.f32 %v70, %v1428
  %v1430 = vpop.f32.mrb[0].mxu0
  %1431 = vmatprep.mubr.f32.mxu0 0.0
  %1432 = vmatmul.mubr.f32.gmra.mrb[0].mxu0 %v1207
  %v1433 = vpop.f32.mrb[0].mxu0
  %v1434 = vadd.f32 %v70, %v1433
  %v1435 = vpop.f32.mrb[0].mxu0
  %1436 = vmatprep.mubr.f32.mxu0 0.0
  %1437 = vmatmul.mubr.f32.gmra.mrb[0].mxu0 %v1210
  %v1438 = vpop.f32.mrb[0].mxu0
  %v1439 = vadd.f32 %v70, %v1438
  %v1440 = vpop.f32.mrb[0].mxu0
  %1441 = vmatprep.mubr.f32.mxu0 0.0
  %1442 = vmatmul.mubr.f32.gmra.mrb[0].mxu0 %v1213
  %v1443 = vpop.f32.mrb[0].mxu0
  %v1444 = vadd.f32 %v70, %v1443
  %v1445 = vpop.f32.mrb[0].mxu0
  %1446 = vmatprep.mubr.f32.mxu0 0.0
  %1447 = vmatmul.mubr.f32.gmra.mrb[0].mxu0 %v1216
  %v1448 = vpop.f32.mrb[0].mxu0
  %v1449 = vadd.f32 %v70, %v1448
  %v1450 = vpop.f32.mrb[0].mxu0
  %1451 = vmatprep.mubr.f32.mxu0 0.0
  %1452 = vmatmul.mubr.f32.gmra.mrb[0].mxu0 %v1219
  %v1453 = vpop.f32.mrb[0].mxu0
  %v1454 = vadd.f32 %v70, %v1453
  %v1455 = vpop.f32.mrb[0].mxu0
  %1456 = vmatprep.mubr.f32.mxu0 0.0
  %1457 = vmatmul.mubr.f32.gmra.mrb[0].mxu0 %v1222
  %v1458 = vpop.f32.mrb[0].mxu0
  %v1459 = vadd.f32 %v70, %v1458
  %v1460 = vpop.f32.mrb[0].mxu0
  %1461 = vmatprep.mubr.f32.mxu0 0.0
  %1462 = vmatmul.mubr.f32.gmra.mrb[0].mxu0 %v1225
  %v1463 = vpop.f32.mrb[0].mxu0
  %v1464 = vadd.f32 %v70, %v1463
  %v1465 = vpop.f32.mrb[0].mxu0
  %1466 = vmatprep.mubr.f32.mxu0 0.0
  %1467 = vmatmul.mubr.f32.gmra.mrb[0].mxu0 %v1228
  %v1468 = vpop.f32.mrb[0].mxu0
  %v1469 = vadd.f32 %v70, %v1468
  %v1470 = vpop.f32.mrb[0].mxu0
  %1471 = vmatprep.mubr.f32.mxu0 0.0
  %1472 = vmatmul.mubr.f32.gmra.mrb[0].mxu0 %v1231
  %v1473 = vpop.f32.mrb[0].mxu0
  %v1474 = vadd.f32 %v70, %v1473
  %v1475 = vpop.f32.mrb[0].mxu0
  %1476 = vmatprep.mubr.f32.mxu0 0.0
  %1477 = vmatmul.mubr.f32.gmra.mrb[0].mxu0 %v1234
  %v1478 = vpop.f32.mrb[0].mxu0
  %v1479 = vadd.f32 %v70, %v1478
  %v1480 = vpop.f32.mrb[0].mxu0
  %1481 = vmatprep.mubr.f32.mxu0 0.0
  %1482 = vmatmul.mubr.f32.gmra.mrb[0].mxu0 %v1237
  %v1483 = vpop.f32.mrb[0].mxu0
  %v1484 = vadd.f32 %v70, %v1483
  %v1485 = vpop.f32.mrb[0].mxu0
  %1486 = vmatprep.mubr.f32.mxu0 0.0
  %1487 = vmatmul.mubr.f32.gmra.mrb[0].mxu0 %v1240
  %v1488 = vpop.f32.mrb[0].mxu0
  %v1489 = vadd.f32 %v70, %v1488
  %v1490 = vpop.f32.mrb[0].mxu0
  %1491 = vmatprep.mubr.f32.mxu0 0.0
  %1492 = vmatmul.mubr.f32.gmra.mrb[0].mxu0 %v1243
  %v1493 = vpop.f32.mrb[0].mxu0
  %v1494 = vadd.f32 %v70, %v1493
  %v1495 = vpop.f32.mrb[0].mxu0
  %1496 = vmatprep.mubr.f32.mxu0 0.0
  %1497 = vmatmul.mubr.f32.gmra.mrb[0].mxu0 %v1246
  %v1498 = vpop.f32.mrb[0].mxu0
  %v1499 = vadd.f32 %v70, %v1498
  %v1500 = vpop.f32.mrb[0].mxu0
  %1501 = vmatprep.mubr.f32.mxu0 0.0
  %1502 = vmatmul.mubr.f32.gmra.mrb[0].mxu0 %v1249
  %v1503 = vpop.f32.mrb[0].mxu0
  %v1504 = vadd.f32 %v70, %v1503
  %v1505 = vpop.f32.mrb[0].mxu0
  %1506 = vmatprep.mubr.f32.mxu0 0.0
  %1507 = vmatmul.mubr.f32.gmra.mrb[0].mxu0 %v1252
  %v1508 = vpop.f32.mrb[0].mxu0
  %v1509 = vadd.f32 %v70, %v1508
  %v1510 = vpop.f32.mrb[0].mxu0
  %1511 = vmatprep.mubr.f32.mxu0 0.0
  %1512 = vmatmul.mubr.f32.gmra.mrb[0].mxu0 %v1255
  %v1513 = vpop.f32.mrb[0].mxu0
  %v1514 = vadd.f32 %v70, %v1513
  %v1515 = vpop.f32.mrb[0].mxu0
  %1516 = vmatprep.mubr.f32.mxu0 0.0
  %1517 = vmatmul.mubr.f32.gmra.mrb[0].mxu0 %v1258
  %v1518 = vpop.f32.mrb[0].mxu0
  %v1519 = vadd.f32 %v70, %v1518
  %v1520 = vpop.f32.mrb[0].mxu0
  %1521 = vmatprep.mubr.f32.mxu0 0.0
  %1522 = vmatmul.mubr.f32.gmra.mrb[0].mxu0 %v1261
  %v1523 = vpop.f32.mrb[0].mxu0
  %v1524 = vadd.f32 %v70, %v1523
  %v1525 = vpop.f32.mrb[0].mxu0
  %1526 = vmatprep.mubr.f32.mxu0 0.0
  %1527 = vmatmul.mubr.f32.gmra.mrb[0].mxu0 %v1264
  %v1528 = vpop.f32.mrb[0].mxu0
  %v1529 = vadd.f32 %v70, %v1528
  %v1530 = vpop.f32.mrb[0].mxu0
  %1531 = vmatprep.mubr.f32.mxu0 0.0
  %1532 = vmatmul.mubr.f32.gmra.mrb[0].mxu0 %v1267
  %v1533 = vpop.f32.mrb[0].mxu0
  %v1534 = vadd.f32 %v70, %v1533
  %v1535 = vpop.f32.mrb[0].mxu0
  %1536 = vmatprep.mubr.f32.mxu0 0.0
  %1537 = vmatmul.mubr.f32.gmra.mrb[0].mxu0 %v1270
  %v1538 = vpop.f32.mrb[0].mxu0
  %v1539 = vadd.f32 %v70, %v1538
  %v1540 = vpop.f32.mrb[0].mxu0
  %1541 = vmatprep.mubr.f32.mxu0 0.0
  %1542 = vmatmul.mubr.f32.gmra.mrb[0].mxu0 %v1273
  %v1543 = vpop.f32.mrb[0].mxu0
  %v1544 = vadd.f32 %v70, %v1543
  %v1545 = vpop.f32.mrb[0].mxu0
  %1546 = vmatprep.mubr.f32.mxu0 0.0
  %1547 = vmatmul.mubr.f32.gmra.mrb[0].mxu0 %v1276
  %v1548 = vpop.f32.mrb[0].mxu0
  %v1549 = vadd.f32 %v70, %v1548
  %v1550 = vpop.f32.mrb[0].mxu0
  %1551 = vmatprep.mubr.f32.mxu0 0.0
  %1552 = vmatmul.mubr.f32.gmra.mrb[0].mxu0 %v1279
  %v1553 = vpop.f32.mrb[0].mxu0
  %v1554 = vadd.f32 %v70, %v1553
  %v1555 = vpop.f32.mrb[0].mxu0
  %1556 = vmatprep.mubr.f32.mxu0 0.0
  %1557 = vmatmul.mubr.f32.gmra.mrb[0].mxu0 %v1282
  %v1558 = vpop.f32.mrb[0].mxu0
  %v1559 = vadd.f32 %v70, %v1558
  %v1560 = vpop.f32.mrb[0].mxu0
  %1561 = vmatprep.mubr.f32.mxu0 0.0
  %1562 = vmatmul.mubr.f32.gmra.mrb[0].mxu0 %v1285
  %v1563 = vpop.f32.mrb[0].mxu0
  %v1564 = vadd.f32 %v70, %v1563
  %v1565 = vpop.f32.mrb[0].mxu0
  %1566 = vmatprep.mubr.f32.mxu0 0.0
  %1567 = vmatmul.mubr.f32.gmra.mrb[0].mxu0 %v1288
  %v1568 = vpop.f32.mrb[0].mxu0
  %v1569 = vadd.f32 %v70, %v1568
  %v1570 = vpop.f32.mrb[0].mxu0
  %1571 = vmatprep.mubr.f32.mxu0 0.0
  %1572 = vmatmul.mubr.f32.gmra.mrb[0].mxu0 %v1291
  %v1573 = vpop.f32.mrb[0].mxu0
  %v1574 = vadd.f32 %v70, %v1573
  %v1575 = vpop.f32.mrb[0].mxu0
  %1576 = vmatprep.mubr.f32.mxu0 0.0
  %1577 = vmatmul.mubr.f32.gmra.mrb[0].mxu0 %v1294
  %v1578 = vpop.f32.mrb[0].mxu0
  %v1579 = vadd.f32 %v70, %v1578
  %v1580 = vpop.f32.mrb[0].mxu0
  %1581 = vmatprep.mubr.f32.mxu0 0.0
  %1582 = vmatmul.mubr.f32.gmra.mrb[0].mxu0 %v1297
  %v1583 = vpop.f32.mrb[0].mxu0
  %v1584 = vadd.f32 %v70, %v1583
  %v1585 = vpop.f32.mrb[0].mxu0
  %1586 = vmatprep.mubr.f32.mxu0 0.0
  %1587 = vmatmul.mubr.f32.gmra.mrb[0].mxu0 %v1300
  %v1588 = vpop.f32.mrb[0].mxu0
  %v1589 = vadd.f32 %v70, %v1588
  %v1590 = vpop.f32.mrb[0].mxu0
  %1591 = vmatprep.mubr.f32.mxu0 0.0
  %1592 = vmatmul.mubr.f32.gmra.mrb[0].mxu0 %v1303
  %v1593 = vpop.f32.mrb[0].mxu0
  %v1594 = vadd.f32 %v70, %v1593
  %v1595 = vpop.f32.mrb[0].mxu0
  %1596 = vmatprep.mubr.f32.mxu0 0.0
  %1597 = vmatmul.mubr.f32.gmra.mrb[0].mxu0 %v1306
  %v1598 = vpop.f32.mrb[0].mxu0
  %v1599 = vadd.f32 %v70, %v1598
  %v1600 = vpop.f32.mrb[0].mxu0
  %1601 = vmatprep.mubr.f32.mxu0 0.0
  %1602 = vmatmul.mubr.f32.gmra.mrb[0].mxu0 %v1309
  %v1603 = vpop.f32.mrb[0].mxu0
  %v1604 = vadd.f32 %v70, %v1603
  %v1605 = vpop.f32.mrb[0].mxu0
  %1606 = vmatprep.mubr.f32.mxu0 0.0
  %1607 = vmatmul.mubr.f32.gmra.mrb[0].mxu0 %v1312
  %v1608 = vpop.f32.mrb[0].mxu0
  %v1609 = vadd.f32 %v70, %v1608
  %v1610 = vpop.f32.mrb[0].mxu0
  %1611 = vmatprep.mubr.f32.mxu0 0.0
  %1612 = vmatmul.mubr.f32.gmra.mrb[0].mxu0 %v1315
  %v1613 = vpop.f32.mrb[0].mxu0
  %v1614 = vadd.f32 %v70, %v1613
  %v1615 = vpop.f32.mrb[0].mxu0
  %1616 = vmatprep.mubr.f32.mxu0 0.0
  %1617 = vmatmul.mubr.f32.gmra.mrb[0].mxu0 %v1318
  %v1618 = vpop.f32.mrb[0].mxu0
  %v1619 = vadd.f32 %v70, %v1618
  %v1620 = vpop.f32.mrb[0].mxu0
  %1621 = vmatprep.mubr.f32.mxu0 0.0
  %1622 = vmatmul.mubr.f32.gmra.mrb[0].mxu0 %v1321
  %v1623 = vpop.f32.mrb[0].mxu0
  %v1624 = vadd.f32 %v70, %v1623
  %v1625 = vpop.f32.mrb[0].mxu0
  %1626 = vmatprep.mubr.f32.mxu0 0.0
  %1627 = vmatmul.mubr.f32.gmra.mrb[0].mxu0 %v1324
  %v1628 = vpop.f32.mrb[0].mxu0
  %v1629 = vadd.f32 %v70, %v1628
  %v1630 = vpop.f32.mrb[0].mxu0
  %1631 = vmatprep.mubr.f32.mxu0 0.0
  %1632 = vmatmul.mubr.f32.gmra.mrb[0].mxu0 %v1327
  %v1633 = vpop.f32.mrb[0].mxu0
  %v1634 = vadd.f32 %v70, %v1633
  %v1635 = vpop.f32.mrb[0].mxu0
  %1636 = vmatprep.mubr.f32.mxu0 0.0
  %1637 = vmatmul.mubr.f32.gmra.mrb[0].mxu0 %v1330
  %v1638 = vpop.f32.mrb[0].mxu0
  %v1639 = vadd.f32 %v70, %v1638
  %v1640 = vpop.f32.mrb[0].mxu0
  %1641 = vdwg.mxu0
  %v1642 = vmax.f32 %v1399, 0.0
  %v1643 = vmax.f32 %v1404, 0.0
  %v1644 = vmax.f32 %v1409, 0.0
  %v1645 = vmax.f32 %v1414, 0.0
  %v1646 = vmax.f32 %v1419, 0.0
  %v1647 = vmax.f32 %v1424, 0.0
  %v1648 = vmax.f32 %v1429, 0.0
  %v1649 = vmax.f32 %v1434, 0.0
  %v1650 = vmax.f32 %v1439, 0.0
  %v1651 = vmax.f32 %v1444, 0.0
  %v1652 = vmax.f32 %v1449, 0.0
  %v1653 = vmax.f32 %v1454, 0.0
  %v1654 = vmax.f32 %v1459, 0.0
  %v1655 = vmax.f32 %v1464, 0.0
  %v1656 = vmax.f32 %v1469, 0.0
  %v1657 = vmax.f32 %v1474, 0.0
  %v1658 = vmax.f32 %v1479, 0.0
  %v1659 = vmax.f32 %v1484, 0.0
  %v1660 = vmax.f32 %v1489, 0.0
  %v1661 = vmax.f32 %v1494, 0.0
  %v1662 = vmax.f32 %v1499, 0.0
  %v1663 = vmax.f32 %v1504, 0.0
  %v1664 = vmax.f32 %v1509, 0.0
  %v1665 = vmax.f32 %v1514, 0.0
  %v1666 = vmax.f32 %v1519, 0.0
  %v1667 = vmax.f32 %v1524, 0.0
  %v1668 = vmax.f32 %v1529, 0.0
  %v1669 = vmax.f32 %v1534, 0.0
  %v1670 = vmax.f32 %v1539, 0.0
  %v1671 = vmax.f32 %v1544, 0.0
  %v1672 = vmax.f32 %v1549, 0.0
  %v1673 = vmax.f32 %v1554, 0.0
  %v1674 = vmax.f32 %v1559, 0.0
  %v1675 = vmax.f32 %v1564, 0.0
  %v1676 = vmax.f32 %v1569, 0.0
  %v1677 = vmax.f32 %v1574, 0.0
  %v1678 = vmax.f32 %v1579, 0.0
  %v1679 = vmax.f32 %v1584, 0.0
  %v1680 = vmax.f32 %v1589, 0.0
  %v1681 = vmax.f32 %v1594, 0.0
  %v1682 = vmax.f32 %v1599, 0.0
  %v1683 = vmax.f32 %v1604, 0.0
  %v1684 = vmax.f32 %v1609, 0.0
  %v1685 = vmax.f32 %v1614, 0.0
  %v1686 = vmax.f32 %v1619, 0.0
  %v1687 = vmax.f32 %v1624, 0.0
  %v1688 = vmax.f32 %v1629, 0.0
  %v1689 = vmax.f32 %v1634, 0.0
  %v1690 = vmax.f32 %v1639, 0.0
  %s1691 = scalar_lea.vmem %s0, 1176
  %v1692 = vld [vmem:[%s1691] sm:$0xff]
  %v1693 = vld [vmem:[%s1691 + $0x8] sm:$0xff]
  %v1694 = vld [vmem:[%s1691 + $0x10] sm:$0xff]
  %v1695 = vld [vmem:[%s1691 + $0x18] sm:$0xff]
  %v1696 = vld [vmem:[%s1691 + $0x20] sm:$0xff]
  %v1697 = vld [vmem:[%s1691 + $0x28] sm:$0xff]
  %v1698 = vld [vmem:[%s1691 + $0x30] sm:$0xff]
  %v1699 = vld [vmem:[%s1691 + $0x38] sm:$0xff]
  %v1700 = vld [vmem:[%s1691 + $0x40] sm:$0xff]
  %v1701 = vld [vmem:[%s1691 + $0x48] sm:$0xff]
  %v1702 = vld [vmem:[%s1691 + $0x50] sm:$0xff]
  %v1703 = vld [vmem:[%s1691 + $0x58] sm:$0xff]
  %v1704 = vld [vmem:[%s1691 + $0x60] sm:$0xff]
  %v1705 = vld [vmem:[%s1691 + $0x68] sm:$0xff]
  %v1706 = vld [vmem:[%s1691 + $0x70] sm:$0xff]
  %v1707 = vld [vmem:[%s1691 + $0x78] sm:$0xff]
  %v1708 = vld [vmem:[%s1691 + $0x80] sm:$0xff]
  %v1709 = vld [vmem:[%s1691 + $0x88] sm:$0xff]
  %v1710 = vld [vmem:[%s1691 + $0x90] sm:$0xff]
  %v1711 = vld [vmem:[%s1691 + $0x98] sm:$0xff]
  %v1712 = vld [vmem:[%s1691 + $0xa0] sm:$0xff]
  %v1713 = vld [vmem:[%s1691 + $0xa8] sm:$0xff]
  %v1714 = vld [vmem:[%s1691 + $0xb0] sm:$0xff]
  %v1715 = vld [vmem:[%s1691 + $0xb8] sm:$0xff]
  %v1716 = vld [vmem:[%s1691 + $0xc0] sm:$0xff]
  %v1717 = vld [vmem:[%s1691 + $0xc8] sm:$0xff]
  %v1718 = vld [vmem:[%s1691 + $0xd0] sm:$0xff]
  %v1719 = vld [vmem:[%s1691 + $0xd8] sm:$0xff]
  %v1720 = vld [vmem:[%s1691 + $0xe0] sm:$0xff]
  %v1721 = vld [vmem:[%s1691 + $0xe8] sm:$0xff]
  %v1722 = vld [vmem:[%s1691 + $0xf0] sm:$0xff]
  %v1723 = vld [vmem:[%s1691 + $0xf8] sm:$0xff]
  %v1724 = vld [vmem:[%s1691 + $0x100] sm:$0xff]
  %v1725 = vld [vmem:[%s1691 + $0x108] sm:$0xff]
  %v1726 = vld [vmem:[%s1691 + $0x110] sm:$0xff]
  %v1727 = vld [vmem:[%s1691 + $0x118] sm:$0xff]
  %v1728 = vld [vmem:[%s1691 + $0x120] sm:$0xff]
  %v1729 = vld [vmem:[%s1691 + $0x128] sm:$0xff]
  %v1730 = vld [vmem:[%s1691 + $0x130] sm:$0xff]
  %v1731 = vld [vmem:[%s1691 + $0x138] sm:$0xff]
  %v1732 = vld [vmem:[%s1691 + $0x140] sm:$0xff]
  %v1733 = vld [vmem:[%s1691 + $0x148] sm:$0xff]
  %v1734 = vld [vmem:[%s1691 + $0x150] sm:$0xff]
  %v1735 = vld [vmem:[%s1691 + $0x158] sm:$0xff]
  %v1736 = vld [vmem:[%s1691 + $0x160] sm:$0xff]
  %v1737 = vld [vmem:[%s1691 + $0x168] sm:$0xff]
  %v1738 = vld [vmem:[%s1691 + $0x170] sm:$0xff]
  %v1739 = vld [vmem:[%s1691 + $0x178] sm:$0xff]
  %v1740 = vld [vmem:[%s1691 + $0x180] sm:$0xff]
  %v1742 = vsel %vm72, %v1692, 0
  %v1745 = vsel %vm72, %v1693, 0
  %v1748 = vsel %vm72, %v1694, 0
  %v1751 = vsel %vm72, %v1695, 0
  %v1754 = vsel %vm72, %v1696, 0
  %v1757 = vsel %vm72, %v1697, 0
  %v1760 = vsel %vm72, %v1698, 0
  %v1763 = vsel %vm72, %v1699, 0
  %v1766 = vsel %vm72, %v1700, 0
  %v1769 = vsel %vm72, %v1701, 0
  %v1772 = vsel %vm72, %v1702, 0
  %v1775 = vsel %vm72, %v1703, 0
  %v1778 = vsel %vm72, %v1704, 0
  %v1781 = vsel %vm72, %v1705, 0
  %v1784 = vsel %vm72, %v1706, 0
  %v1787 = vsel %vm72, %v1707, 0
  %v1790 = vsel %vm72, %v1708, 0
  %v1793 = vsel %vm72, %v1709, 0
  %v1796 = vsel %vm72, %v1710, 0
  %v1799 = vsel %vm72, %v1711, 0
  %v1802 = vsel %vm72, %v1712, 0
  %v1805 = vsel %vm72, %v1713, 0
  %v1808 = vsel %vm72, %v1714, 0
  %v1811 = vsel %vm72, %v1715, 0
  %v1814 = vsel %vm72, %v1716, 0
  %v1817 = vsel %vm72, %v1717, 0
  %v1820 = vsel %vm72, %v1718, 0
  %v1823 = vsel %vm72, %v1719, 0
  %v1826 = vsel %vm72, %v1720, 0
  %v1829 = vsel %vm72, %v1721, 0
  %v1832 = vsel %vm72, %v1722, 0
  %v1835 = vsel %vm72, %v1723, 0
  %v1838 = vsel %vm72, %v1724, 0
  %v1841 = vsel %vm72, %v1725, 0
  %v1844 = vsel %vm72, %v1726, 0
  %v1847 = vsel %vm72, %v1727, 0
  %v1850 = vsel %vm72, %v1728, 0
  %v1853 = vsel %vm72, %v1729, 0
  %v1856 = vsel %vm72, %v1730, 0
  %v1859 = vsel %vm72, %v1731, 0
  %v1862 = vsel %vm72, %v1732, 0
  %v1865 = vsel %vm72, %v1733, 0
  %v1868 = vsel %vm72, %v1734, 0
  %v1871 = vsel %vm72, %v1735, 0
  %v1874 = vsel %vm72, %v1736, 0
  %v1877 = vsel %vm72, %v1737, 0
  %v1880 = vsel %vm72, %v1738, 0
  %v1883 = vsel %vm72, %v1739, 0
  %v1886 = vsel %vm72, %v1740, 0
  %1888 = vmatprep.subr.mxu0 0.0
  %1889 = vmatpush1.msra.mxu0 %v14
  %1890 = vmatprep.subr.mxu0 0.0
  %1891 = vmatpush1.msra.mxu0 %v15
  %1892 = vmatprep.subr.mxu0 0.0
  %1893 = vmatpush1.msra.mxu0 0.0
  %1894 = vmatprep.subr.mxu0 0.0
  %1895 = vmatpush1.msra.mxu0 0.0
  %1896 = vmatprep.subr.mxu0 0.0
  %1897 = vmatpush1.msra.mxu0 0.0
  %1898 = vmatprep.subr.mxu0 0.0
  %1899 = vmatpush1.msra.mxu0 0.0
  %1900 = vmatprep.subr.mxu0 0.0
  %1901 = vmatpush1.msra.mxu0 0.0
  %1902 = vmatprep.subr.mxu0 0.0
  %1903 = vmatpush1.msra.mxu0 0.0
  %1904 = vmatprep.subr.mxu0 0.0
  %1905 = vmatpush1.msra.mxu0 0.0
  %1906 = vmatprep.subr.mxu0 0.0
  %1907 = vmatpush1.msra.mxu0 0.0
  %1908 = vmatprep.subr.mxu0 0.0
  %1909 = vmatpush1.msra.mxu0 0.0
  %1910 = vmatprep.subr.mxu0 0.0
  %1911 = vmatpush1.msra.mxu0 0.0
  %1912 = vmatprep.subr.mxu0 0.0
  %1913 = vmatpush1.msra.mxu0 0.0
  %1914 = vmatprep.subr.mxu0 0.0
  %1915 = vmatpush1.msra.mxu0 0.0
  %1916 = vmatprep.subr.mxu0 0.0
  %1917 = vmatpush1.msra.mxu0 0.0
  %1918 = vmatprep.subr.mxu0 0.0
  %1919 = vmatpush1.msra.mxu0 0.0
  %1920 = vmatprep.subr.mxu0 0.0
  %1921 = vmatpush1.msra.mxu0 0.0
  %1922 = vmatprep.subr.mxu0 0.0
  %1923 = vmatpush1.msra.mxu0 0.0
  %1924 = vmatprep.subr.mxu0 0.0
  %1925 = vmatpush1.msra.mxu0 0.0
  %1926 = vmatprep.subr.mxu0 0.0
  %1927 = vmatpush1.msra.mxu0 0.0
  %1928 = vmatprep.subr.mxu0 0.0
  %1929 = vmatpush1.msra.mxu0 0.0
  %1930 = vmatprep.subr.mxu0 0.0
  %1931 = vmatpush1.msra.mxu0 0.0
  %1932 = vmatprep.subr.mxu0 0.0
  %1933 = vmatpush1.msra.mxu0 0.0
  %1934 = vmatprep.subr.mxu0 0.0
  %1935 = vmatpush1.msra.mxu0 0.0
  %1936 = vmatprep.subr.mxu0 0.0
  %1937 = vmatpush1.msra.mxu0 0.0
  %1938 = vmatprep.subr.mxu0 0.0
  %1939 = vmatpush1.msra.mxu0 0.0
  %1940 = vmatprep.subr.mxu0 0.0
  %1941 = vmatpush1.msra.mxu0 0.0
  %1942 = vmatprep.subr.mxu0 0.0
  %1943 = vmatpush1.msra.mxu0 0.0
  %1944 = vmatprep.subr.mxu0 0.0
  %1945 = vmatpush1.msra.mxu0 0.0
  %1946 = vmatprep.subr.mxu0 0.0
  %1947 = vmatpush1.msra.mxu0 0.0
  %1948 = vmatprep.subr.mxu0 0.0
  %1949 = vmatpush1.msra.mxu0 0.0
  %1950 = vmatprep.subr.mxu0 0.0
  %1951 = vmatpush1.msra.mxu0 0.0
  %1952 = vmatprep.mubr.f32.mxu0 0.0
  %1953 = vmatmul.mubr.f32.gmra.mrb[0].mxu0 %v1742
  %v1954 = vpop.f32.mrb[0].mxu0
  %v1955 = vadd.f32 %v70, %v1954
  %v1956 = vpop.f32.mrb[0].mxu0
  %1957 = vmatprep.mubr.f32.mxu0 0.0
  %1958 = vmatmul.mubr.f32.gmra.mrb[0].mxu0 %v1745
  %v1959 = vpop.f32.mrb[0].mxu0
  %v1960 = vadd.f32 %v70, %v1959
  %v1961 = vpop.f32.mrb[0].mxu0
  %1962 = vmatprep.mubr.f32.mxu0 0.0
  %1963 = vmatmul.mubr.f32.gmra.mrb[0].mxu0 %v1748
  %v1964 = vpop.f32.mrb[0].mxu0
  %v1965 = vadd.f32 %v70, %v1964
  %v1966 = vpop.f32.mrb[0].mxu0
  %1967 = vmatprep.mubr.f32.mxu0 0.0
  %1968 = vmatmul.mubr.f32.gmra.mrb[0].mxu0 %v1751
  %v1969 = vpop.f32.mrb[0].mxu0
  %v1970 = vadd.f32 %v70, %v1969
  %v1971 = vpop.f32.mrb[0].mxu0
  %1972 = vmatprep.mubr.f32.mxu0 0.0
  %1973 = vmatmul.mubr.f32.gmra.mrb[0].mxu0 %v1754
  %v1974 = vpop.f32.mrb[0].mxu0
  %v1975 = vadd.f32 %v70, %v1974
  %v1976 = vpop.f32.mrb[0].mxu0
  %1977 = vmatprep.mubr.f32.mxu0 0.0
  %1978 = vmatmul.mubr.f32.gmra.mrb[0].mxu0 %v1757
  %v1979 = vpop.f32.mrb[0].mxu0
  %v1980 = vadd.f32 %v70, %v1979
  %v1981 = vpop.f32.mrb[0].mxu0
  %1982 = vmatprep.mubr.f32.mxu0 0.0
  %1983 = vmatmul.mubr.f32.gmra.mrb[0].mxu0 %v1760
  %v1984 = vpop.f32.mrb[0].mxu0
  %v1985 = vadd.f32 %v70, %v1984
  %v1986 = vpop.f32.mrb[0].mxu0
  %1987 = vmatprep.mubr.f32.mxu0 0.0
  %1988 = vmatmul.mubr.f32.gmra.mrb[0].mxu0 %v1763
  %v1989 = vpop.f32.mrb[0].mxu0
  %v1990 = vadd.f32 %v70, %v1989
  %v1991 = vpop.f32.mrb[0].mxu0
  %1992 = vmatprep.mubr.f32.mxu0 0.0
  %1993 = vmatmul.mubr.f32.gmra.mrb[0].mxu0 %v1766
  %v1994 = vpop.f32.mrb[0].mxu0
  %v1995 = vadd.f32 %v70, %v1994
  %v1996 = vpop.f32.mrb[0].mxu0
  %1997 = vmatprep.mubr.f32.mxu0 0.0
  %1998 = vmatmul.mubr.f32.gmra.mrb[0].mxu0 %v1769
  %v1999 = vpop.f32.mrb[0].mxu0
  %v2000 = vadd.f32 %v70, %v1999
  %v2001 = vpop.f32.mrb[0].mxu0
  %2002 = vmatprep.mubr.f32.mxu0 0.0
  %2003 = vmatmul.mubr.f32.gmra.mrb[0].mxu0 %v1772
  %v2004 = vpop.f32.mrb[0].mxu0
  %v2005 = vadd.f32 %v70, %v2004
  %v2006 = vpop.f32.mrb[0].mxu0
  %2007 = vmatprep.mubr.f32.mxu0 0.0
  %2008 = vmatmul.mubr.f32.gmra.mrb[0].mxu0 %v1775
  %v2009 = vpop.f32.mrb[0].mxu0
  %v2010 = vadd.f32 %v70, %v2009
  %v2011 = vpop.f32.mrb[0].mxu0
  %2012 = vmatprep.mubr.f32.mxu0 0.0
  %2013 = vmatmul.mubr.f32.gmra.mrb[0].mxu0 %v1778
  %v2014 = vpop.f32.mrb[0].mxu0
  %v2015 = vadd.f32 %v70, %v2014
  %v2016 = vpop.f32.mrb[0].mxu0
  %2017 = vmatprep.mubr.f32.mxu0 0.0
  %2018 = vmatmul.mubr.f32.gmra.mrb[0].mxu0 %v1781
  %v2019 = vpop.f32.mrb[0].mxu0
  %v2020 = vadd.f32 %v70, %v2019
  %v2021 = vpop.f32.mrb[0].mxu0
  %2022 = vmatprep.mubr.f32.mxu0 0.0
  %2023 = vmatmul.mubr.f32.gmra.mrb[0].mxu0 %v1784
  %v2024 = vpop.f32.mrb[0].mxu0
  %v2025 = vadd.f32 %v70, %v2024
  %v2026 = vpop.f32.mrb[0].mxu0
  %2027 = vmatprep.mubr.f32.mxu0 0.0
  %2028 = vmatmul.mubr.f32.gmra.mrb[0].mxu0 %v1787
  %v2029 = vpop.f32.mrb[0].mxu0
  %v2030 = vadd.f32 %v70, %v2029
  %v2031 = vpop.f32.mrb[0].mxu0
  %2032 = vmatprep.mubr.f32.mxu0 0.0
  %2033 = vmatmul.mubr.f32.gmra.mrb[0].mxu0 %v1790
  %v2034 = vpop.f32.mrb[0].mxu0
  %v2035 = vadd.f32 %v70, %v2034
  %v2036 = vpop.f32.mrb[0].mxu0
  %2037 = vmatprep.mubr.f32.mxu0 0.0
  %2038 = vmatmul.mubr.f32.gmra.mrb[0].mxu0 %v1793
  %v2039 = vpop.f32.mrb[0].mxu0
  %v2040 = vadd.f32 %v70, %v2039
  %v2041 = vpop.f32.mrb[0].mxu0
  %2042 = vmatprep.mubr.f32.mxu0 0.0
  %2043 = vmatmul.mubr.f32.gmra.mrb[0].mxu0 %v1796
  %v2044 = vpop.f32.mrb[0].mxu0
  %v2045 = vadd.f32 %v70, %v2044
  %v2046 = vpop.f32.mrb[0].mxu0
  %2047 = vmatprep.mubr.f32.mxu0 0.0
  %2048 = vmatmul.mubr.f32.gmra.mrb[0].mxu0 %v1799
  %v2049 = vpop.f32.mrb[0].mxu0
  %v2050 = vadd.f32 %v70, %v2049
  %v2051 = vpop.f32.mrb[0].mxu0
  %2052 = vmatprep.mubr.f32.mxu0 0.0
  %2053 = vmatmul.mubr.f32.gmra.mrb[0].mxu0 %v1802
  %v2054 = vpop.f32.mrb[0].mxu0
  %v2055 = vadd.f32 %v70, %v2054
  %v2056 = vpop.f32.mrb[0].mxu0
  %2057 = vmatprep.mubr.f32.mxu0 0.0
  %2058 = vmatmul.mubr.f32.gmra.mrb[0].mxu0 %v1805
  %v2059 = vpop.f32.mrb[0].mxu0
  %v2060 = vadd.f32 %v70, %v2059
  %v2061 = vpop.f32.mrb[0].mxu0
  %2062 = vmatprep.mubr.f32.mxu0 0.0
  %2063 = vmatmul.mubr.f32.gmra.mrb[0].mxu0 %v1808
  %v2064 = vpop.f32.mrb[0].mxu0
  %v2065 = vadd.f32 %v70, %v2064
  %v2066 = vpop.f32.mrb[0].mxu0
  %2067 = vmatprep.mubr.f32.mxu0 0.0
  %2068 = vmatmul.mubr.f32.gmra.mrb[0].mxu0 %v1811
  %v2069 = vpop.f32.mrb[0].mxu0
  %v2070 = vadd.f32 %v70, %v2069
  %v2071 = vpop.f32.mrb[0].mxu0
  %2072 = vmatprep.mubr.f32.mxu0 0.0
  %2073 = vmatmul.mubr.f32.gmra.mrb[0].mxu0 %v1814
  %v2074 = vpop.f32.mrb[0].mxu0
  %v2075 = vadd.f32 %v70, %v2074
  %v2076 = vpop.f32.mrb[0].mxu0
  %2077 = vmatprep.mubr.f32.mxu0 0.0
  %2078 = vmatmul.mubr.f32.gmra.mrb[0].mxu0 %v1817
  %v2079 = vpop.f32.mrb[0].mxu0
  %v2080 = vadd.f32 %v70, %v2079
  %v2081 = vpop.f32.mrb[0].mxu0
  %2082 = vmatprep.mubr.f32.mxu0 0.0
  %2083 = vmatmul.mubr.f32.gmra.mrb[0].mxu0 %v1820
  %v2084 = vpop.f32.mrb[0].mxu0
  %v2085 = vadd.f32 %v70, %v2084
  %v2086 = vpop.f32.mrb[0].mxu0
  %2087 = vmatprep.mubr.f32.mxu0 0.0
  %2088 = vmatmul.mubr.f32.gmra.mrb[0].mxu0 %v1823
  %v2089 = vpop.f32.mrb[0].mxu0
  %v2090 = vadd.f32 %v70, %v2089
  %v2091 = vpop.f32.mrb[0].mxu0
  %2092 = vmatprep.mubr.f32.mxu0 0.0
  %2093 = vmatmul.mubr.f32.gmra.mrb[0].mxu0 %v1826
  %v2094 = vpop.f32.mrb[0].mxu0
  %v2095 = vadd.f32 %v70, %v2094
  %v2096 = vpop.f32.mrb[0].mxu0
  %2097 = vmatprep.mubr.f32.mxu0 0.0
  %2098 = vmatmul.mubr.f32.gmra.mrb[0].mxu0 %v1829
  %v2099 = vpop.f32.mrb[0].mxu0
  %v2100 = vadd.f32 %v70, %v2099
  %v2101 = vpop.f32.mrb[0].mxu0
  %2102 = vmatprep.mubr.f32.mxu0 0.0
  %2103 = vmatmul.mubr.f32.gmra.mrb[0].mxu0 %v1832
  %v2104 = vpop.f32.mrb[0].mxu0
  %v2105 = vadd.f32 %v70, %v2104
  %v2106 = vpop.f32.mrb[0].mxu0
  %2107 = vmatprep.mubr.f32.mxu0 0.0
  %2108 = vmatmul.mubr.f32.gmra.mrb[0].mxu0 %v1835
  %v2109 = vpop.f32.mrb[0].mxu0
  %v2110 = vadd.f32 %v70, %v2109
  %v2111 = vpop.f32.mrb[0].mxu0
  %2112 = vmatprep.mubr.f32.mxu0 0.0
  %2113 = vmatmul.mubr.f32.gmra.mrb[0].mxu0 %v1838
  %v2114 = vpop.f32.mrb[0].mxu0
  %v2115 = vadd.f32 %v70, %v2114
  %v2116 = vpop.f32.mrb[0].mxu0
  %2117 = vmatprep.mubr.f32.mxu0 0.0
  %2118 = vmatmul.mubr.f32.gmra.mrb[0].mxu0 %v1841
  %v2119 = vpop.f32.mrb[0].mxu0
  %v2120 = vadd.f32 %v70, %v2119
  %v2121 = vpop.f32.mrb[0].mxu0
  %2122 = vmatprep.mubr.f32.mxu0 0.0
  %2123 = vmatmul.mubr.f32.gmra.mrb[0].mxu0 %v1844
  %v2124 = vpop.f32.mrb[0].mxu0
  %v2125 = vadd.f32 %v70, %v2124
  %v2126 = vpop.f32.mrb[0].mxu0
  %2127 = vmatprep.mubr.f32.mxu0 0.0
  %2128 = vmatmul.mubr.f32.gmra.mrb[0].mxu0 %v1847
  %v2129 = vpop.f32.mrb[0].mxu0
  %v2130 = vadd.f32 %v70, %v2129
  %v2131 = vpop.f32.mrb[0].mxu0
  %2132 = vmatprep.mubr.f32.mxu0 0.0
  %2133 = vmatmul.mubr.f32.gmra.mrb[0].mxu0 %v1850
  %v2134 = vpop.f32.mrb[0].mxu0
  %v2135 = vadd.f32 %v70, %v2134
  %v2136 = vpop.f32.mrb[0].mxu0
  %2137 = vmatprep.mubr.f32.mxu0 0.0
  %2138 = vmatmul.mubr.f32.gmra.mrb[0].mxu0 %v1853
  %v2139 = vpop.f32.mrb[0].mxu0
  %v2140 = vadd.f32 %v70, %v2139
  %v2141 = vpop.f32.mrb[0].mxu0
  %2142 = vmatprep.mubr.f32.mxu0 0.0
  %2143 = vmatmul.mubr.f32.gmra.mrb[0].mxu0 %v1856
  %v2144 = vpop.f32.mrb[0].mxu0
  %v2145 = vadd.f32 %v70, %v2144
  %v2146 = vpop.f32.mrb[0].mxu0
  %2147 = vmatprep.mubr.f32.mxu0 0.0
  %2148 = vmatmul.mubr.f32.gmra.mrb[0].mxu0 %v1859
  %v2149 = vpop.f32.mrb[0].mxu0
  %v2150 = vadd.f32 %v70, %v2149
  %v2151 = vpop.f32.mrb[0].mxu0
  %2152 = vmatprep.mubr.f32.mxu0 0.0
  %2153 = vmatmul.mubr.f32.gmra.mrb[0].mxu0 %v1862
  %v2154 = vpop.f32.mrb[0].mxu0
  %v2155 = vadd.f32 %v70, %v2154
  %v2156 = vpop.f32.mrb[0].mxu0
  %2157 = vmatprep.mubr.f32.mxu0 0.0
  %2158 = vmatmul.mubr.f32.gmra.mrb[0].mxu0 %v1865
  %v2159 = vpop.f32.mrb[0].mxu0
  %v2160 = vadd.f32 %v70, %v2159
  %v2161 = vpop.f32.mrb[0].mxu0
  %2162 = vmatprep.mubr.f32.mxu0 0.0
  %2163 = vmatmul.mubr.f32.gmra.mrb[0].mxu0 %v1868
  %v2164 = vpop.f32.mrb[0].mxu0
  %v2165 = vadd.f32 %v70, %v2164
  %v2166 = vpop.f32.mrb[0].mxu0
  %2167 = vmatprep.mubr.f32.mxu0 0.0
  %2168 = vmatmul.mubr.f32.gmra.mrb[0].mxu0 %v1871
  %v2169 = vpop.f32.mrb[0].mxu0
  %v2170 = vadd.f32 %v70, %v2169
  %v2171 = vpop.f32.mrb[0].mxu0
  %2172 = vmatprep.mubr.f32.mxu0 0.0
  %2173 = vmatmul.mubr.f32.gmra.mrb[0].mxu0 %v1874
  %v2174 = vpop.f32.mrb[0].mxu0
  %v2175 = vadd.f32 %v70, %v2174
  %v2176 = vpop.f32.mrb[0].mxu0
  %2177 = vmatprep.mubr.f32.mxu0 0.0
  %2178 = vmatmul.mubr.f32.gmra.mrb[0].mxu0 %v1877
  %v2179 = vpop.f32.mrb[0].mxu0
  %v2180 = vadd.f32 %v70, %v2179
  %v2181 = vpop.f32.mrb[0].mxu0
  %2182 = vmatprep.mubr.f32.mxu0 0.0
  %2183 = vmatmul.mubr.f32.gmra.mrb[0].mxu0 %v1880
  %v2184 = vpop.f32.mrb[0].mxu0
  %v2185 = vadd.f32 %v70, %v2184
  %v2186 = vpop.f32.mrb[0].mxu0
  %2187 = vmatprep.mubr.f32.mxu0 0.0
  %2188 = vmatmul.mubr.f32.gmra.mrb[0].mxu0 %v1883
  %v2189 = vpop.f32.mrb[0].mxu0
  %v2190 = vadd.f32 %v70, %v2189
  %v2191 = vpop.f32.mrb[0].mxu0
  %2192 = vmatprep.mubr.f32.mxu0 0.0
  %2193 = vmatmul.mubr.f32.gmra.mrb[0].mxu0 %v1886
  %v2194 = vpop.f32.mrb[0].mxu0
  %v2195 = vadd.f32 %v70, %v2194
  %v2196 = vpop.f32.mrb[0].mxu0
  %2197 = vdwg.mxu0
  %v2198 = vmax.f32 %v1955, 0.0
  %v2199 = vmax.f32 %v1960, 0.0
  %v2200 = vmax.f32 %v1965, 0.0
  %v2201 = vmax.f32 %v1970, 0.0
  %v2202 = vmax.f32 %v1975, 0.0
  %v2203 = vmax.f32 %v1980, 0.0
  %v2204 = vmax.f32 %v1985, 0.0
  %v2205 = vmax.f32 %v1990, 0.0
  %v2206 = vmax.f32 %v1995, 0.0
  %v2207 = vmax.f32 %v2000, 0.0
  %v2208 = vmax.f32 %v2005, 0.0
  %v2209 = vmax.f32 %v2010, 0.0
  %v2210 = vmax.f32 %v2015, 0.0
  %v2211 = vmax.f32 %v2020, 0.0
  %v2212 = vmax.f32 %v2025, 0.0
  %v2213 = vmax.f32 %v2030, 0.0
  %v2214 = vmax.f32 %v2035, 0.0
  %v2215 = vmax.f32 %v2040, 0.0
  %v2216 = vmax.f32 %v2045, 0.0
  %v2217 = vmax.f32 %v2050, 0.0
  %v2218 = vmax.f32 %v2055, 0.0
  %v2219 = vmax.f32 %v2060, 0.0
  %v2220 = vmax.f32 %v2065, 0.0
  %v2221 = vmax.f32 %v2070, 0.0
  %v2222 = vmax.f32 %v2075, 0.0
  %v2223 = vmax.f32 %v2080, 0.0
  %v2224 = vmax.f32 %v2085, 0.0
  %v2225 = vmax.f32 %v2090, 0.0
  %v2226 = vmax.f32 %v2095, 0.0
  %v2227 = vmax.f32 %v2100, 0.0
  %v2228 = vmax.f32 %v2105, 0.0
  %v2229 = vmax.f32 %v2110, 0.0
  %v2230 = vmax.f32 %v2115, 0.0
  %v2231 = vmax.f32 %v2120, 0.0
  %v2232 = vmax.f32 %v2125, 0.0
  %v2233 = vmax.f32 %v2130, 0.0
  %v2234 = vmax.f32 %v2135, 0.0
  %v2235 = vmax.f32 %v2140, 0.0
  %v2236 = vmax.f32 %v2145, 0.0
  %v2237 = vmax.f32 %v2150, 0.0
  %v2238 = vmax.f32 %v2155, 0.0
  %v2239 = vmax.f32 %v2160, 0.0
  %v2240 = vmax.f32 %v2165, 0.0
  %v2241 = vmax.f32 %v2170, 0.0
  %v2242 = vmax.f32 %v2175, 0.0
  %v2243 = vmax.f32 %v2180, 0.0
  %v2244 = vmax.f32 %v2185, 0.0
  %v2245 = vmax.f32 %v2190, 0.0
  %v2246 = vmax.f32 %v2195, 0.0
  %v2247 = vmax.f32 %v530, %v1086
  %v2248 = vmax.f32 %v531, %v1087
  %v2249 = vmax.f32 %v532, %v1088
  %v2250 = vmax.f32 %v533, %v1089
  %v2251 = vmax.f32 %v534, %v1090
  %v2252 = vmax.f32 %v535, %v1091
  %v2253 = vmax.f32 %v536, %v1092
  %v2254 = vmax.f32 %v537, %v1093
  %v2255 = vmax.f32 %v538, %v1094
  %v2256 = vmax.f32 %v539, %v1095
  %v2257 = vmax.f32 %v540, %v1096
  %v2258 = vmax.f32 %v541, %v1097
  %v2259 = vmax.f32 %v542, %v1098
  %v2260 = vmax.f32 %v543, %v1099
  %v2261 = vmax.f32 %v544, %v1100
  %v2262 = vmax.f32 %v545, %v1101
  %v2263 = vmax.f32 %v546, %v1102
  %v2264 = vmax.f32 %v547, %v1103
  %v2265 = vmax.f32 %v548, %v1104
  %v2266 = vmax.f32 %v549, %v1105
  %v2267 = vmax.f32 %v550, %v1106
  %v2268 = vmax.f32 %v551, %v1107
  %v2269 = vmax.f32 %v552, %v1108
  %v2270 = vmax.f32 %v553, %v1109
  %v2271 = vmax.f32 %v554, %v1110
  %v2272 = vmax.f32 %v555, %v1111
  %v2273 = vmax.f32 %v556, %v1112
  %v2274 = vmax.f32 %v557, %v1113
  %v2275 = vmax.f32 %v558, %v1114
  %v2276 = vmax.f32 %v559, %v1115
  %v2277 = vmax.f32 %v560, %v1116
  %v2278 = vmax.f32 %v561, %v1117
  %v2279 = vmax.f32 %v562, %v1118
  %v2280 = vmax.f32 %v563, %v1119
  %v2281 = vmax.f32 %v564, %v1120
  %v2282 = vmax.f32 %v565, %v1121
  %v2283 = vmax.f32 %v566, %v1122
  %v2284 = vmax.f32 %v567, %v1123
  %v2285 = vmax.f32 %v568, %v1124
  %v2286 = vmax.f32 %v569, %v1125
  %v2287 = vmax.f32 %v570, %v1126
  %v2288 = vmax.f32 %v571, %v1127
  %v2289 = vmax.f32 %v572, %v1128
  %v2290 = vmax.f32 %v573, %v1129
  %v2291 = vmax.f32 %v574, %v1130
  %v2292 = vmax.f32 %v575, %v1131
  %v2293 = vmax.f32 %v576, %v1132
  %v2294 = vmax.f32 %v577, %v1133
  %v2295 = vmax.f32 %v578, %v1134
  %v2296 = vmax.f32 %v1642, %v2198
  %v2297 = vmax.f32 %v1643, %v2199
  %v2298 = vmax.f32 %v1644, %v2200
  %v2299 = vmax.f32 %v1645, %v2201
  %v2300 = vmax.f32 %v1646, %v2202
  %v2301 = vmax.f32 %v1647, %v2203
  %v2302 = vmax.f32 %v1648, %v2204
  %v2303 = vmax.f32 %v1649, %v2205
  %v2304 = vmax.f32 %v1650, %v2206
  %v2305 = vmax.f32 %v1651, %v2207
  %v2306 = vmax.f32 %v1652, %v2208
  %v2307 = vmax.f32 %v1653, %v2209
  %v2308 = vmax.f32 %v1654, %v2210
  %v2309 = vmax.f32 %v1655, %v2211
  %v2310 = vmax.f32 %v1656, %v2212
  %v2311 = vmax.f32 %v1657, %v2213
  %v2312 = vmax.f32 %v1658, %v2214
  %v2313 = vmax.f32 %v1659, %v2215
  %v2314 = vmax.f32 %v1660, %v2216
  %v2315 = vmax.f32 %v1661, %v2217
  %v2316 = vmax.f32 %v1662, %v2218
  %v2317 = vmax.f32 %v1663, %v2219
  %v2318 = vmax.f32 %v1664, %v2220
  %v2319 = vmax.f32 %v1665, %v2221
  %v2320 = vmax.f32 %v1666, %v2222
  %v2321 = vmax.f32 %v1667, %v2223
  %v2322 = vmax.f32 %v1668, %v2224
  %v2323 = vmax.f32 %v1669, %v2225
  %v2324 = vmax.f32 %v1670, %v2226
  %v2325 = vmax.f32 %v1671, %v2227
  %v2326 = vmax.f32 %v1672, %v2228
  %v2327 = vmax.f32 %v1673, %v2229
  %v2328 = vmax.f32 %v1674, %v2230
  %v2329 = vmax.f32 %v1675, %v2231
  %v2330 = vmax.f32 %v1676, %v2232
  %v2331 = vmax.f32 %v1677, %v2233
  %v2332 = vmax.f32 %v1678, %v2234
  %v2333 = vmax.f32 %v1679, %v2235
  %v2334 = vmax.f32 %v1680, %v2236
  %v2335 = vmax.f32 %v1681, %v2237
  %v2336 = vmax.f32 %v1682, %v2238
  %v2337 = vmax.f32 %v1683, %v2239
  %v2338 = vmax.f32 %v1684, %v2240
  %v2339 = vmax.f32 %v1685, %v2241
  %v2340 = vmax.f32 %v1686, %v2242
  %v2341 = vmax.f32 %v1687, %v2243
  %v2342 = vmax.f32 %v1688, %v2244
  %v2343 = vmax.f32 %v1689, %v2245
  %v2344 = vmax.f32 %v1690, %v2246
  %v2345 = vmax.f32 %v2247, %v2296
  %v2346 = vmax.f32 %v2248, %v2297
  %v2347 = vmax.f32 %v2249, %v2298
  %v2348 = vmax.f32 %v2250, %v2299
  %v2349 = vmax.f32 %v2251, %v2300
  %v2350 = vmax.f32 %v2252, %v2301
  %v2351 = vmax.f32 %v2253, %v2302
  %v2352 = vmax.f32 %v2254, %v2303
  %v2353 = vmax.f32 %v2255, %v2304
  %v2354 = vmax.f32 %v2256, %v2305
  %v2355 = vmax.f32 %v2257, %v2306
  %v2356 = vmax.f32 %v2258, %v2307
  %v2357 = vmax.f32 %v2259, %v2308
  %v2358 = vmax.f32 %v2260, %v2309
  %v2359 = vmax.f32 %v2261, %v2310
  %v2360 = vmax.f32 %v2262, %v2311
  %v2361 = vmax.f32 %v2263, %v2312
  %v2362 = vmax.f32 %v2264, %v2313
  %v2363 = vmax.f32 %v2265, %v2314
  %v2364 = vmax.f32 %v2266, %v2315
  %v2365 = vmax.f32 %v2267, %v2316
  %v2366 = vmax.f32 %v2268, %v2317
  %v2367 = vmax.f32 %v2269, %v2318
  %v2368 = vmax.f32 %v2270, %v2319
  %v2369 = vmax.f32 %v2271, %v2320
  %v2370 = vmax.f32 %v2272, %v2321
  %v2371 = vmax.f32 %v2273, %v2322
  %v2372 = vmax.f32 %v2274, %v2323
  %v2373 = vmax.f32 %v2275, %v2324
  %v2374 = vmax.f32 %v2276, %v2325
  %v2375 = vmax.f32 %v2277, %v2326
  %v2376 = vmax.f32 %v2278, %v2327
  %v2377 = vmax.f32 %v2279, %v2328
  %v2378 = vmax.f32 %v2280, %v2329
  %v2379 = vmax.f32 %v2281, %v2330
  %v2380 = vmax.f32 %v2282, %v2331
  %v2381 = vmax.f32 %v2283, %v2332
  %v2382 = vmax.f32 %v2284, %v2333
  %v2383 = vmax.f32 %v2285, %v2334
  %v2384 = vmax.f32 %v2286, %v2335
  %v2385 = vmax.f32 %v2287, %v2336
  %v2386 = vmax.f32 %v2288, %v2337
  %v2387 = vmax.f32 %v2289, %v2338
  %v2388 = vmax.f32 %v2290, %v2339
  %v2389 = vmax.f32 %v2291, %v2340
  %v2390 = vmax.f32 %v2292, %v2341
  %v2391 = vmax.f32 %v2293, %v2342
  %v2392 = vmax.f32 %v2294, %v2343
  %v2393 = vmax.f32 %v2295, %v2344
  %2394 = vst [vmem:[%s3] sm:$0xff] %v2345
  %2395 = vst [vmem:[%s3 + $0x8] sm:$0xff] %v2346
  %2396 = vst [vmem:[%s3 + $0x10] sm:$0xff] %v2347
  %2397 = vst [vmem:[%s3 + $0x18] sm:$0xff] %v2348
  %2398 = vst [vmem:[%s3 + $0x20] sm:$0xff] %v2349
  %2399 = vst [vmem:[%s3 + $0x28] sm:$0xff] %v2350
  %2400 = vst [vmem:[%s3 + $0x30] sm:$0xff] %v2351
  %2401 = vst [vmem:[%s3 + $0x38] sm:$0xff] %v2352
  %2402 = vst [vmem:[%s3 + $0x40] sm:$0xff] %v2353
  %2403 = vst [vmem:[%s3 + $0x48] sm:$0xff] %v2354
  %2404 = vst [vmem:[%s3 + $0x50] sm:$0xff] %v2355
  %2405 = vst [vmem:[%s3 + $0x58] sm:$0xff] %v2356
  %2406 = vst [vmem:[%s3 + $0x60] sm:$0xff] %v2357
  %2407 = vst [vmem:[%s3 + $0x68] sm:$0xff] %v2358
  %2408 = vst [vmem:[%s3 + $0x70] sm:$0xff] %v2359
  %2409 = vst [vmem:[%s3 + $0x78] sm:$0xff] %v2360
  %2410 = vst [vmem:[%s3 + $0x80] sm:$0xff] %v2361
  %2411 = vst [vmem:[%s3 + $0x88] sm:$0xff] %v2362
  %2412 = vst [vmem:[%s3 + $0x90] sm:$0xff] %v2363
  %2413 = vst [vmem:[%s3 + $0x98] sm:$0xff] %v2364
  %2414 = vst [vmem:[%s3 + $0xa0] sm:$0xff] %v2365
  %2415 = vst [vmem:[%s3 + $0xa8] sm:$0xff] %v2366
  %2416 = vst [vmem:[%s3 + $0xb0] sm:$0xff] %v2367
  %2417 = vst [vmem:[%s3 + $0xb8] sm:$0xff] %v2368
  %2418 = vst [vmem:[%s3 + $0xc0] sm:$0xff] %v2369
  %2419 = vst [vmem:[%s3 + $0xc8] sm:$0xff] %v2370
  %2420 = vst [vmem:[%s3 + $0xd0] sm:$0xff] %v2371
  %2421 = vst [vmem:[%s3 + $0xd8] sm:$0xff] %v2372
  %2422 = vst [vmem:[%s3 + $0xe0] sm:$0xff] %v2373
  %2423 = vst [vmem:[%s3 + $0xe8] sm:$0xff] %v2374
  %2424 = vst [vmem:[%s3 + $0xf0] sm:$0xff] %v2375
  %2425 = vst [vmem:[%s3 + $0xf8] sm:$0xff] %v2376
  %2426 = vst [vmem:[%s3 + $0x100] sm:$0xff] %v2377
  %2427 = vst [vmem:[%s3 + $0x108] sm:$0xff] %v2378
  %2428 = vst [vmem:[%s3 + $0x110] sm:$0xff] %v2379
  %2429 = vst [vmem:[%s3 + $0x118] sm:$0xff] %v2380
  %2430 = vst [vmem:[%s3 + $0x120] sm:$0xff] %v2381
  %2431 = vst [vmem:[%s3 + $0x128] sm:$0xff] %v2382
  %2432 = vst [vmem:[%s3 + $0x130] sm:$0xff] %v2383
  %2433 = vst [vmem:[%s3 + $0x138] sm:$0xff] %v2384
  %2434 = vst [vmem:[%s3 + $0x140] sm:$0xff] %v2385
  %2435 = vst [vmem:[%s3 + $0x148] sm:$0xff] %v2386
  %2436 = vst [vmem:[%s3 + $0x150] sm:$0xff] %v2387
  %2437 = vst [vmem:[%s3 + $0x158] sm:$0xff] %v2388
  %2438 = vst [vmem:[%s3 + $0x160] sm:$0xff] %v2389
  %2439 = vst [vmem:[%s3 + $0x168] sm:$0xff] %v2390
  %2440 = vst [vmem:[%s3 + $0x170] sm:$0xff] %v2391
  %2441 = vst [vmem:[%s3 + $0x178] sm:$0xff] %v2392
  %2442 = vst [vmem:[%s3 + $0x180] sm:$0xff] %v2393
  // Predicated region
  $region14: #{cnn_forward.3} parent=0 // pred_check
    _
  $region15: #{cnn_forward.3} parent=0 // pred_check_branch
    %2444 = sbr.rel (0) target = $region17
  $region16: #{cnn_forward.3} parent=0 // pred_region
    _
  $region17: #{cnn_forward.3} parent=0 // pred_fallthru
    _
  // Predicated region
  $region18: #{cnn_forward.3} parent=0 // pred_check
    _
  $region19: #{cnn_forward.3} parent=0 // pred_check_branch
    %2446 = sbr.rel (0) target = $region21
  $region20: #{cnn_forward.3} parent=0 // pred_region
    _
  $region21: #{cnn_forward.3} parent=0 // pred_fallthru
    _

// kernel: cnn_forward.4
$region0: #{cnn_forward.4}
  #allocation0 [shape = 'u32[]', space=smem, size = 0x4, offset = 0x4, fixed_abs, tag = 'smem constant byte address 0x4 - core index']
  #allocation1 [shape = 'u32[144,128]{1,0:T(1,128)}', space=vmem, size = 0x12000, scoped, tag = 'internal scratch']
  %s0 = inlined_call_operand.vmem [shape: f32[4,104,128], index: 0, kind: input, shape index: {}]
  %s1 = inlined_call_operand.vmem [shape: f32[128,128], index: 1, kind: input, shape index: {}]
  %s2 = inlined_call_operand.vmem [shape: f32[1,128], index: 2, kind: input, shape index: {}]
  %s3 = inlined_call_operand.vmem [shape: f32[104,128], index: 3, kind: output, shape index: {}]
  %s4 = sld [smem:[#allocation0]]
  $region22: #{cnn_forward.4} parent=0
    _
  %s6 = ssub.s32 1, %s4
  %s7 = scalar_select 0, %s6, %s4
  // Predicated region
  $region2: #{cnn_forward.4} parent=0 // pred_check
    _
  $region3: #{cnn_forward.4} parent=0 // pred_check_branch
    %9 = sbr.rel (0) target = $region5
  $region4: #{cnn_forward.4} parent=0 // pred_region
    _
  $region5: #{cnn_forward.4} parent=0 // pred_fallthru
    _
  // Predicated region
  $region6: #{cnn_forward.4} parent=0 // pred_check
    _
  $region7: #{cnn_forward.4} parent=0 // pred_check_branch
    %11 = sbr.rel (0) target = $region9
  $region8: #{cnn_forward.4} parent=0 // pred_region
    _
  $region9: #{cnn_forward.4} parent=0 // pred_fallthru
    _
  // Predicated region
  $region10: #{cnn_forward.4} parent=0 // pred_check
    _
  $region11: #{cnn_forward.4} parent=0 // pred_check_branch
    %13 = sbr.rel (0) target = $region13
  $region12: #{cnn_forward.4} parent=0 // pred_region
    _
  $region13: #{cnn_forward.4} parent=0 // pred_fallthru
    _
  %v14 = vld [vmem:[%s1] sm:$0xff]
  %v15 = vld [vmem:[%s1 + $0x8] sm:$0xff]
  %v16 = vld [vmem:[%s1 + $0x10] sm:$0xff]
  %v17 = vld [vmem:[%s1 + $0x18] sm:$0xff]
  %v18 = vld [vmem:[%s1 + $0x20] sm:$0xff]
  %v19 = vld [vmem:[%s1 + $0x28] sm:$0xff]
  %v20 = vld [vmem:[%s1 + $0x30] sm:$0xff]
  %v21 = vld [vmem:[%s1 + $0x38] sm:$0xff]
  %v22 = vld [vmem:[%s1 + $0x40] sm:$0xff]
  %v23 = vld [vmem:[%s1 + $0x48] sm:$0xff]
  %v24 = vld [vmem:[%s1 + $0x50] sm:$0xff]
  %v25 = vld [vmem:[%s1 + $0x58] sm:$0xff]
  %v26 = vld [vmem:[%s1 + $0x60] sm:$0xff]
  %v27 = vld [vmem:[%s1 + $0x68] sm:$0xff]
  %v28 = vld [vmem:[%s1 + $0x70] sm:$0xff]
  %v29 = vld [vmem:[%s1 + $0x78] sm:$0xff]
  %v30 = vld [vmem:[%s2] sm:$0x1]
  %v31 = vld [vmem:[%s0] sm:$0xff]
  %v32 = vld [vmem:[%s0 + $0x8] sm:$0xff]
  %v33 = vld [vmem:[%s0 + $0x10] sm:$0xff]
  %v34 = vld [vmem:[%s0 + $0x18] sm:$0xff]
  %v35 = vld [vmem:[%s0 + $0x20] sm:$0xff]
  %v36 = vld [vmem:[%s0 + $0x28] sm:$0xff]
  %v37 = vld [vmem:[%s0 + $0x30] sm:$0xff]
  %v38 = vld [vmem:[%s0 + $0x38] sm:$0xff]
  %v39 = vld [vmem:[%s0 + $0x40] sm:$0xff]
  %v40 = vld [vmem:[%s0 + $0x48] sm:$0xff]
  %v41 = vld [vmem:[%s0 + $0x50] sm:$0xff]
  %v42 = vld [vmem:[%s0 + $0x58] sm:$0xff]
  %v43 = vld [vmem:[%s0 + $0x60] sm:$0xff]
  %v45 = vlaneseq
  %v46 = vshrl.u32 %v45, 7
  %v47 = vsub.s32 0, %v46
  %v48 = vrot.slane %v30, %v47
  %50 = vmatprep.subr.mxu0 0.0
  %51 = vmatpush1.msra.mxu0 %v14
  %52 = vmatprep.subr.mxu0 0.0
  %53 = vmatpush1.msra.mxu0 %v15
  %54 = vmatprep.subr.mxu0 0.0
  %55 = vmatpush1.msra.mxu0 %v16
  %56 = vmatprep.subr.mxu0 0.0
  %57 = vmatpush1.msra.mxu0 %v17
  %58 = vmatprep.subr.mxu0 0.0
  %59 = vmatpush1.msra.mxu0 %v18
  %60 = vmatprep.subr.mxu0 0.0
  %61 = vmatpush1.msra.mxu0 %v19
  %62 = vmatprep.subr.mxu0 0.0
  %63 = vmatpush1.msra.mxu0 %v20
  %64 = vmatprep.subr.mxu0 0.0
  %65 = vmatpush1.msra.mxu0 %v21
  %66 = vmatprep.subr.mxu0 0.0
  %67 = vmatpush1.msra.mxu0 %v22
  %68 = vmatprep.subr.mxu0 0.0
  %69 = vmatpush1.msra.mxu0 %v23
  %70 = vmatprep.subr.mxu0 0.0
  %71 = vmatpush1.msra.mxu0 %v24
  %72 = vmatprep.subr.mxu0 0.0
  %73 = vmatpush1.msra.mxu0 %v25
  %74 = vmatprep.subr.mxu0 0.0
  %75 = vmatpush1.msra.mxu0 %v26
  %76 = vmatprep.subr.mxu0 0.0
  %77 = vmatpush1.msra.mxu0 %v27
  %78 = vmatprep.subr.mxu0 0.0
  %79 = vmatpush1.msra.mxu0 %v28
  %80 = vmatprep.subr.mxu0 0.0
  %81 = vmatpush1.msra.mxu0 %v29
  %82 = vmatprep.subr.mxu0 0.0
  %83 = vmatpush1.msra.mxu0 0.0
  %84 = vmatprep.subr.mxu0 0.0
  %85 = vmatpush1.msra.mxu0 0.0
  %86 = vmatprep.subr.mxu0 0.0
  %87 = vmatpush1.msra.mxu0 0.0
  %88 = vmatprep.subr.mxu0 0.0
  %89 = vmatpush1.msra.mxu0 0.0
  %90 = vmatprep.subr.mxu0 0.0
  %91 = vmatpush1.msra.mxu0 0.0
  %92 = vmatprep.subr.mxu0 0.0
  %93 = vmatpush1.msra.mxu0 0.0
  %94 = vmatprep.subr.mxu0 0.0
  %95 = vmatpush1.msra.mxu0 0.0
  %96 = vmatprep.subr.mxu0 0.0
  %97 = vmatpush1.msra.mxu0 0.0
  %98 = vmatprep.subr.mxu0 0.0
  %99 = vmatpush1.msra.mxu0 0.0
  %100 = vmatprep.subr.mxu0 0.0
  %101 = vmatpush1.msra.mxu0 0.0
  %102 = vmatprep.subr.mxu0 0.0
  %103 = vmatpush1.msra.mxu0 0.0
  %104 = vmatprep.subr.mxu0 0.0
  %105 = vmatpush1.msra.mxu0 0.0
  %106 = vmatprep.subr.mxu0 0.0
  %107 = vmatpush1.msra.mxu0 0.0
  %108 = vmatprep.subr.mxu0 0.0
  %109 = vmatpush1.msra.mxu0 0.0
  %110 = vmatprep.subr.mxu0 0.0
  %111 = vmatpush1.msra.mxu0 0.0
  %112 = vmatprep.subr.mxu0 0.0
  %113 = vmatpush1.msra.mxu0 0.0
  %114 = vmatprep.mubr.f32.mxu0 0.0
  %115 = vmatmul.mubr.f32.gmra.mrb[0].mxu0 %v31
  %v116 = vpop.f32.mrb[0].mxu0
  %v117 = vadd.f32 %v48, %v116
  %v118 = vpop.f32.mrb[0].mxu0
  %119 = vmatprep.mubr.f32.mxu0 0.0
  %120 = vmatmul.mubr.f32.gmra.mrb[0].mxu0 %v32
  %v121 = vpop.f32.mrb[0].mxu0
  %v122 = vadd.f32 %v48, %v121
  %v123 = vpop.f32.mrb[0].mxu0
  %124 = vmatprep.mubr.f32.mxu0 0.0
  %125 = vmatmul.mubr.f32.gmra.mrb[0].mxu0 %v33
  %v126 = vpop.f32.mrb[0].mxu0
  %v127 = vadd.f32 %v48, %v126
  %v128 = vpop.f32.mrb[0].mxu0
  %129 = vmatprep.mubr.f32.mxu0 0.0
  %130 = vmatmul.mubr.f32.gmra.mrb[0].mxu0 %v34
  %v131 = vpop.f32.mrb[0].mxu0
  %v132 = vadd.f32 %v48, %v131
  %v133 = vpop.f32.mrb[0].mxu0
  %134 = vmatprep.mubr.f32.mxu0 0.0
  %135 = vmatmul.mubr.f32.gmra.mrb[0].mxu0 %v35
  %v136 = vpop.f32.mrb[0].mxu0
  %v137 = vadd.f32 %v48, %v136
  %v138 = vpop.f32.mrb[0].mxu0
  %139 = vmatprep.mubr.f32.mxu0 0.0
  %140 = vmatmul.mubr.f32.gmra.mrb[0].mxu0 %v36
  %v141 = vpop.f32.mrb[0].mxu0
  %v142 = vadd.f32 %v48, %v141
  %v143 = vpop.f32.mrb[0].mxu0
  %144 = vmatprep.mubr.f32.mxu0 0.0
  %145 = vmatmul.mubr.f32.gmra.mrb[0].mxu0 %v37
  %v146 = vpop.f32.mrb[0].mxu0
  %v147 = vadd.f32 %v48, %v146
  %v148 = vpop.f32.mrb[0].mxu0
  %149 = vmatprep.mubr.f32.mxu0 0.0
  %150 = vmatmul.mubr.f32.gmra.mrb[0].mxu0 %v38
  %v151 = vpop.f32.mrb[0].mxu0
  %v152 = vadd.f32 %v48, %v151
  %v153 = vpop.f32.mrb[0].mxu0
  %154 = vmatprep.mubr.f32.mxu0 0.0
  %155 = vmatmul.mubr.f32.gmra.mrb[0].mxu0 %v39
  %v156 = vpop.f32.mrb[0].mxu0
  %v157 = vadd.f32 %v48, %v156
  %v158 = vpop.f32.mrb[0].mxu0
  %159 = vmatprep.mubr.f32.mxu0 0.0
  %160 = vmatmul.mubr.f32.gmra.mrb[0].mxu0 %v40
  %v161 = vpop.f32.mrb[0].mxu0
  %v162 = vadd.f32 %v48, %v161
  %v163 = vpop.f32.mrb[0].mxu0
  %164 = vmatprep.mubr.f32.mxu0 0.0
  %165 = vmatmul.mubr.f32.gmra.mrb[0].mxu0 %v41
  %v166 = vpop.f32.mrb[0].mxu0
  %v167 = vadd.f32 %v48, %v166
  %v168 = vpop.f32.mrb[0].mxu0
  %169 = vmatprep.mubr.f32.mxu0 0.0
  %170 = vmatmul.mubr.f32.gmra.mrb[0].mxu0 %v42
  %v171 = vpop.f32.mrb[0].mxu0
  %v172 = vadd.f32 %v48, %v171
  %v173 = vpop.f32.mrb[0].mxu0
  %174 = vmatprep.mubr.f32.mxu0 0.0
  %175 = vmatmul.mubr.f32.gmra.mrb[0].mxu0 %v43
  %v176 = vpop.f32.mrb[0].mxu0
  %v177 = vadd.f32 %v48, %v176
  %v178 = vpop.f32.mrb[0].mxu0
  %179 = vdwg.mxu0
  %v180 = vmax.f32 %v117, 0.0
  %v181 = vmax.f32 %v122, 0.0
  %v182 = vmax.f32 %v127, 0.0
  %v183 = vmax.f32 %v132, 0.0
  %v184 = vmax.f32 %v137, 0.0
  %v185 = vmax.f32 %v142, 0.0
  %v186 = vmax.f32 %v147, 0.0
  %v187 = vmax.f32 %v152, 0.0
  %v188 = vmax.f32 %v157, 0.0
  %v189 = vmax.f32 %v162, 0.0
  %v190 = vmax.f32 %v167, 0.0
  %v191 = vmax.f32 %v172, 0.0
  %v192 = vmax.f32 %v177, 0.0
  %s193 = scalar_lea.vmem %s0, 104
  %v194 = vld [vmem:[%s193] sm:$0xff]
  %v195 = vld [vmem:[%s193 + $0x8] sm:$0xff]
  %v196 = vld [vmem:[%s193 + $0x10] sm:$0xff]
  %v197 = vld [vmem:[%s193 + $0x18] sm:$0xff]
  %v198 = vld [vmem:[%s193 + $0x20] sm:$0xff]
  %v199 = vld [vmem:[%s193 + $0x28] sm:$0xff]
  %v200 = vld [vmem:[%s193 + $0x30] sm:$0xff]
  %v201 = vld [vmem:[%s193 + $0x38] sm:$0xff]
  %v202 = vld [vmem:[%s193 + $0x40] sm:$0xff]
  %v203 = vld [vmem:[%s193 + $0x48] sm:$0xff]
  %v204 = vld [vmem:[%s193 + $0x50] sm:$0xff]
  %v205 = vld [vmem:[%s193 + $0x58] sm:$0xff]
  %v206 = vld [vmem:[%s193 + $0x60] sm:$0xff]
  %207 = vmatprep.subr.mxu0 0.0
  %208 = vmatpush1.msra.mxu0 %v14
  %209 = vmatprep.subr.mxu0 0.0
  %210 = vmatpush1.msra.mxu0 %v15
  %211 = vmatprep.subr.mxu0 0.0
  %212 = vmatpush1.msra.mxu0 %v16
  %213 = vmatprep.subr.mxu0 0.0
  %214 = vmatpush1.msra.mxu0 %v17
  %215 = vmatprep.subr.mxu0 0.0
  %216 = vmatpush1.msra.mxu0 %v18
  %217 = vmatprep.subr.mxu0 0.0
  %218 = vmatpush1.msra.mxu0 %v19
  %219 = vmatprep.subr.mxu0 0.0
  %220 = vmatpush1.msra.mxu0 %v20
  %221 = vmatprep.subr.mxu0 0.0
  %222 = vmatpush1.msra.mxu0 %v21
  %223 = vmatprep.subr.mxu0 0.0
  %224 = vmatpush1.msra.mxu0 %v22
  %225 = vmatprep.subr.mxu0 0.0
  %226 = vmatpush1.msra.mxu0 %v23
  %227 = vmatprep.subr.mxu0 0.0
  %228 = vmatpush1.msra.mxu0 %v24
  %229 = vmatprep.subr.mxu0 0.0
  %230 = vmatpush1.msra.mxu0 %v25
  %231 = vmatprep.subr.mxu0 0.0
  %232 = vmatpush1.msra.mxu0 %v26
  %233 = vmatprep.subr.mxu0 0.0
  %234 = vmatpush1.msra.mxu0 %v27
  %235 = vmatprep.subr.mxu0 0.0
  %236 = vmatpush1.msra.mxu0 %v28
  %237 = vmatprep.subr.mxu0 0.0
  %238 = vmatpush1.msra.mxu0 %v29
  %239 = vmatprep.subr.mxu0 0.0
  %240 = vmatpush1.msra.mxu0 0.0
  %241 = vmatprep.subr.mxu0 0.0
  %242 = vmatpush1.msra.mxu0 0.0
  %243 = vmatprep.subr.mxu0 0.0
  %244 = vmatpush1.msra.mxu0 0.0
  %245 = vmatprep.subr.mxu0 0.0
  %246 = vmatpush1.msra.mxu0 0.0
  %247 = vmatprep.subr.mxu0 0.0
  %248 = vmatpush1.msra.mxu0 0.0
  %249 = vmatprep.subr.mxu0 0.0
  %250 = vmatpush1.msra.mxu0 0.0
  %251 = vmatprep.subr.mxu0 0.0
  %252 = vmatpush1.msra.mxu0 0.0
  %253 = vmatprep.subr.mxu0 0.0
  %254 = vmatpush1.msra.mxu0 0.0
  %255 = vmatprep.subr.mxu0 0.0
  %256 = vmatpush1.msra.mxu0 0.0
  %257 = vmatprep.subr.mxu0 0.0
  %258 = vmatpush1.msra.mxu0 0.0
  %259 = vmatprep.subr.mxu0 0.0
  %260 = vmatpush1.msra.mxu0 0.0
  %261 = vmatprep.subr.mxu0 0.0
  %262 = vmatpush1.msra.mxu0 0.0
  %263 = vmatprep.subr.mxu0 0.0
  %264 = vmatpush1.msra.mxu0 0.0
  %265 = vmatprep.subr.mxu0 0.0
  %266 = vmatpush1.msra.mxu0 0.0
  %267 = vmatprep.subr.mxu0 0.0
  %268 = vmatpush1.msra.mxu0 0.0
  %269 = vmatprep.subr.mxu0 0.0
  %270 = vmatpush1.msra.mxu0 0.0
  %271 = vmatprep.mubr.f32.mxu0 0.0
  %272 = vmatmul.mubr.f32.gmra.mrb[0].mxu0 %v194
  %v273 = vpop.f32.mrb[0].mxu0
  %v274 = vadd.f32 %v48, %v273
  %v275 = vpop.f32.mrb[0].mxu0
  %276 = vmatprep.mubr.f32.mxu0 0.0
  %277 = vmatmul.mubr.f32.gmra.mrb[0].mxu0 %v195
  %v278 = vpop.f32.mrb[0].mxu0
  %v279 = vadd.f32 %v48, %v278
  %v280 = vpop.f32.mrb[0].mxu0
  %281 = vmatprep.mubr.f32.mxu0 0.0
  %282 = vmatmul.mubr.f32.gmra.mrb[0].mxu0 %v196
  %v283 = vpop.f32.mrb[0].mxu0
  %v284 = vadd.f32 %v48, %v283
  %v285 = vpop.f32.mrb[0].mxu0
  %286 = vmatprep.mubr.f32.mxu0 0.0
  %287 = vmatmul.mubr.f32.gmra.mrb[0].mxu0 %v197
  %v288 = vpop.f32.mrb[0].mxu0
  %v289 = vadd.f32 %v48, %v288
  %v290 = vpop.f32.mrb[0].mxu0
  %291 = vmatprep.mubr.f32.mxu0 0.0
  %292 = vmatmul.mubr.f32.gmra.mrb[0].mxu0 %v198
  %v293 = vpop.f32.mrb[0].mxu0
  %v294 = vadd.f32 %v48, %v293
  %v295 = vpop.f32.mrb[0].mxu0
  %296 = vmatprep.mubr.f32.mxu0 0.0
  %297 = vmatmul.mubr.f32.gmra.mrb[0].mxu0 %v199
  %v298 = vpop.f32.mrb[0].mxu0
  %v299 = vadd.f32 %v48, %v298
  %v300 = vpop.f32.mrb[0].mxu0
  %301 = vmatprep.mubr.f32.mxu0 0.0
  %302 = vmatmul.mubr.f32.gmra.mrb[0].mxu0 %v200
  %v303 = vpop.f32.mrb[0].mxu0
  %v304 = vadd.f32 %v48, %v303
  %v305 = vpop.f32.mrb[0].mxu0
  %306 = vmatprep.mubr.f32.mxu0 0.0
  %307 = vmatmul.mubr.f32.gmra.mrb[0].mxu0 %v201
  %v308 = vpop.f32.mrb[0].mxu0
  %v309 = vadd.f32 %v48, %v308
  %v310 = vpop.f32.mrb[0].mxu0
  %311 = vmatprep.mubr.f32.mxu0 0.0
  %312 = vmatmul.mubr.f32.gmra.mrb[0].mxu0 %v202
  %v313 = vpop.f32.mrb[0].mxu0
  %v314 = vadd.f32 %v48, %v313
  %v315 = vpop.f32.mrb[0].mxu0
  %316 = vmatprep.mubr.f32.mxu0 0.0
  %317 = vmatmul.mubr.f32.gmra.mrb[0].mxu0 %v203
  %v318 = vpop.f32.mrb[0].mxu0
  %v319 = vadd.f32 %v48, %v318
  %v320 = vpop.f32.mrb[0].mxu0
  %321 = vmatprep.mubr.f32.mxu0 0.0
  %322 = vmatmul.mubr.f32.gmra.mrb[0].mxu0 %v204
  %v323 = vpop.f32.mrb[0].mxu0
  %v324 = vadd.f32 %v48, %v323
  %v325 = vpop.f32.mrb[0].mxu0
  %326 = vmatprep.mubr.f32.mxu0 0.0
  %327 = vmatmul.mubr.f32.gmra.mrb[0].mxu0 %v205
  %v328 = vpop.f32.mrb[0].mxu0
  %v329 = vadd.f32 %v48, %v328
  %v330 = vpop.f32.mrb[0].mxu0
  %331 = vmatprep.mubr.f32.mxu0 0.0
  %332 = vmatmul.mubr.f32.gmra.mrb[0].mxu0 %v206
  %v333 = vpop.f32.mrb[0].mxu0
  %v334 = vadd.f32 %v48, %v333
  %v335 = vpop.f32.mrb[0].mxu0
  %336 = vdwg.mxu0
  %v337 = vmax.f32 %v274, 0.0
  %v338 = vmax.f32 %v279, 0.0
  %v339 = vmax.f32 %v284, 0.0
  %v340 = vmax.f32 %v289, 0.0
  %v341 = vmax.f32 %v294, 0.0
  %v342 = vmax.f32 %v299, 0.0
  %v343 = vmax.f32 %v304, 0.0
  %v344 = vmax.f32 %v309, 0.0
  %v345 = vmax.f32 %v314, 0.0
  %v346 = vmax.f32 %v319, 0.0
  %v347 = vmax.f32 %v324, 0.0
  %v348 = vmax.f32 %v329, 0.0
  %v349 = vmax.f32 %v334, 0.0
  %s350 = scalar_lea.vmem %s0, 208
  %v351 = vld [vmem:[%s350] sm:$0xff]
  %v352 = vld [vmem:[%s350 + $0x8] sm:$0xff]
  %v353 = vld [vmem:[%s350 + $0x10] sm:$0xff]
  %v354 = vld [vmem:[%s350 + $0x18] sm:$0xff]
  %v355 = vld [vmem:[%s350 + $0x20] sm:$0xff]
  %v356 = vld [vmem:[%s350 + $0x28] sm:$0xff]
  %v357 = vld [vmem:[%s350 + $0x30] sm:$0xff]
  %v358 = vld [vmem:[%s350 + $0x38] sm:$0xff]
  %v359 = vld [vmem:[%s350 + $0x40] sm:$0xff]
  %v360 = vld [vmem:[%s350 + $0x48] sm:$0xff]
  %v361 = vld [vmem:[%s350 + $0x50] sm:$0xff]
  %v362 = vld [vmem:[%s350 + $0x58] sm:$0xff]
  %v363 = vld [vmem:[%s350 + $0x60] sm:$0xff]
  %364 = vmatprep.subr.mxu0 0.0
  %365 = vmatpush1.msra.mxu0 %v14
  %366 = vmatprep.subr.mxu0 0.0
  %367 = vmatpush1.msra.mxu0 %v15
  %368 = vmatprep.subr.mxu0 0.0
  %369 = vmatpush1.msra.mxu0 %v16
  %370 = vmatprep.subr.mxu0 0.0
  %371 = vmatpush1.msra.mxu0 %v17
  %372 = vmatprep.subr.mxu0 0.0
  %373 = vmatpush1.msra.mxu0 %v18
  %374 = vmatprep.subr.mxu0 0.0
  %375 = vmatpush1.msra.mxu0 %v19
  %376 = vmatprep.subr.mxu0 0.0
  %377 = vmatpush1.msra.mxu0 %v20
  %378 = vmatprep.subr.mxu0 0.0
  %379 = vmatpush1.msra.mxu0 %v21
  %380 = vmatprep.subr.mxu0 0.0
  %381 = vmatpush1.msra.mxu0 %v22
  %382 = vmatprep.subr.mxu0 0.0
  %383 = vmatpush1.msra.mxu0 %v23
  %384 = vmatprep.subr.mxu0 0.0
  %385 = vmatpush1.msra.mxu0 %v24
  %386 = vmatprep.subr.mxu0 0.0
  %387 = vmatpush1.msra.mxu0 %v25
  %388 = vmatprep.subr.mxu0 0.0
  %389 = vmatpush1.msra.mxu0 %v26
  %390 = vmatprep.subr.mxu0 0.0
  %391 = vmatpush1.msra.mxu0 %v27
  %392 = vmatprep.subr.mxu0 0.0
  %393 = vmatpush1.msra.mxu0 %v28
  %394 = vmatprep.subr.mxu0 0.0
  %395 = vmatpush1.msra.mxu0 %v29
  %396 = vmatprep.subr.mxu0 0.0
  %397 = vmatpush1.msra.mxu0 0.0
  %398 = vmatprep.subr.mxu0 0.0
  %399 = vmatpush1.msra.mxu0 0.0
  %400 = vmatprep.subr.mxu0 0.0
  %401 = vmatpush1.msra.mxu0 0.0
  %402 = vmatprep.subr.mxu0 0.0
  %403 = vmatpush1.msra.mxu0 0.0
  %404 = vmatprep.subr.mxu0 0.0
  %405 = vmatpush1.msra.mxu0 0.0
  %406 = vmatprep.subr.mxu0 0.0
  %407 = vmatpush1.msra.mxu0 0.0
  %408 = vmatprep.subr.mxu0 0.0
  %409 = vmatpush1.msra.mxu0 0.0
  %410 = vmatprep.subr.mxu0 0.0
  %411 = vmatpush1.msra.mxu0 0.0
  %412 = vmatprep.subr.mxu0 0.0
  %413 = vmatpush1.msra.mxu0 0.0
  %414 = vmatprep.subr.mxu0 0.0
  %415 = vmatpush1.msra.mxu0 0.0
  %416 = vmatprep.subr.mxu0 0.0
  %417 = vmatpush1.msra.mxu0 0.0
  %418 = vmatprep.subr.mxu0 0.0
  %419 = vmatpush1.msra.mxu0 0.0
  %420 = vmatprep.subr.mxu0 0.0
  %421 = vmatpush1.msra.mxu0 0.0
  %422 = vmatprep.subr.mxu0 0.0
  %423 = vmatpush1.msra.mxu0 0.0
  %424 = vmatprep.subr.mxu0 0.0
  %425 = vmatpush1.msra.mxu0 0.0
  %426 = vmatprep.subr.mxu0 0.0
  %427 = vmatpush1.msra.mxu0 0.0
  %428 = vmatprep.mubr.f32.mxu0 0.0
  %429 = vmatmul.mubr.f32.gmra.mrb[0].mxu0 %v351
  %v430 = vpop.f32.mrb[0].mxu0
  %v431 = vadd.f32 %v48, %v430
  %v432 = vpop.f32.mrb[0].mxu0
  %433 = vmatprep.mubr.f32.mxu0 0.0
  %434 = vmatmul.mubr.f32.gmra.mrb[0].mxu0 %v352
  %v435 = vpop.f32.mrb[0].mxu0
  %v436 = vadd.f32 %v48, %v435
  %v437 = vpop.f32.mrb[0].mxu0
  %438 = vmatprep.mubr.f32.mxu0 0.0
  %439 = vmatmul.mubr.f32.gmra.mrb[0].mxu0 %v353
  %v440 = vpop.f32.mrb[0].mxu0
  %v441 = vadd.f32 %v48, %v440
  %v442 = vpop.f32.mrb[0].mxu0
  %443 = vmatprep.mubr.f32.mxu0 0.0
  %444 = vmatmul.mubr.f32.gmra.mrb[0].mxu0 %v354
  %v445 = vpop.f32.mrb[0].mxu0
  %v446 = vadd.f32 %v48, %v445
  %v447 = vpop.f32.mrb[0].mxu0
  %448 = vmatprep.mubr.f32.mxu0 0.0
  %449 = vmatmul.mubr.f32.gmra.mrb[0].mxu0 %v355
  %v450 = vpop.f32.mrb[0].mxu0
  %v451 = vadd.f32 %v48, %v450
  %v452 = vpop.f32.mrb[0].mxu0
  %453 = vmatprep.mubr.f32.mxu0 0.0
  %454 = vmatmul.mubr.f32.gmra.mrb[0].mxu0 %v356
  %v455 = vpop.f32.mrb[0].mxu0
  %v456 = vadd.f32 %v48, %v455
  %v457 = vpop.f32.mrb[0].mxu0
  %458 = vmatprep.mubr.f32.mxu0 0.0
  %459 = vmatmul.mubr.f32.gmra.mrb[0].mxu0 %v357
  %v460 = vpop.f32.mrb[0].mxu0
  %v461 = vadd.f32 %v48, %v460
  %v462 = vpop.f32.mrb[0].mxu0
  %463 = vmatprep.mubr.f32.mxu0 0.0
  %464 = vmatmul.mubr.f32.gmra.mrb[0].mxu0 %v358
  %v465 = vpop.f32.mrb[0].mxu0
  %v466 = vadd.f32 %v48, %v465
  %v467 = vpop.f32.mrb[0].mxu0
  %468 = vmatprep.mubr.f32.mxu0 0.0
  %469 = vmatmul.mubr.f32.gmra.mrb[0].mxu0 %v359
  %v470 = vpop.f32.mrb[0].mxu0
  %v471 = vadd.f32 %v48, %v470
  %v472 = vpop.f32.mrb[0].mxu0
  %473 = vmatprep.mubr.f32.mxu0 0.0
  %474 = vmatmul.mubr.f32.gmra.mrb[0].mxu0 %v360
  %v475 = vpop.f32.mrb[0].mxu0
  %v476 = vadd.f32 %v48, %v475
  %v477 = vpop.f32.mrb[0].mxu0
  %478 = vmatprep.mubr.f32.mxu0 0.0
  %479 = vmatmul.mubr.f32.gmra.mrb[0].mxu0 %v361
  %v480 = vpop.f32.mrb[0].mxu0
  %v481 = vadd.f32 %v48, %v480
  %v482 = vpop.f32.mrb[0].mxu0
  %483 = vmatprep.mubr.f32.mxu0 0.0
  %484 = vmatmul.mubr.f32.gmra.mrb[0].mxu0 %v362
  %v485 = vpop.f32.mrb[0].mxu0
  %v486 = vadd.f32 %v48, %v485
  %v487 = vpop.f32.mrb[0].mxu0
  %488 = vmatprep.mubr.f32.mxu0 0.0
  %489 = vmatmul.mubr.f32.gmra.mrb[0].mxu0 %v363
  %v490 = vpop.f32.mrb[0].mxu0
  %v491 = vadd.f32 %v48, %v490
  %v492 = vpop.f32.mrb[0].mxu0
  %493 = vdwg.mxu0
  %v494 = vmax.f32 %v431, 0.0
  %v495 = vmax.f32 %v436, 0.0
  %v496 = vmax.f32 %v441, 0.0
  %v497 = vmax.f32 %v446, 0.0
  %v498 = vmax.f32 %v451, 0.0
  %v499 = vmax.f32 %v456, 0.0
  %v500 = vmax.f32 %v461, 0.0
  %v501 = vmax.f32 %v466, 0.0
  %v502 = vmax.f32 %v471, 0.0
  %v503 = vmax.f32 %v476, 0.0
  %v504 = vmax.f32 %v481, 0.0
  %v505 = vmax.f32 %v486, 0.0
  %v506 = vmax.f32 %v491, 0.0
  %s507 = scalar_lea.vmem %s0, 312
  %v508 = vld [vmem:[%s507] sm:$0xff]
  %v509 = vld [vmem:[%s507 + $0x8] sm:$0xff]
  %v510 = vld [vmem:[%s507 + $0x10] sm:$0xff]
  %v511 = vld [vmem:[%s507 + $0x18] sm:$0xff]
  %v512 = vld [vmem:[%s507 + $0x20] sm:$0xff]
  %v513 = vld [vmem:[%s507 + $0x28] sm:$0xff]
  %v514 = vld [vmem:[%s507 + $0x30] sm:$0xff]
  %v515 = vld [vmem:[%s507 + $0x38] sm:$0xff]
  %v516 = vld [vmem:[%s507 + $0x40] sm:$0xff]
  %v517 = vld [vmem:[%s507 + $0x48] sm:$0xff]
  %v518 = vld [vmem:[%s507 + $0x50] sm:$0xff]
  %v519 = vld [vmem:[%s507 + $0x58] sm:$0xff]
  %v520 = vld [vmem:[%s507 + $0x60] sm:$0xff]
  %521 = vmatprep.subr.mxu0 0.0
  %522 = vmatpush1.msra.mxu0 %v14
  %523 = vmatprep.subr.mxu0 0.0
  %524 = vmatpush1.msra.mxu0 %v15
  %525 = vmatprep.subr.mxu0 0.0
  %526 = vmatpush1.msra.mxu0 %v16
  %527 = vmatprep.subr.mxu0 0.0
  %528 = vmatpush1.msra.mxu0 %v17
  %529 = vmatprep.subr.mxu0 0.0
  %530 = vmatpush1.msra.mxu0 %v18
  %531 = vmatprep.subr.mxu0 0.0
  %532 = vmatpush1.msra.mxu0 %v19
  %533 = vmatprep.subr.mxu0 0.0
  %534 = vmatpush1.msra.mxu0 %v20
  %535 = vmatprep.subr.mxu0 0.0
  %536 = vmatpush1.msra.mxu0 %v21
  %537 = vmatprep.subr.mxu0 0.0
  %538 = vmatpush1.msra.mxu0 %v22
  %539 = vmatprep.subr.mxu0 0.0
  %540 = vmatpush1.msra.mxu0 %v23
  %541 = vmatprep.subr.mxu0 0.0
  %542 = vmatpush1.msra.mxu0 %v24
  %543 = vmatprep.subr.mxu0 0.0
  %544 = vmatpush1.msra.mxu0 %v25
  %545 = vmatprep.subr.mxu0 0.0
  %546 = vmatpush1.msra.mxu0 %v26
  %547 = vmatprep.subr.mxu0 0.0
  %548 = vmatpush1.msra.mxu0 %v27
  %549 = vmatprep.subr.mxu0 0.0
  %550 = vmatpush1.msra.mxu0 %v28
  %551 = vmatprep.subr.mxu0 0.0
  %552 = vmatpush1.msra.mxu0 %v29
  %553 = vmatprep.subr.mxu0 0.0
  %554 = vmatpush1.msra.mxu0 0.0
  %555 = vmatprep.subr.mxu0 0.0
  %556 = vmatpush1.msra.mxu0 0.0
  %557 = vmatprep.subr.mxu0 0.0
  %558 = vmatpush1.msra.mxu0 0.0
  %559 = vmatprep.subr.mxu0 0.0
  %560 = vmatpush1.msra.mxu0 0.0
  %561 = vmatprep.subr.mxu0 0.0
  %562 = vmatpush1.msra.mxu0 0.0
  %563 = vmatprep.subr.mxu0 0.0
  %564 = vmatpush1.msra.mxu0 0.0
  %565 = vmatprep.subr.mxu0 0.0
  %566 = vmatpush1.msra.mxu0 0.0
  %567 = vmatprep.subr.mxu0 0.0
  %568 = vmatpush1.msra.mxu0 0.0
  %569 = vmatprep.subr.mxu0 0.0
  %570 = vmatpush1.msra.mxu0 0.0
  %571 = vmatprep.subr.mxu0 0.0
  %572 = vmatpush1.msra.mxu0 0.0
  %573 = vmatprep.subr.mxu0 0.0
  %574 = vmatpush1.msra.mxu0 0.0
  %575 = vmatprep.subr.mxu0 0.0
  %576 = vmatpush1.msra.mxu0 0.0
  %577 = vmatprep.subr.mxu0 0.0
  %578 = vmatpush1.msra.mxu0 0.0
  %579 = vmatprep.subr.mxu0 0.0
  %580 = vmatpush1.msra.mxu0 0.0
  %581 = vmatprep.subr.mxu0 0.0
  %582 = vmatpush1.msra.mxu0 0.0
  %583 = vmatprep.subr.mxu0 0.0
  %584 = vmatpush1.msra.mxu0 0.0
  %585 = vmatprep.mubr.f32.mxu0 0.0
  %586 = vmatmul.mubr.f32.gmra.mrb[0].mxu0 %v508
  %v587 = vpop.f32.mrb[0].mxu0
  %v588 = vadd.f32 %v48, %v587
  %v589 = vpop.f32.mrb[0].mxu0
  %590 = vmatprep.mubr.f32.mxu0 0.0
  %591 = vmatmul.mubr.f32.gmra.mrb[0].mxu0 %v509
  %v592 = vpop.f32.mrb[0].mxu0
  %v593 = vadd.f32 %v48, %v592
  %v594 = vpop.f32.mrb[0].mxu0
  %595 = vmatprep.mubr.f32.mxu0 0.0
  %596 = vmatmul.mubr.f32.gmra.mrb[0].mxu0 %v510
  %v597 = vpop.f32.mrb[0].mxu0
  %v598 = vadd.f32 %v48, %v597
  %v599 = vpop.f32.mrb[0].mxu0
  %600 = vmatprep.mubr.f32.mxu0 0.0
  %601 = vmatmul.mubr.f32.gmra.mrb[0].mxu0 %v511
  %v602 = vpop.f32.mrb[0].mxu0
  %v603 = vadd.f32 %v48, %v602
  %v604 = vpop.f32.mrb[0].mxu0
  %605 = vmatprep.mubr.f32.mxu0 0.0
  %606 = vmatmul.mubr.f32.gmra.mrb[0].mxu0 %v512
  %v607 = vpop.f32.mrb[0].mxu0
  %v608 = vadd.f32 %v48, %v607
  %v609 = vpop.f32.mrb[0].mxu0
  %610 = vmatprep.mubr.f32.mxu0 0.0
  %611 = vmatmul.mubr.f32.gmra.mrb[0].mxu0 %v513
  %v612 = vpop.f32.mrb[0].mxu0
  %v613 = vadd.f32 %v48, %v612
  %v614 = vpop.f32.mrb[0].mxu0
  %615 = vmatprep.mubr.f32.mxu0 0.0
  %616 = vmatmul.mubr.f32.gmra.mrb[0].mxu0 %v514
  %v617 = vpop.f32.mrb[0].mxu0
  %v618 = vadd.f32 %v48, %v617
  %v619 = vpop.f32.mrb[0].mxu0
  %620 = vmatprep.mubr.f32.mxu0 0.0
  %621 = vmatmul.mubr.f32.gmra.mrb[0].mxu0 %v515
  %v622 = vpop.f32.mrb[0].mxu0
  %v623 = vadd.f32 %v48, %v622
  %v624 = vpop.f32.mrb[0].mxu0
  %625 = vmatprep.mubr.f32.mxu0 0.0
  %626 = vmatmul.mubr.f32.gmra.mrb[0].mxu0 %v516
  %v627 = vpop.f32.mrb[0].mxu0
  %v628 = vadd.f32 %v48, %v627
  %v629 = vpop.f32.mrb[0].mxu0
  %630 = vmatprep.mubr.f32.mxu0 0.0
  %631 = vmatmul.mubr.f32.gmra.mrb[0].mxu0 %v517
  %v632 = vpop.f32.mrb[0].mxu0
  %v633 = vadd.f32 %v48, %v632
  %v634 = vpop.f32.mrb[0].mxu0
  %635 = vmatprep.mubr.f32.mxu0 0.0
  %636 = vmatmul.mubr.f32.gmra.mrb[0].mxu0 %v518
  %v637 = vpop.f32.mrb[0].mxu0
  %v638 = vadd.f32 %v48, %v637
  %v639 = vpop.f32.mrb[0].mxu0
  %640 = vmatprep.mubr.f32.mxu0 0.0
  %641 = vmatmul.mubr.f32.gmra.mrb[0].mxu0 %v519
  %v642 = vpop.f32.mrb[0].mxu0
  %v643 = vadd.f32 %v48, %v642
  %v644 = vpop.f32.mrb[0].mxu0
  %645 = vmatprep.mubr.f32.mxu0 0.0
  %646 = vmatmul.mubr.f32.gmra.mrb[0].mxu0 %v520
  %v647 = vpop.f32.mrb[0].mxu0
  %v648 = vadd.f32 %v48, %v647
  %v649 = vpop.f32.mrb[0].mxu0
  %650 = vdwg.mxu0
  %v651 = vmax.f32 %v588, 0.0
  %v652 = vmax.f32 %v593, 0.0
  %v653 = vmax.f32 %v598, 0.0
  %v654 = vmax.f32 %v603, 0.0
  %v655 = vmax.f32 %v608, 0.0
  %v656 = vmax.f32 %v613, 0.0
  %v657 = vmax.f32 %v618, 0.0
  %v658 = vmax.f32 %v623, 0.0
  %v659 = vmax.f32 %v628, 0.0
  %v660 = vmax.f32 %v633, 0.0
  %v661 = vmax.f32 %v638, 0.0
  %v662 = vmax.f32 %v643, 0.0
  %v663 = vmax.f32 %v648, 0.0
  %v664 = vmax.f32 %v180, %v337
  %v665 = vmax.f32 %v181, %v338
  %v666 = vmax.f32 %v182, %v339
  %v667 = vmax.f32 %v183, %v340
  %v668 = vmax.f32 %v184, %v341
  %v669 = vmax.f32 %v185, %v342
  %v670 = vmax.f32 %v186, %v343
  %v671 = vmax.f32 %v187, %v344
  %v672 = vmax.f32 %v188, %v345
  %v673 = vmax.f32 %v189, %v346
  %v674 = vmax.f32 %v190, %v347
  %v675 = vmax.f32 %v191, %v348
  %v676 = vmax.f32 %v192, %v349
  %v677 = vmax.f32 %v494, %v651
  %v678 = vmax.f32 %v495, %v652
  %v679 = vmax.f32 %v496, %v653
  %v680 = vmax.f32 %v497, %v654
  %v681 = vmax.f32 %v498, %v655
  %v682 = vmax.f32 %v499, %v656
  %v683 = vmax.f32 %v500, %v657
  %v684 = vmax.f32 %v501, %v658
  %v685 = vmax.f32 %v502, %v659
  %v686 = vmax.f32 %v503, %v660
  %v687 = vmax.f32 %v504, %v661
  %v688 = vmax.f32 %v505, %v662
  %v689 = vmax.f32 %v506, %v663
  %v690 = vmax.f32 %v664, %v677
  %v691 = vmax.f32 %v665, %v678
  %v692 = vmax.f32 %v666, %v679
  %v693 = vmax.f32 %v667, %v680
  %v694 = vmax.f32 %v668, %v681
  %v695 = vmax.f32 %v669, %v682
  %v696 = vmax.f32 %v670, %v683
  %v697 = vmax.f32 %v671, %v684
  %v698 = vmax.f32 %v672, %v685
  %v699 = vmax.f32 %v673, %v686
  %v700 = vmax.f32 %v674, %v687
  %v701 = vmax.f32 %v675, %v688
  %v702 = vmax.f32 %v676, %v689
  %703 = vst [vmem:[%s3] sm:$0xff] %v690
  %704 = vst [vmem:[%s3 + $0x8] sm:$0xff] %v691
  %705 = vst [vmem:[%s3 + $0x10] sm:$0xff] %v692
  %706 = vst [vmem:[%s3 + $0x18] sm:$0xff] %v693
  %707 = vst [vmem:[%s3 + $0x20] sm:$0xff] %v694
  %708 = vst [vmem:[%s3 + $0x28] sm:$0xff] %v695
  %709 = vst [vmem:[%s3 + $0x30] sm:$0xff] %v696
  %710 = vst [vmem:[%s3 + $0x38] sm:$0xff] %v697
  %711 = vst [vmem:[%s3 + $0x40] sm:$0xff] %v698
  %712 = vst [vmem:[%s3 + $0x48] sm:$0xff] %v699
  %713 = vst [vmem:[%s3 + $0x50] sm:$0xff] %v700
  %714 = vst [vmem:[%s3 + $0x58] sm:$0xff] %v701
  %715 = vst [vmem:[%s3 + $0x60] sm:$0xff] %v702
  // Predicated region
  $region14: #{cnn_forward.4} parent=0 // pred_check
    _
  $region15: #{cnn_forward.4} parent=0 // pred_check_branch
    %717 = sbr.rel (0) target = $region17
  $region16: #{cnn_forward.4} parent=0 // pred_region
    _
  $region17: #{cnn_forward.4} parent=0 // pred_fallthru
    _
  // Predicated region
  $region18: #{cnn_forward.4} parent=0 // pred_check
    _
  $region19: #{cnn_forward.4} parent=0 // pred_check_branch
    %719 = sbr.rel (0) target = $region21
  $region20: #{cnn_forward.4} parent=0 // pred_region
    _
  $region21: #{cnn_forward.4} parent=0 // pred_fallthru
    _

// kernel: cnn_forward.5
$region0: #{cnn_forward.5}
  #allocation0 [shape = 'u32[]', space=smem, size = 0x4, offset = 0x4, fixed_abs, tag = 'smem constant byte address 0x4 - core index']
  #allocation1 [shape = 'u32[144,128]{1,0:T(1,128)}', space=vmem, size = 0x12000, scoped, tag = 'internal scratch']
  %s0 = inlined_call_operand.vmem [shape: f32[8,896], index: 0, kind: input, shape index: {}]
  %s1 = inlined_call_operand.vmem [shape: f32[896,128], index: 1, kind: input, shape index: {}]
  %s2 = inlined_call_operand.vmem [shape: f32[1,128], index: 2, kind: input, shape index: {}]
  %s3 = inlined_call_operand.vmem [shape: f32[8,128], index: 3, kind: output, shape index: {}]
  %s4 = sld [smem:[#allocation0]]
  $region22: #{cnn_forward.5} parent=0
    _
  %s6 = ssub.s32 1, %s4
  %s7 = scalar_select 0, %s6, %s4
  // Predicated region
  $region2: #{cnn_forward.5} parent=0 // pred_check
    _
  $region3: #{cnn_forward.5} parent=0 // pred_check_branch
    %9 = sbr.rel (0) target = $region5
  $region4: #{cnn_forward.5} parent=0 // pred_region
    _
  $region5: #{cnn_forward.5} parent=0 // pred_fallthru
    _
  // Predicated region
  $region6: #{cnn_forward.5} parent=0 // pred_check
    _
  $region7: #{cnn_forward.5} parent=0 // pred_check_branch
    %11 = sbr.rel (0) target = $region9
  $region8: #{cnn_forward.5} parent=0 // pred_region
    _
  $region9: #{cnn_forward.5} parent=0 // pred_fallthru
    _
  // Predicated region
  $region10: #{cnn_forward.5} parent=0 // pred_check
    _
  $region11: #{cnn_forward.5} parent=0 // pred_check_branch
    %13 = sbr.rel (0) target = $region13
  $region12: #{cnn_forward.5} parent=0 // pred_region
    _
  $region13: #{cnn_forward.5} parent=0 // pred_fallthru
    _
  %v14 = vld [vmem:[%s0] sm:$0xff]
  %v15 = vld [vmem:[%s0 + $0x8] sm:$0xff]
  %v16 = vld [vmem:[%s0 + $0x10] sm:$0xff]
  %v17 = vld [vmem:[%s0 + $0x18] sm:$0xff]
  %v18 = vld [vmem:[%s0 + $0x20] sm:$0xff]
  %v19 = vld [vmem:[%s0 + $0x28] sm:$0xff]
  %v20 = vld [vmem:[%s0 + $0x30] sm:$0xff]
  %v21 = vld [vmem:[%s1] sm:$0xff]
  %v22 = vld [vmem:[%s1 + $0x8] sm:$0xff]
  %v23 = vld [vmem:[%s1 + $0x10] sm:$0xff]
  %v24 = vld [vmem:[%s1 + $0x18] sm:$0xff]
  %v25 = vld [vmem:[%s1 + $0x20] sm:$0xff]
  %v26 = vld [vmem:[%s1 + $0x28] sm:$0xff]
  %v27 = vld [vmem:[%s1 + $0x30] sm:$0xff]
  %v28 = vld [vmem:[%s1 + $0x38] sm:$0xff]
  %v29 = vld [vmem:[%s1 + $0x40] sm:$0xff]
  %v30 = vld [vmem:[%s1 + $0x48] sm:$0xff]
  %v31 = vld [vmem:[%s1 + $0x50] sm:$0xff]
  %v32 = vld [vmem:[%s1 + $0x58] sm:$0xff]
  %v33 = vld [vmem:[%s1 + $0x60] sm:$0xff]
  %v34 = vld [vmem:[%s1 + $0x68] sm:$0xff]
  %v35 = vld [vmem:[%s1 + $0x70] sm:$0xff]
  %v36 = vld [vmem:[%s1 + $0x78] sm:$0xff]
  %v37 = vld [vmem:[%s1 + $0x80] sm:$0xff]
  %v38 = vld [vmem:[%s1 + $0x88] sm:$0xff]
  %v39 = vld [vmem:[%s1 + $0x90] sm:$0xff]
  %v40 = vld [vmem:[%s1 + $0x98] sm:$0xff]
  %v41 = vld [vmem:[%s1 + $0xa0] sm:$0xff]
  %v42 = vld [vmem:[%s1 + $0xa8] sm:$0xff]
  %v43 = vld [vmem:[%s1 + $0xb0] sm:$0xff]
  %v44 = vld [vmem:[%s1 + $0xb8] sm:$0xff]
  %v45 = vld [vmem:[%s1 + $0xc0] sm:$0xff]
  %v46 = vld [vmem:[%s1 + $0xc8] sm:$0xff]
  %v47 = vld [vmem:[%s1 + $0xd0] sm:$0xff]
  %v48 = vld [vmem:[%s1 + $0xd8] sm:$0xff]
  %v49 = vld [vmem:[%s1 + $0xe0] sm:$0xff]
  %v50 = vld [vmem:[%s1 + $0xe8] sm:$0xff]
  %v51 = vld [vmem:[%s1 + $0xf0] sm:$0xff]
  %v52 = vld [vmem:[%s1 + $0xf8] sm:$0xff]
  %v53 = vld [vmem:[%s1 + $0x100] sm:$0xff]
  %v54 = vld [vmem:[%s1 + $0x108] sm:$0xff]
  %v55 = vld [vmem:[%s1 + $0x110] sm:$0xff]
  %v56 = vld [vmem:[%s1 + $0x118] sm:$0xff]
  %v57 = vld [vmem:[%s1 + $0x120] sm:$0xff]
  %v58 = vld [vmem:[%s1 + $0x128] sm:$0xff]
  %v59 = vld [vmem:[%s1 + $0x130] sm:$0xff]
  %v60 = vld [vmem:[%s1 + $0x138] sm:$0xff]
  %v61 = vld [vmem:[%s1 + $0x140] sm:$0xff]
  %v62 = vld [vmem:[%s1 + $0x148] sm:$0xff]
  %v63 = vld [vmem:[%s1 + $0x150] sm:$0xff]
  %v64 = vld [vmem:[%s1 + $0x158] sm:$0xff]
  %v65 = vld [vmem:[%s1 + $0x160] sm:$0xff]
  %v66 = vld [vmem:[%s1 + $0x168] sm:$0xff]
  %v67 = vld [vmem:[%s1 + $0x170] sm:$0xff]
  %v68 = vld [vmem:[%s1 + $0x178] sm:$0xff]
  %v69 = vld [vmem:[%s1 + $0x180] sm:$0xff]
  %v70 = vld [vmem:[%s1 + $0x188] sm:$0xff]
  %v71 = vld [vmem:[%s1 + $0x190] sm:$0xff]
  %v72 = vld [vmem:[%s1 + $0x198] sm:$0xff]
  %v73 = vld [vmem:[%s1 + $0x1a0] sm:$0xff]
  %v74 = vld [vmem:[%s1 + $0x1a8] sm:$0xff]
  %v75 = vld [vmem:[%s1 + $0x1b0] sm:$0xff]
  %v76 = vld [vmem:[%s1 + $0x1b8] sm:$0xff]
  %v77 = vld [vmem:[%s1 + $0x1c0] sm:$0xff]
  %v78 = vld [vmem:[%s1 + $0x1c8] sm:$0xff]
  %v79 = vld [vmem:[%s1 + $0x1d0] sm:$0xff]
  %v80 = vld [vmem:[%s1 + $0x1d8] sm:$0xff]
  %v81 = vld [vmem:[%s1 + $0x1e0] sm:$0xff]
  %v82 = vld [vmem:[%s1 + $0x1e8] sm:$0xff]
  %v83 = vld [vmem:[%s1 + $0x1f0] sm:$0xff]
  %v84 = vld [vmem:[%s1 + $0x1f8] sm:$0xff]
  %v85 = vld [vmem:[%s1 + $0x200] sm:$0xff]
  %v86 = vld [vmem:[%s1 + $0x208] sm:$0xff]
  %v87 = vld [vmem:[%s1 + $0x210] sm:$0xff]
  %v88 = vld [vmem:[%s1 + $0x218] sm:$0xff]
  %v89 = vld [vmem:[%s1 + $0x220] sm:$0xff]
  %v90 = vld [vmem:[%s1 + $0x228] sm:$0xff]
  %v91 = vld [vmem:[%s1 + $0x230] sm:$0xff]
  %v92 = vld [vmem:[%s1 + $0x238] sm:$0xff]
  %v93 = vld [vmem:[%s1 + $0x240] sm:$0xff]
  %v94 = vld [vmem:[%s1 + $0x248] sm:$0xff]
  %v95 = vld [vmem:[%s1 + $0x250] sm:$0xff]
  %v96 = vld [vmem:[%s1 + $0x258] sm:$0xff]
  %v97 = vld [vmem:[%s1 + $0x260] sm:$0xff]
  %v98 = vld [vmem:[%s1 + $0x268] sm:$0xff]
  %v99 = vld [vmem:[%s1 + $0x270] sm:$0xff]
  %v100 = vld [vmem:[%s1 + $0x278] sm:$0xff]
  %v101 = vld [vmem:[%s1 + $0x280] sm:$0xff]
  %v102 = vld [vmem:[%s1 + $0x288] sm:$0xff]
  %v103 = vld [vmem:[%s1 + $0x290] sm:$0xff]
  %v104 = vld [vmem:[%s1 + $0x298] sm:$0xff]
  %v105 = vld [vmem:[%s1 + $0x2a0] sm:$0xff]
  %v106 = vld [vmem:[%s1 + $0x2a8] sm:$0xff]
  %v107 = vld [vmem:[%s1 + $0x2b0] sm:$0xff]
  %v108 = vld [vmem:[%s1 + $0x2b8] sm:$0xff]
  %v109 = vld [vmem:[%s1 + $0x2c0] sm:$0xff]
  %v110 = vld [vmem:[%s1 + $0x2c8] sm:$0xff]
  %v111 = vld [vmem:[%s1 + $0x2d0] sm:$0xff]
  %v112 = vld [vmem:[%s1 + $0x2d8] sm:$0xff]
  %v113 = vld [vmem:[%s1 + $0x2e0] sm:$0xff]
  %v114 = vld [vmem:[%s1 + $0x2e8] sm:$0xff]
  %v115 = vld [vmem:[%s1 + $0x2f0] sm:$0xff]
  %v116 = vld [vmem:[%s1 + $0x2f8] sm:$0xff]
  %v117 = vld [vmem:[%s1 + $0x300] sm:$0xff]
  %v118 = vld [vmem:[%s1 + $0x308] sm:$0xff]
  %v119 = vld [vmem:[%s1 + $0x310] sm:$0xff]
  %v120 = vld [vmem:[%s1 + $0x318] sm:$0xff]
  %v121 = vld [vmem:[%s1 + $0x320] sm:$0xff]
  %v122 = vld [vmem:[%s1 + $0x328] sm:$0xff]
  %v123 = vld [vmem:[%s1 + $0x330] sm:$0xff]
  %v124 = vld [vmem:[%s1 + $0x338] sm:$0xff]
  %v125 = vld [vmem:[%s1 + $0x340] sm:$0xff]
  %v126 = vld [vmem:[%s1 + $0x348] sm:$0xff]
  %v127 = vld [vmem:[%s1 + $0x350] sm:$0xff]
  %v128 = vld [vmem:[%s1 + $0x358] sm:$0xff]
  %v129 = vld [vmem:[%s1 + $0x360] sm:$0xff]
  %v130 = vld [vmem:[%s1 + $0x368] sm:$0xff]
  %v131 = vld [vmem:[%s1 + $0x370] sm:$0xff]
  %v132 = vld [vmem:[%s1 + $0x378] sm:$0xff]
  %v133 = vld [vmem:[%s2] sm:$0x1]
  %v135 = vlaneseq
  %v136 = vshrl.u32 %v135, 7
  %v137 = vsub.s32 0, %v136
  %v138 = vrot.slane %v133, %v137
  %140 = vmatprep.subr.mxu0 0.0
  %141 = vmatpush1.msra.mxu0 %v21
  %142 = vmatprep.subr.mxu0 0.0
  %143 = vmatpush1.msra.mxu0 %v22
  %144 = vmatprep.subr.mxu0 0.0
  %145 = vmatpush1.msra.mxu0 %v23
  %146 = vmatprep.subr.mxu0 0.0
  %147 = vmatpush1.msra.mxu0 %v24
  %148 = vmatprep.subr.mxu0 0.0
  %149 = vmatpush1.msra.mxu0 %v25
  %150 = vmatprep.subr.mxu0 0.0
  %151 = vmatpush1.msra.mxu0 %v26
  %152 = vmatprep.subr.mxu0 0.0
  %153 = vmatpush1.msra.mxu0 %v27
  %154 = vmatprep.subr.mxu0 0.0
  %155 = vmatpush1.msra.mxu0 %v28
  %156 = vmatprep.subr.mxu0 0.0
  %157 = vmatpush1.msra.mxu0 %v29
  %158 = vmatprep.subr.mxu0 0.0
  %159 = vmatpush1.msra.mxu0 %v30
  %160 = vmatprep.subr.mxu0 0.0
  %161 = vmatpush1.msra.mxu0 %v31
  %162 = vmatprep.subr.mxu0 0.0
  %163 = vmatpush1.msra.mxu0 %v32
  %164 = vmatprep.subr.mxu0 0.0
  %165 = vmatpush1.msra.mxu0 %v33
  %166 = vmatprep.subr.mxu0 0.0
  %167 = vmatpush1.msra.mxu0 %v34
  %168 = vmatprep.subr.mxu0 0.0
  %169 = vmatpush1.msra.mxu0 %v35
  %170 = vmatprep.subr.mxu0 0.0
  %171 = vmatpush1.msra.mxu0 %v36
  %172 = vmatprep.subr.mxu0 0.0
  %173 = vmatpush1.msra.mxu0 %v37
  %174 = vmatprep.subr.mxu0 0.0
  %175 = vmatpush1.msra.mxu0 %v38
  %176 = vmatprep.subr.mxu0 0.0
  %177 = vmatpush1.msra.mxu0 %v39
  %178 = vmatprep.subr.mxu0 0.0
  %179 = vmatpush1.msra.mxu0 %v40
  %180 = vmatprep.subr.mxu0 0.0
  %181 = vmatpush1.msra.mxu0 %v41
  %182 = vmatprep.subr.mxu0 0.0
  %183 = vmatpush1.msra.mxu0 %v42
  %184 = vmatprep.subr.mxu0 0.0
  %185 = vmatpush1.msra.mxu0 %v43
  %186 = vmatprep.subr.mxu0 0.0
  %187 = vmatpush1.msra.mxu0 %v44
  %188 = vmatprep.subr.mxu0 0.0
  %189 = vmatpush1.msra.mxu0 %v45
  %190 = vmatprep.subr.mxu0 0.0
  %191 = vmatpush1.msra.mxu0 %v46
  %192 = vmatprep.subr.mxu0 0.0
  %193 = vmatpush1.msra.mxu0 %v47
  %194 = vmatprep.subr.mxu0 0.0
  %195 = vmatpush1.msra.mxu0 %v48
  %196 = vmatprep.subr.mxu0 0.0
  %197 = vmatpush1.msra.mxu0 %v49
  %198 = vmatprep.subr.mxu0 0.0
  %199 = vmatpush1.msra.mxu0 %v50
  %200 = vmatprep.subr.mxu0 0.0
  %201 = vmatpush1.msra.mxu0 %v51
  %202 = vmatprep.subr.mxu0 0.0
  %203 = vmatpush1.msra.mxu0 %v52
  %204 = vmatprep.mubr.f32.mxu0 %v15
  %205 = vmatmul.mubr.f32.gmra.mrb[0].mxu0 %v14
  %v206 = vpop.f32.mrb[0].mxu0
  %v207 = vadd.f32 %v138, %v206
  %v208 = vpop.f32.mrb[0].mxu0
  %209 = vdwg.mxu0
  %210 = vmatprep.subr.mxu0 0.0
  %211 = vmatpush1.msra.mxu0 %v53
  %212 = vmatprep.subr.mxu0 0.0
  %213 = vmatpush1.msra.mxu0 %v54
  %214 = vmatprep.subr.mxu0 0.0
  %215 = vmatpush1.msra.mxu0 %v55
  %216 = vmatprep.subr.mxu0 0.0
  %217 = vmatpush1.msra.mxu0 %v56
  %218 = vmatprep.subr.mxu0 0.0
  %219 = vmatpush1.msra.mxu0 %v57
  %220 = vmatprep.subr.mxu0 0.0
  %221 = vmatpush1.msra.mxu0 %v58
  %222 = vmatprep.subr.mxu0 0.0
  %223 = vmatpush1.msra.mxu0 %v59
  %224 = vmatprep.subr.mxu0 0.0
  %225 = vmatpush1.msra.mxu0 %v60
  %226 = vmatprep.subr.mxu0 0.0
  %227 = vmatpush1.msra.mxu0 %v61
  %228 = vmatprep.subr.mxu0 0.0
  %229 = vmatpush1.msra.mxu0 %v62
  %230 = vmatprep.subr.mxu0 0.0
  %231 = vmatpush1.msra.mxu0 %v63
  %232 = vmatprep.subr.mxu0 0.0
  %233 = vmatpush1.msra.mxu0 %v64
  %234 = vmatprep.subr.mxu0 0.0
  %235 = vmatpush1.msra.mxu0 %v65
  %236 = vmatprep.subr.mxu0 0.0
  %237 = vmatpush1.msra.mxu0 %v66
  %238 = vmatprep.subr.mxu0 0.0
  %239 = vmatpush1.msra.mxu0 %v67
  %240 = vmatprep.subr.mxu0 0.0
  %241 = vmatpush1.msra.mxu0 %v68
  %242 = vmatprep.subr.mxu0 0.0
  %243 = vmatpush1.msra.mxu0 %v69
  %244 = vmatprep.subr.mxu0 0.0
  %245 = vmatpush1.msra.mxu0 %v70
  %246 = vmatprep.subr.mxu0 0.0
  %247 = vmatpush1.msra.mxu0 %v71
  %248 = vmatprep.subr.mxu0 0.0
  %249 = vmatpush1.msra.mxu0 %v72
  %250 = vmatprep.subr.mxu0 0.0
  %251 = vmatpush1.msra.mxu0 %v73
  %252 = vmatprep.subr.mxu0 0.0
  %253 = vmatpush1.msra.mxu0 %v74
  %254 = vmatprep.subr.mxu0 0.0
  %255 = vmatpush1.msra.mxu0 %v75
  %256 = vmatprep.subr.mxu0 0.0
  %257 = vmatpush1.msra.mxu0 %v76
  %258 = vmatprep.subr.mxu0 0.0
  %259 = vmatpush1.msra.mxu0 %v77
  %260 = vmatprep.subr.mxu0 0.0
  %261 = vmatpush1.msra.mxu0 %v78
  %262 = vmatprep.subr.mxu0 0.0
  %263 = vmatpush1.msra.mxu0 %v79
  %264 = vmatprep.subr.mxu0 0.0
  %265 = vmatpush1.msra.mxu0 %v80
  %266 = vmatprep.subr.mxu0 0.0
  %267 = vmatpush1.msra.mxu0 %v81
  %268 = vmatprep.subr.mxu0 0.0
  %269 = vmatpush1.msra.mxu0 %v82
  %270 = vmatprep.subr.mxu0 0.0
  %271 = vmatpush1.msra.mxu0 %v83
  %272 = vmatprep.subr.mxu0 0.0
  %273 = vmatpush1.msra.mxu0 %v84
  %274 = vmatprep.mubr.f32.mxu0 %v17
  %275 = vmatmul.mubr.f32.gmra.mrb[0].mxu0 %v16
  %v276 = vpop.f32.mrb[0].mxu0
  %v277 = vadd.f32 %v207, %v276
  %v278 = vpop.f32.mrb[0].mxu0
  %279 = vdwg.mxu0
  %280 = vmatprep.subr.mxu0 0.0
  %281 = vmatpush1.msra.mxu0 %v85
  %282 = vmatprep.subr.mxu0 0.0
  %283 = vmatpush1.msra.mxu0 %v86
  %284 = vmatprep.subr.mxu0 0.0
  %285 = vmatpush1.msra.mxu0 %v87
  %286 = vmatprep.subr.mxu0 0.0
  %287 = vmatpush1.msra.mxu0 %v88
  %288 = vmatprep.subr.mxu0 0.0
  %289 = vmatpush1.msra.mxu0 %v89
  %290 = vmatprep.subr.mxu0 0.0
  %291 = vmatpush1.msra.mxu0 %v90
  %292 = vmatprep.subr.mxu0 0.0
  %293 = vmatpush1.msra.mxu0 %v91
  %294 = vmatprep.subr.mxu0 0.0
  %295 = vmatpush1.msra.mxu0 %v92
  %296 = vmatprep.subr.mxu0 0.0
  %297 = vmatpush1.msra.mxu0 %v93
  %298 = vmatprep.subr.mxu0 0.0
  %299 = vmatpush1.msra.mxu0 %v94
  %300 = vmatprep.subr.mxu0 0.0
  %301 = vmatpush1.msra.mxu0 %v95
  %302 = vmatprep.subr.mxu0 0.0
  %303 = vmatpush1.msra.mxu0 %v96
  %304 = vmatprep.subr.mxu0 0.0
  %305 = vmatpush1.msra.mxu0 %v97
  %306 = vmatprep.subr.mxu0 0.0
  %307 = vmatpush1.msra.mxu0 %v98
  %308 = vmatprep.subr.mxu0 0.0
  %309 = vmatpush1.msra.mxu0 %v99
  %310 = vmatprep.subr.mxu0 0.0
  %311 = vmatpush1.msra.mxu0 %v100
  %312 = vmatprep.subr.mxu0 0.0
  %313 = vmatpush1.msra.mxu0 %v101
  %314 = vmatprep.subr.mxu0 0.0
  %315 = vmatpush1.msra.mxu0 %v102
  %316 = vmatprep.subr.mxu0 0.0
  %317 = vmatpush1.msra.mxu0 %v103
  %318 = vmatprep.subr.mxu0 0.0
  %319 = vmatpush1.msra.mxu0 %v104
  %320 = vmatprep.subr.mxu0 0.0
  %321 = vmatpush1.msra.mxu0 %v105
  %322 = vmatprep.subr.mxu0 0.0
  %323 = vmatpush1.msra.mxu0 %v106
  %324 = vmatprep.subr.mxu0 0.0
  %325 = vmatpush1.msra.mxu0 %v107
  %326 = vmatprep.subr.mxu0 0.0
  %327 = vmatpush1.msra.mxu0 %v108
  %328 = vmatprep.subr.mxu0 0.0
  %329 = vmatpush1.msra.mxu0 %v109
  %330 = vmatprep.subr.mxu0 0.0
  %331 = vmatpush1.msra.mxu0 %v110
  %332 = vmatprep.subr.mxu0 0.0
  %333 = vmatpush1.msra.mxu0 %v111
  %334 = vmatprep.subr.mxu0 0.0
  %335 = vmatpush1.msra.mxu0 %v112
  %336 = vmatprep.subr.mxu0 0.0
  %337 = vmatpush1.msra.mxu0 %v113
  %338 = vmatprep.subr.mxu0 0.0
  %339 = vmatpush1.msra.mxu0 %v114
  %340 = vmatprep.subr.mxu0 0.0
  %341 = vmatpush1.msra.mxu0 %v115
  %342 = vmatprep.subr.mxu0 0.0
  %343 = vmatpush1.msra.mxu0 %v116
  %344 = vmatprep.mubr.f32.mxu0 %v19
  %345 = vmatmul.mubr.f32.gmra.mrb[0].mxu0 %v18
  %v346 = vpop.f32.mrb[0].mxu0
  %v347 = vadd.f32 %v277, %v346
  %v348 = vpop.f32.mrb[0].mxu0
  %349 = vdwg.mxu0
  %350 = vmatprep.subr.mxu0 0.0
  %351 = vmatpush1.msra.mxu0 %v117
  %352 = vmatprep.subr.mxu0 0.0
  %353 = vmatpush1.msra.mxu0 %v118
  %354 = vmatprep.subr.mxu0 0.0
  %355 = vmatpush1.msra.mxu0 %v119
  %356 = vmatprep.subr.mxu0 0.0
  %357 = vmatpush1.msra.mxu0 %v120
  %358 = vmatprep.subr.mxu0 0.0
  %359 = vmatpush1.msra.mxu0 %v121
  %360 = vmatprep.subr.mxu0 0.0
  %361 = vmatpush1.msra.mxu0 %v122
  %362 = vmatprep.subr.mxu0 0.0
  %363 = vmatpush1.msra.mxu0 %v123
  %364 = vmatprep.subr.mxu0 0.0
  %365 = vmatpush1.msra.mxu0 %v124
  %366 = vmatprep.subr.mxu0 0.0
  %367 = vmatpush1.msra.mxu0 %v125
  %368 = vmatprep.subr.mxu0 0.0
  %369 = vmatpush1.msra.mxu0 %v126
  %370 = vmatprep.subr.mxu0 0.0
  %371 = vmatpush1.msra.mxu0 %v127
  %372 = vmatprep.subr.mxu0 0.0
  %373 = vmatpush1.msra.mxu0 %v128
  %374 = vmatprep.subr.mxu0 0.0
  %375 = vmatpush1.msra.mxu0 %v129
  %376 = vmatprep.subr.mxu0 0.0
  %377 = vmatpush1.msra.mxu0 %v130
  %378 = vmatprep.subr.mxu0 0.0
  %379 = vmatpush1.msra.mxu0 %v131
  %380 = vmatprep.subr.mxu0 0.0
  %381 = vmatpush1.msra.mxu0 %v132
  %382 = vmatprep.subr.mxu0 0.0
  %383 = vmatpush1.msra.mxu0 0.0
  %384 = vmatprep.subr.mxu0 0.0
  %385 = vmatpush1.msra.mxu0 0.0
  %386 = vmatprep.subr.mxu0 0.0
  %387 = vmatpush1.msra.mxu0 0.0
  %388 = vmatprep.subr.mxu0 0.0
  %389 = vmatpush1.msra.mxu0 0.0
  %390 = vmatprep.subr.mxu0 0.0
  %391 = vmatpush1.msra.mxu0 0.0
  %392 = vmatprep.subr.mxu0 0.0
  %393 = vmatpush1.msra.mxu0 0.0
  %394 = vmatprep.subr.mxu0 0.0
  %395 = vmatpush1.msra.mxu0 0.0
  %396 = vmatprep.subr.mxu0 0.0
  %397 = vmatpush1.msra.mxu0 0.0
  %398 = vmatprep.subr.mxu0 0.0
  %399 = vmatpush1.msra.mxu0 0.0
  %400 = vmatprep.subr.mxu0 0.0
  %401 = vmatpush1.msra.mxu0 0.0
  %402 = vmatprep.subr.mxu0 0.0
  %403 = vmatpush1.msra.mxu0 0.0
  %404 = vmatprep.subr.mxu0 0.0
  %405 = vmatpush1.msra.mxu0 0.0
  %406 = vmatprep.subr.mxu0 0.0
  %407 = vmatpush1.msra.mxu0 0.0
  %408 = vmatprep.subr.mxu0 0.0
  %409 = vmatpush1.msra.mxu0 0.0
  %410 = vmatprep.subr.mxu0 0.0
  %411 = vmatpush1.msra.mxu0 0.0
  %412 = vmatprep.subr.mxu0 0.0
  %413 = vmatpush1.msra.mxu0 0.0
  %414 = vmatprep.mubr.f32.mxu0 0.0
  %415 = vmatmul.mubr.f32.gmra.mrb[0].mxu0 %v20
  %v416 = vpop.f32.mrb[0].mxu0
  %v417 = vadd.f32 %v347, %v416
  %v418 = vpop.f32.mrb[0].mxu0
  %419 = vdwg.mxu0
  %420 = vst [vmem:[%s3] sm:$0xff] %v417
  // Predicated region
  $region14: #{cnn_forward.5} parent=0 // pred_check
    _
  $region15: #{cnn_forward.5} parent=0 // pred_check_branch
    %422 = sbr.rel (0) target = $region17
  $region16: #{cnn_forward.5} parent=0 // pred_region
    _
  $region17: #{cnn_forward.5} parent=0 // pred_fallthru
    _
  // Predicated region
  $region18: #{cnn_forward.5} parent=0 // pred_check
    _
  $region19: #{cnn_forward.5} parent=0 // pred_check_branch
    %424 = sbr.rel (0) target = $region21
  $region20: #{cnn_forward.5} parent=0 // pred_region
    _
  $region21: #{cnn_forward.5} parent=0 // pred_fallthru
    _

</llo_original>
